<compile_context>
chip_gen: v7x
topology: tpu7x:2x2x1
jax: 0.10.0
libtpu: 0.0.40
codegen_flags: <defaults>
</compile_context>

<pallas_src>
import functools

import jax
import jax.numpy as jnp
from jax import lax
from jax.experimental import pallas as pl
from jax.experimental.pallas import tpu as pltpu

EPS = 1e-5


# ----------------------------- Pallas kernels ------------------------------

def _conv1_pool_kernel(x_ref, w_ref, b_ref, o_ref, *, Ho, Wo, P, Q, C):
    # x_ref: (1, Ho, KH*W) bf16   patches, columns ordered (kh, jc)
    # w_ref: (KH*W, Wo*C)  bf16   width-trimmed, BN-folded conv1 weight
    # b_ref: (1, Wo*C)     f32    BN-folded bias, tiled over wo
    # o_ref: (1, P, Q*C)   bf16   maxpooled activation, layout (po, qo*C + c)
    a = jnp.dot(x_ref[0], w_ref[...], preferred_element_type=jnp.float32)
    a = a + b_ref[...]                                    # (Ho, Wo*C)

    # MaxPool2d(3, stride=2, padding=1): pool rows then columns; the stride-2
    # decimation happens here (only P x Q outputs are computed and stored).
    rows = []
    for po in range(P):
        lo, hi = max(0, 2 * po - 1), min(Ho - 1, 2 * po + 1)
        m = a[lo:lo + 1, :]
        for r in range(lo + 1, hi + 1):
            m = jnp.maximum(m, a[r:r + 1, :])
        rows.append(m)
    rp = jnp.concatenate(rows, axis=0)                    # (P, Wo*C)

    cols = []
    for qo in range(Q):
        lo, hi = max(0, 2 * qo - 1), min(Wo - 1, 2 * qo + 1)
        m = rp[:, lo * C:(lo + 1) * C]
        for wc in range(lo + 1, hi + 1):
            m = jnp.maximum(m, rp[:, wc * C:(wc + 1) * C])
        cols.append(m)
    pooled = jnp.concatenate(cols, axis=1)                # (P, Q*C), lane-dense
    o_ref[0] = pooled.astype(o_ref.dtype)


def _layer1_avgpool_kernel(x_ref, w_ref, b_ref, o_ref, buf_a, buf_b,
                           *, P, Q, C):
    # x_ref : (1, Npad, C) bf16   zero-haloed, flattened (spatial, C) activation
    # w_ref : (4, 9*C, C)  bf16   BN-folded 3x3 weights, rows ordered (di, dj, c)
    # b_ref : (4, C)       f32    BN-folded biases
    # o_ref : (1, 1, C)    f32    global-average-pooled features
    # buf_a/buf_b: (Npad, C) f32  VMEM ping-pong activation buffers
    Wp = Q + 2                 # padded width
    R = P * Wp                 # dense output rows (2 junk columns per row)
    off0 = Wp + 1              # flat offset of real pixel (0, 0)

    r_idx = lax.broadcasted_iota(jnp.int32, (R, 1), 0)
    valid = (r_idx % Wp) < Q   # mask for the 2 junk columns of each dense row

    buf_a[...] = x_ref[0].astype(jnp.float32)
    buf_b[...] = jnp.zeros_like(buf_b)

    def conv3x3(src, idx):
        # One K = 9*C MXU matmul: 9 row-shifted (R, C) views of the flattened
        # zero-haloed activation, concatenated along the lane axis.
        lhs = jnp.concatenate(
            [src[di * Wp + dj: di * Wp + dj + R, :]
             for di in range(3) for dj in range(3)], axis=1)        # (R, 9*C)
        acc = jnp.dot(lhs.astype(jnp.bfloat16), w_ref[idx],
                      preferred_element_type=jnp.float32)
        return acc + b_ref[idx:idx + 1, :]

    def store(dst, val):
        # Zeroing the junk columns recreates the left/right halo of the next
        # conv's padded layout, so the activation chain never leaves VMEM.
        dst[off0:off0 + R, :] = jnp.where(valid, val, 0.0)

    # ---- RestNetBasicBlock 1 ----
    store(buf_b, jnp.maximum(conv3x3(buf_a, 0), 0.0))      # relu(bn1(conv1(x)))
    y = jnp.maximum(conv3x3(buf_b, 1) + buf_a[off0:off0 + R, :], 0.0)
    store(buf_a, y)                                        # relu(x + bn2(conv2(.)))

    # ---- RestNetBasicBlock 2 ----
    store(buf_b, jnp.maximum(conv3x3(buf_a, 2), 0.0))
    y = jnp.maximum(conv3x3(buf_b, 3) + buf_a[off0:off0 + R, :], 0.0)
    y = jnp.where(valid, y, 0.0)

    # ---- AdaptiveAvgPool2d((1, 1)) + flatten ----
    o_ref[0] = (jnp.sum(y, axis=0, keepdims=True)
                * (1.0 / (P * Q))).astype(o_ref.dtype)


# ------------------------------ pallas_call wrappers ------------------------

def conv1_bn_maxpool_pallas(x, w, conv_b, bn, *, padding):
    """conv1 (kernel (2,128), Cin=1) + BN1 + MaxPool(3,2,1), fused, per batch."""
    B, H, W = x.shape
    KH, KW, Cin, C = w.shape
    ph, pw = padding
    assert Cin == 1, "width-trimmed conv1 path assumes a single input channel"
    assert W <= pw and W <= KW - pw, "valid-support trick requires W <= padding"
    Ho = H + 2 * ph - KH + 1
    Wo = W + 2 * pw - KW + 1
    P = (Ho - 1) // 2 + 1          # MaxPool(3,2,1) output height
    Q = (Wo - 1) // 2 + 1          # MaxPool(3,2,1) output width

    # Patches (B, Ho, KH*W): only the W valid input columns per tap row; the
    # remaining KW - W taps of the 128-wide kernel only ever see zero padding.
    xh = jnp.pad(x, ((0, 0), (ph, ph), (0, 0)))
    xpatch = jnp.concatenate([xh[:, kh:kh + Ho, :] for kh in range(KH)],
                             axis=2).astype(jnp.bfloat16)

    # Width-trimmed, BN-folded weight:
    #   Wsel[(kh, jc), (wo, c)] = w[kh, pw + jc - wo, 0, c] * bn_scale[c]
    gamma, beta, rmean, rvar = bn
    scale = gamma * lax.rsqrt(rvar + EPS)
    kw_idx = pw + jnp.arange(W)[:, None] - jnp.arange(Wo)[None, :]   # (W, Wo)
    wsel = w[:, :, 0, :][:, kw_idx, :] * scale                       # (KH, W, Wo, C)
    wsel = wsel.reshape(KH * W, Wo * C).astype(jnp.bfloat16)
    bias_c = ((conv_b - rmean) * scale + beta).astype(jnp.float32)
    bias = jnp.tile(bias_c, Wo).reshape(1, Wo * C)

    kern = functools.partial(_conv1_pool_kernel, Ho=Ho, Wo=Wo, P=P, Q=Q, C=C)
    out = pl.pallas_call(
        kern,
        out_shape=jax.ShapeDtypeStruct((B, P, Q * C), jnp.bfloat16),
        grid=(B,),
        in_specs=[pl.BlockSpec((1, Ho, KH * W), lambda b: (b, 0, 0)),
                  pl.BlockSpec((KH * W, Wo * C), lambda b: (0, 0)),
                  pl.BlockSpec((1, Wo * C), lambda b: (0, 0))],
        out_specs=pl.BlockSpec((1, P, Q * C), lambda b: (b, 0, 0)),
        compiler_params=pltpu.CompilerParams(
            dimension_semantics=("parallel",)),
    )(xpatch, wsel, bias)
    return out, (P, Q, C)


def _fold_bn_3x3(w, conv_b, bn):
    gamma, beta, rmean, rvar = bn
    scale = gamma * lax.rsqrt(rvar + EPS)
    cout = w.shape[-1]
    wf = (w * scale).reshape(-1, cout).astype(jnp.bfloat16)   # (9*C, Cout)
    bias = ((conv_b - rmean) * scale + beta).astype(jnp.float32)
    return wf, bias


def layer1_avgpool_pallas(pooled, blocks, dims):
    """Both BasicBlocks (4 convs + BN + residual + ReLU) + global avg pool."""
    P, Q, C = dims
    B = pooled.shape[0]
    assert len(blocks) == 2
    Wp = Q + 2
    n_flat = (P + 2) * Wp
    Npad = ((n_flat + 2 + 7) // 8) * 8     # >=2 guard rows, sublane aligned

    # One tiny bf16 pad to the zero-haloed flattened (spatial, C) layout the
    # fused kernel consumes directly (the only inter-kernel glue, ~30 KB).
    act = pooled.reshape(B, P, Q, C)
    act = jnp.pad(act, ((0, 0), (1, 1), (1, 1), (0, 0))).reshape(B, n_flat, C)
    act = jnp.pad(act, ((0, 0), (0, Npad - n_flat), (0, 0)))

    ws, bs = [], []
    for blk in blocks:
        for wn, bn_, pn in (('conv1_w', 'conv1_b', 'bn1'),
                            ('conv2_w', 'conv2_b', 'bn2')):
            wf, bf = _fold_bn_3x3(blk[wn], blk[bn_], blk[pn])
            ws.append(wf)
            bs.append(bf)
    wB = jnp.stack(ws)                     # (4, 9*C, C) bf16
    bB = jnp.stack(bs)                     # (4, C) f32

    kern = functools.partial(_layer1_avgpool_kernel, P=P, Q=Q, C=C)
    out = pl.pallas_call(
        kern,
        out_shape=jax.ShapeDtypeStruct((B, 1, C), jnp.float32),
        grid=(B,),
        in_specs=[pl.BlockSpec((1, Npad, C), lambda b: (b, 0, 0)),
                  pl.BlockSpec((4, 9 * C, C), lambda b: (0, 0, 0)),
                  pl.BlockSpec((4, C), lambda b: (0, 0))],
        out_specs=pl.BlockSpec((1, 1, C), lambda b: (b, 0, 0)),
        scratch_shapes=[pltpu.VMEM((Npad, C), jnp.float32),
                        pltpu.VMEM((Npad, C), jnp.float32)],
        compiler_params=pltpu.CompilerParams(
            dimension_semantics=("parallel",)),
    )(act, wB, bB)
    return out.reshape(B, C)


# ------------------------------- model ------------------------------------

def init_params(key):
    keys = iter(jax.random.split(key, 64))

    def conv_w(kh, kw, cin, cout):
        return jax.random.normal(next(keys), (kh, kw, cin, cout), jnp.float32) * 0.05

    def conv_b(cout):
        return jax.random.normal(next(keys), (cout,), jnp.float32) * 0.05

    def bn(c):
        gamma = 1.0 + 0.1 * jax.random.normal(next(keys), (c,), jnp.float32)
        beta = 0.1 * jax.random.normal(next(keys), (c,), jnp.float32)
        rmean = 0.1 * jax.random.normal(next(keys), (c,), jnp.float32)
        rvar = jnp.abs(jax.random.normal(next(keys), (c,), jnp.float32)) + 0.5
        return (gamma, beta, rmean, rvar)

    def basic_block(c):
        return {'conv1_w': conv_w(3, 3, c, c), 'conv1_b': conv_b(c), 'bn1': bn(c),
                'conv2_w': conv_w(3, 3, c, c), 'conv2_b': conv_b(c), 'bn2': bn(c)}

    params = {
        'conv1_w': conv_w(2, 128, 1, 64),   # kernel (2,128), padding (1,64)
        'conv1_b': conv_b(64),
        'bn1': bn(64),
        'layer1': [basic_block(64), basic_block(64)],
    }
    return params


def resnet_backbone_2d_forward(x_nchw, params):
    x = x_nchw[:, 0, :, :]                                 # NCHW, Cin == 1
    pooled, dims = conv1_bn_maxpool_pallas(
        x, params['conv1_w'], params['conv1_b'], params['bn1'], padding=(1, 64))
    return layer1_avgpool_pallas(pooled, params['layer1'], dims)   # (B, 64)


# --------------------------- pure-JAX reference ----------------------------

def _ref_forward(x_nchw, params):
    x = jnp.transpose(x_nchw, (0, 2, 3, 1))

    def conv(x, w, b, stride, pad):
        y = lax.conv_general_dilated(x, w, (stride, stride),
                                     [(pad[0], pad[0]), (pad[1], pad[1])],
                                     dimension_numbers=('NHWC', 'HWIO', 'NHWC'))
        return y + b

    def bn(x, p):
        g, be, rm, rv = p
        return (x - rm) / jnp.sqrt(rv + EPS) * g + be

    out = bn(conv(x, params['conv1_w'], params['conv1_b'], 1, (1, 64)), params['bn1'])
    out = lax.reduce_window(out, -jnp.inf, lax.max, (1, 3, 3, 1), (1, 2, 2, 1),
                            [(0, 0), (1, 1), (1, 1), (0, 0)])
    for p in params['layer1']:
        h = jax.nn.relu(bn(conv(out, p['conv1_w'], p['conv1_b'], 1, (1, 1)), p['bn1']))
        h = bn(conv(h, p['conv2_w'], p['conv2_b'], 1, (1, 1)), p['bn2'])
        out = jax.nn.relu(out + h)
    return jnp.mean(out, axis=(1, 2))


if __name__ == "__main__":
    key = jax.random.PRNGKey(0)
    pkey, xkey = jax.random.split(key)
    params = init_params(pkey)

    # NCHW input, 1 channel, small spatial size.
    x = jax.random.normal(xkey, (2, 1, 16, 16), jnp.float32)

    out = jax.jit(resnet_backbone_2d_forward)(x, params)
    out = jax.block_until_ready(out)

    ref = _ref_forward(x, params)
    assert out.shape == (2, 64), out.shape
    # bf16 matmul operands + bf16 inter-kernel activations -> loose tolerance.
    assert jnp.allclose(out, ref, atol=7.5e-2, rtol=7.5e-2), \
        float(jnp.max(jnp.abs(out - ref)))
    print("KERNEL_OK")
</pallas_src>

<mosaic_0001>
module attributes {stable_mosaic.version = 11 : i64} {
  func.func @_conv1_pool_kernel(%arg0: i32, %arg1: memref<1x17x32xbf16, #tpu.memory_space<vmem>>, %arg2: memref<32x1088xbf16, #tpu.memory_space<vmem>>, %arg3: memref<1x1088xf32, #tpu.memory_space<vmem>>, %arg4: memref<1x9x576xbf16, #tpu.memory_space<vmem>>) attributes {dimension_semantics = [#tpu.dimension_semantics<parallel>], iteration_bounds = array<i64: 2>, scalar_prefetch = 0 : i64, scratch_operands = 0 : i64, tpu.core_type = #tpu.core_type<tc>, window_params = [{transform_indices = @transform_0, window_bounds = array<i64: 1, 17, 32>}, {pipeline_mode = #tpu.pipeline_mode<synchronous>, transform_indices = @transform_1, window_bounds = array<i64: 32, 1088>}, {pipeline_mode = #tpu.pipeline_mode<synchronous>, transform_indices = @transform_2, window_bounds = array<i64: 1, 1088>}, {transform_indices = @transform_3, window_bounds = array<i64: 1, 9, 576>}]} {
    %c0 = arith.constant 0 : index
    %c0_0 = arith.constant 0 : index
    %c0_1 = arith.constant 0 : index
    %0 = vector.load %arg1[%c0, %c0_0, %c0_1] : memref<1x17x32xbf16, #tpu.memory_space<vmem>>, vector<1x17x32xbf16>
    %1 = vector.shape_cast %0 : vector<1x17x32xbf16> to vector<17x32xbf16>
    %c0_2 = arith.constant 0 : index
    %c0_3 = arith.constant 0 : index
    %2 = vector.load %arg2[%c0_2, %c0_3] : memref<32x1088xbf16, #tpu.memory_space<vmem>>, vector<32x1088xbf16>
    %cst = arith.constant dense<0.000000e+00> : vector<17x1088xf32>
    %3 = tpu.matmul %1, %2, %cst {dimension_numbers = #tpu.dot_dimension_numbers<[1], [0], [0], [1], [0, 0, 1, 1], [], []>} : vector<17x32xbf16>, vector<32x1088xbf16>, vector<17x1088xf32> -> vector<17x1088xf32>
    %c0_4 = arith.constant 0 : index
    %c0_5 = arith.constant 0 : index
    %4 = vector.load %arg3[%c0_4, %c0_5] : memref<1x1088xf32, #tpu.memory_space<vmem>>, vector<1x1088xf32>
    %5 = vector.broadcast %4 : vector<1x1088xf32> to vector<17x1088xf32>
    %6 = arith.addf %3, %5 : vector<17x1088xf32>
    %7 = vector.extract_strided_slice %6 {offsets = [0, 0], sizes = [1, 1088], strides = [1, 1]} : vector<17x1088xf32> to vector<1x1088xf32>
    %8 = vector.extract_strided_slice %6 {offsets = [1, 0], sizes = [1, 1088], strides = [1, 1]} : vector<17x1088xf32> to vector<1x1088xf32>
    %9 = arith.maximumf %7, %8 : vector<1x1088xf32>
    %10 = vector.extract_strided_slice %6 {offsets = [1, 0], sizes = [1, 1088], strides = [1, 1]} : vector<17x1088xf32> to vector<1x1088xf32>
    %11 = vector.extract_strided_slice %6 {offsets = [2, 0], sizes = [1, 1088], strides = [1, 1]} : vector<17x1088xf32> to vector<1x1088xf32>
    %12 = arith.maximumf %10, %11 : vector<1x1088xf32>
    %13 = vector.extract_strided_slice %6 {offsets = [3, 0], sizes = [1, 1088], strides = [1, 1]} : vector<17x1088xf32> to vector<1x1088xf32>
    %14 = arith.maximumf %12, %13 : vector<1x1088xf32>
    %15 = vector.extract_strided_slice %6 {offsets = [3, 0], sizes = [1, 1088], strides = [1, 1]} : vector<17x1088xf32> to vector<1x1088xf32>
    %16 = vector.extract_strided_slice %6 {offsets = [4, 0], sizes = [1, 1088], strides = [1, 1]} : vector<17x1088xf32> to vector<1x1088xf32>
    %17 = arith.maximumf %15, %16 : vector<1x1088xf32>
    %18 = vector.extract_strided_slice %6 {offsets = [5, 0], sizes = [1, 1088], strides = [1, 1]} : vector<17x1088xf32> to vector<1x1088xf32>
    %19 = arith.maximumf %17, %18 : vector<1x1088xf32>
    %20 = vector.extract_strided_slice %6 {offsets = [5, 0], sizes = [1, 1088], strides = [1, 1]} : vector<17x1088xf32> to vector<1x1088xf32>
    %21 = vector.extract_strided_slice %6 {offsets = [6, 0], sizes = [1, 1088], strides = [1, 1]} : vector<17x1088xf32> to vector<1x1088xf32>
    %22 = arith.maximumf %20, %21 : vector<1x1088xf32>
    %23 = vector.extract_strided_slice %6 {offsets = [7, 0], sizes = [1, 1088], strides = [1, 1]} : vector<17x1088xf32> to vector<1x1088xf32>
    %24 = arith.maximumf %22, %23 : vector<1x1088xf32>
    %25 = vector.extract_strided_slice %6 {offsets = [7, 0], sizes = [1, 1088], strides = [1, 1]} : vector<17x1088xf32> to vector<1x1088xf32>
    %26 = vector.extract_strided_slice %6 {offsets = [8, 0], sizes = [1, 1088], strides = [1, 1]} : vector<17x1088xf32> to vector<1x1088xf32>
    %27 = arith.maximumf %25, %26 : vector<1x1088xf32>
    %28 = vector.extract_strided_slice %6 {offsets = [9, 0], sizes = [1, 1088], strides = [1, 1]} : vector<17x1088xf32> to vector<1x1088xf32>
    %29 = arith.maximumf %27, %28 : vector<1x1088xf32>
    %30 = vector.extract_strided_slice %6 {offsets = [9, 0], sizes = [1, 1088], strides = [1, 1]} : vector<17x1088xf32> to vector<1x1088xf32>
    %31 = vector.extract_strided_slice %6 {offsets = [10, 0], sizes = [1, 1088], strides = [1, 1]} : vector<17x1088xf32> to vector<1x1088xf32>
    %32 = arith.maximumf %30, %31 : vector<1x1088xf32>
    %33 = vector.extract_strided_slice %6 {offsets = [11, 0], sizes = [1, 1088], strides = [1, 1]} : vector<17x1088xf32> to vector<1x1088xf32>
    %34 = arith.maximumf %32, %33 : vector<1x1088xf32>
    %35 = vector.extract_strided_slice %6 {offsets = [11, 0], sizes = [1, 1088], strides = [1, 1]} : vector<17x1088xf32> to vector<1x1088xf32>
    %36 = vector.extract_strided_slice %6 {offsets = [12, 0], sizes = [1, 1088], strides = [1, 1]} : vector<17x1088xf32> to vector<1x1088xf32>
    %37 = arith.maximumf %35, %36 : vector<1x1088xf32>
    %38 = vector.extract_strided_slice %6 {offsets = [13, 0], sizes = [1, 1088], strides = [1, 1]} : vector<17x1088xf32> to vector<1x1088xf32>
    %39 = arith.maximumf %37, %38 : vector<1x1088xf32>
    %40 = vector.extract_strided_slice %6 {offsets = [13, 0], sizes = [1, 1088], strides = [1, 1]} : vector<17x1088xf32> to vector<1x1088xf32>
    %41 = vector.extract_strided_slice %6 {offsets = [14, 0], sizes = [1, 1088], strides = [1, 1]} : vector<17x1088xf32> to vector<1x1088xf32>
    %42 = arith.maximumf %40, %41 : vector<1x1088xf32>
    %43 = vector.extract_strided_slice %6 {offsets = [15, 0], sizes = [1, 1088], strides = [1, 1]} : vector<17x1088xf32> to vector<1x1088xf32>
    %44 = arith.maximumf %42, %43 : vector<1x1088xf32>
    %45 = vector.extract_strided_slice %6 {offsets = [15, 0], sizes = [1, 1088], strides = [1, 1]} : vector<17x1088xf32> to vector<1x1088xf32>
    %46 = vector.extract_strided_slice %6 {offsets = [16, 0], sizes = [1, 1088], strides = [1, 1]} : vector<17x1088xf32> to vector<1x1088xf32>
    %47 = arith.maximumf %45, %46 : vector<1x1088xf32>
    %48 = tpu.concatenate %9, %14, %19, %24, %29, %34, %39, %44, %47 in 0 : vector<1x1088xf32>, vector<1x1088xf32>, vector<1x1088xf32>, vector<1x1088xf32>, vector<1x1088xf32>, vector<1x1088xf32>, vector<1x1088xf32>, vector<1x1088xf32>, vector<1x1088xf32> -> vector<9x1088xf32>
    %49 = vector.extract_strided_slice %48 {offsets = [0, 0], sizes = [9, 64], strides = [1, 1]} : vector<9x1088xf32> to vector<9x64xf32>
    %50 = vector.extract_strided_slice %48 {offsets = [0, 64], sizes = [9, 64], strides = [1, 1]} : vector<9x1088xf32> to vector<9x64xf32>
    %51 = arith.maximumf %49, %50 : vector<9x64xf32>
    %52 = vector.extract_strided_slice %48 {offsets = [0, 64], sizes = [9, 64], strides = [1, 1]} : vector<9x1088xf32> to vector<9x64xf32>
    %53 = vector.extract_strided_slice %48 {offsets = [0, 128], sizes = [9, 64], strides = [1, 1]} : vector<9x1088xf32> to vector<9x64xf32>
    %54 = arith.maximumf %52, %53 : vector<9x64xf32>
    %55 = vector.extract_strided_slice %48 {offsets = [0, 192], sizes = [9, 64], strides = [1, 1]} : vector<9x1088xf32> to vector<9x64xf32>
    %56 = arith.maximumf %54, %55 : vector<9x64xf32>
    %57 = vector.extract_strided_slice %48 {offsets = [0, 192], sizes = [9, 64], strides = [1, 1]} : vector<9x1088xf32> to vector<9x64xf32>
    %58 = vector.extract_strided_slice %48 {offsets = [0, 256], sizes = [9, 64], strides = [1, 1]} : vector<9x1088xf32> to vector<9x64xf32>
    %59 = arith.maximumf %57, %58 : vector<9x64xf32>
    %60 = vector.extract_strided_slice %48 {offsets = [0, 320], sizes = [9, 64], strides = [1, 1]} : vector<9x1088xf32> to vector<9x64xf32>
    %61 = arith.maximumf %59, %60 : vector<9x64xf32>
    %62 = vector.extract_strided_slice %48 {offsets = [0, 320], sizes = [9, 64], strides = [1, 1]} : vector<9x1088xf32> to vector<9x64xf32>
    %63 = vector.extract_strided_slice %48 {offsets = [0, 384], sizes = [9, 64], strides = [1, 1]} : vector<9x1088xf32> to vector<9x64xf32>
    %64 = arith.maximumf %62, %63 : vector<9x64xf32>
    %65 = vector.extract_strided_slice %48 {offsets = [0, 448], sizes = [9, 64], strides = [1, 1]} : vector<9x1088xf32> to vector<9x64xf32>
    %66 = arith.maximumf %64, %65 : vector<9x64xf32>
    %67 = vector.extract_strided_slice %48 {offsets = [0, 448], sizes = [9, 64], strides = [1, 1]} : vector<9x1088xf32> to vector<9x64xf32>
    %68 = vector.extract_strided_slice %48 {offsets = [0, 512], sizes = [9, 64], strides = [1, 1]} : vector<9x1088xf32> to vector<9x64xf32>
    %69 = arith.maximumf %67, %68 : vector<9x64xf32>
    %70 = vector.extract_strided_slice %48 {offsets = [0, 576], sizes = [9, 64], strides = [1, 1]} : vector<9x1088xf32> to vector<9x64xf32>
    %71 = arith.maximumf %69, %70 : vector<9x64xf32>
    %72 = vector.extract_strided_slice %48 {offsets = [0, 576], sizes = [9, 64], strides = [1, 1]} : vector<9x1088xf32> to vector<9x64xf32>
    %73 = vector.extract_strided_slice %48 {offsets = [0, 640], sizes = [9, 64], strides = [1, 1]} : vector<9x1088xf32> to vector<9x64xf32>
    %74 = arith.maximumf %72, %73 : vector<9x64xf32>
    %75 = vector.extract_strided_slice %48 {offsets = [0, 704], sizes = [9, 64], strides = [1, 1]} : vector<9x1088xf32> to vector<9x64xf32>
    %76 = arith.maximumf %74, %75 : vector<9x64xf32>
    %77 = vector.extract_strided_slice %48 {offsets = [0, 704], sizes = [9, 64], strides = [1, 1]} : vector<9x1088xf32> to vector<9x64xf32>
    %78 = vector.extract_strided_slice %48 {offsets = [0, 768], sizes = [9, 64], strides = [1, 1]} : vector<9x1088xf32> to vector<9x64xf32>
    %79 = arith.maximumf %77, %78 : vector<9x64xf32>
    %80 = vector.extract_strided_slice %48 {offsets = [0, 832], sizes = [9, 64], strides = [1, 1]} : vector<9x1088xf32> to vector<9x64xf32>
    %81 = arith.maximumf %79, %80 : vector<9x64xf32>
    %82 = vector.extract_strided_slice %48 {offsets = [0, 832], sizes = [9, 64], strides = [1, 1]} : vector<9x1088xf32> to vector<9x64xf32>
    %83 = vector.extract_strided_slice %48 {offsets = [0, 896], sizes = [9, 64], strides = [1, 1]} : vector<9x1088xf32> to vector<9x64xf32>
    %84 = arith.maximumf %82, %83 : vector<9x64xf32>
    %85 = vector.extract_strided_slice %48 {offsets = [0, 960], sizes = [9, 64], strides = [1, 1]} : vector<9x1088xf32> to vector<9x64xf32>
    %86 = arith.maximumf %84, %85 : vector<9x64xf32>
    %87 = vector.extract_strided_slice %48 {offsets = [0, 960], sizes = [9, 64], strides = [1, 1]} : vector<9x1088xf32> to vector<9x64xf32>
    %88 = vector.extract_strided_slice %48 {offsets = [0, 1024], sizes = [9, 64], strides = [1, 1]} : vector<9x1088xf32> to vector<9x64xf32>
    %89 = arith.maximumf %87, %88 : vector<9x64xf32>
    %90 = tpu.concatenate %51, %56, %61, %66, %71, %76, %81, %86, %89 in 1 : vector<9x64xf32>, vector<9x64xf32>, vector<9x64xf32>, vector<9x64xf32>, vector<9x64xf32>, vector<9x64xf32>, vector<9x64xf32>, vector<9x64xf32>, vector<9x64xf32> -> vector<9x576xf32>
    %91 = arith.truncf %90 : vector<9x576xf32> to vector<9x576xbf16>
    %c0_6 = arith.constant 0 : index
    %c0_7 = arith.constant 0 : index
    %c0_8 = arith.constant 0 : index
    %92 = vector.load %arg4[%c0_6, %c0_7, %c0_8] : memref<1x9x576xbf16, #tpu.memory_space<vmem>>, vector<1x9x576xbf16>
    %93 = vector.shape_cast %92 : vector<1x9x576xbf16> to vector<9x576xbf16>
    %94 = vector.shape_cast %91 : vector<9x576xbf16> to vector<1x9x576xbf16>
    tpu.vector_store %arg4[%c0_6, %c0_7, %c0_8], %94 {strides = array<i32>} : memref<1x9x576xbf16, #tpu.memory_space<vmem>>, vector<1x9x576xbf16>,
    return
  }
  func.func @transform_0(%arg0: i32) -> (i32, i32, i32) {
    %c0_i32 = arith.constant 0 : i32
    %c0_i32_0 = arith.constant 0 : i32
    %c0_i32_1 = arith.constant 0 : i32
    return %arg0, %c0_i32, %c0_i32_0 : i32, i32, i32
  }
  func.func @transform_1(%arg0: i32) -> (i32, i32) {
    %c0_i32 = arith.constant 0 : i32
    %c0_i32_0 = arith.constant 0 : i32
    %c0_i32_1 = arith.constant 0 : i32
    return %c0_i32, %c0_i32_0 : i32, i32
  }
  func.func @transform_2(%arg0: i32) -> (i32, i32) {
    %c0_i32 = arith.constant 0 : i32
    %c0_i32_0 = arith.constant 0 : i32
    %c0_i32_1 = arith.constant 0 : i32
    return %c0_i32, %c0_i32_0 : i32, i32
  }
  func.func @transform_3(%arg0: i32) -> (i32, i32, i32) {
    %c0_i32 = arith.constant 0 : i32
    %c0_i32_0 = arith.constant 0 : i32
    %c0_i32_1 = arith.constant 0 : i32
    return %arg0, %c0_i32, %c0_i32_0 : i32, i32, i32
  }
}

module attributes {stable_mosaic.version = 11 : i64} {
  func.func @_layer1_avgpool_kernel(%arg0: i32, %arg1: memref<1x128x64xbf16, #tpu.memory_space<vmem>>, %arg2: memref<4x576x64xbf16, #tpu.memory_space<vmem>>, %arg3: memref<4x64xf32, #tpu.memory_space<vmem>>, %arg4: memref<1x1x64xf32, #tpu.memory_space<vmem>>, %arg5: memref<128x64xf32, #tpu.memory_space<vmem>>, %arg6: memref<128x64xf32, #tpu.memory_space<vmem>>) attributes {dimension_semantics = [#tpu.dimension_semantics<parallel>], iteration_bounds = array<i64: 2>, scalar_prefetch = 0 : i64, scratch_operands = 2 : i64, tpu.core_type = #tpu.core_type<tc>, window_params = [{transform_indices = @transform_0, window_bounds = array<i64: 1, 128, 64>}, {pipeline_mode = #tpu.pipeline_mode<synchronous>, transform_indices = @transform_1, window_bounds = array<i64: 4, 576, 64>}, {pipeline_mode = #tpu.pipeline_mode<synchronous>, transform_indices = @transform_2, window_bounds = array<i64: 4, 64>}, {transform_indices = @transform_3, window_bounds = array<i64: 1, 1, 64>}]} {
    %0 = tpu.iota {dimensions = array<i32: 0>} : vector<99x1xi32>
    %c11_i32 = arith.constant 11 : i32
    %c0_i32 = arith.constant 0 : i32
    %1 = arith.cmpi eq, %c11_i32, %c0_i32 : i32
    %c1_i32 = arith.constant 1 : i32
    %2 = arith.select %1, %c1_i32, %c11_i32 : i32
    %3 = vector.broadcast %2 : i32 to vector<99x1xi32>
    %4 = arith.remsi %0, %3 : vector<99x1xi32>
    %c0_i32_0 = arith.constant 0 : i32
    %5 = vector.broadcast %c0_i32_0 : i32 to vector<99x1xi32>
    %6 = arith.cmpi ne, %4, %5 : vector<99x1xi32>
    %c0_i32_1 = arith.constant 0 : i32
    %7 = vector.broadcast %c0_i32_1 : i32 to vector<99x1xi32>
    %8 = arith.cmpi slt, %4, %7 : vector<99x1xi32>
    %c0_i32_2 = arith.constant 0 : i32
    %9 = arith.cmpi slt, %2, %c0_i32_2 : i32
    %10 = vector.broadcast %9 : i1 to vector<99x1xi1>
    %11 = vector.broadcast %10 : vector<99x1xi1> to vector<99x1xi1>
    %12 = arith.xori %8, %11 : vector<99x1xi1>
    %13 = arith.andi %12, %6 : vector<99x1xi1>
    %14 = vector.broadcast %2 : i32 to vector<99x1xi32>
    %15 = arith.addi %4, %14 : vector<99x1xi32>
    %16 = arith.select %13, %15, %4 : vector<99x1xi1>, vector<99x1xi32>
    %c9_i32 = arith.constant 9 : i32
    %17 = vector.broadcast %c9_i32 : i32 to vector<99x1xi32>
    %18 = arith.cmpi slt, %16, %17 : vector<99x1xi32>
    %c0 = arith.constant 0 : index
    %c0_3 = arith.constant 0 : index
    %c0_4 = arith.constant 0 : index
    %19 = vector.load %arg1[%c0, %c0_3, %c0_4] : memref<1x128x64xbf16, #tpu.memory_space<vmem>>, vector<1x128x64xbf16>
    %20 = vector.shape_cast %19 : vector<1x128x64xbf16> to vector<128x64xbf16>
    %21 = arith.extf %20 : vector<128x64xbf16> to vector<128x64xf32>
    %c0_5 = arith.constant 0 : index
    %c0_6 = arith.constant 0 : index
    %22 = vector.load %arg5[%c0_5, %c0_6] : memref<128x64xf32, #tpu.memory_space<vmem>>, vector<128x64xf32>
    tpu.vector_store %arg5[%c0_5, %c0_6], %21 {strides = array<i32>} : memref<128x64xf32, #tpu.memory_space<vmem>>, vector<128x64xf32>,
    %cst = arith.constant 0.000000e+00 : f32
    %23 = vector.broadcast %cst : f32 to vector<128x64xf32>
    %c0_7 = arith.constant 0 : index
    %c0_8 = arith.constant 0 : index
    %24 = vector.load %arg6[%c0_7, %c0_8] : memref<128x64xf32, #tpu.memory_space<vmem>>, vector<128x64xf32>
    tpu.vector_store %arg6[%c0_7, %c0_8], %23 {strides = array<i32>} : memref<128x64xf32, #tpu.memory_space<vmem>>, vector<128x64xf32>,
    %c0_9 = arith.constant 0 : index
    %c0_10 = arith.constant 0 : index
    %25 = vector.load %arg5[%c0_9, %c0_10] : memref<128x64xf32, #tpu.memory_space<vmem>>, vector<99x64xf32>
    %c1 = arith.constant 1 : index
    %c0_11 = arith.constant 0 : index
    %26 = vector.load %arg5[%c1, %c0_11] : memref<128x64xf32, #tpu.memory_space<vmem>>, vector<99x64xf32>
    %c2 = arith.constant 2 : index
    %c0_12 = arith.constant 0 : index
    %27 = vector.load %arg5[%c2, %c0_12] : memref<128x64xf32, #tpu.memory_space<vmem>>, vector<99x64xf32>
    %c11 = arith.constant 11 : index
    %c0_13 = arith.constant 0 : index
    %28 = vector.load %arg5[%c11, %c0_13] : memref<128x64xf32, #tpu.memory_space<vmem>>, vector<99x64xf32>
    %c12 = arith.constant 12 : index
    %c0_14 = arith.constant 0 : index
    %29 = vector.load %arg5[%c12, %c0_14] : memref<128x64xf32, #tpu.memory_space<vmem>>, vector<99x64xf32>
    %c13 = arith.constant 13 : index
    %c0_15 = arith.constant 0 : index
    %30 = vector.load %arg5[%c13, %c0_15] : memref<128x64xf32, #tpu.memory_space<vmem>>, vector<99x64xf32>
    %c22 = arith.constant 22 : index
    %c0_16 = arith.constant 0 : index
    %31 = vector.load %arg5[%c22, %c0_16] : memref<128x64xf32, #tpu.memory_space<vmem>>, vector<99x64xf32>
    %c23 = arith.constant 23 : index
    %c0_17 = arith.constant 0 : index
    %32 = vector.load %arg5[%c23, %c0_17] : memref<128x64xf32, #tpu.memory_space<vmem>>, vector<99x64xf32>
    %c24 = arith.constant 24 : index
    %c0_18 = arith.constant 0 : index
    %33 = vector.load %arg5[%c24, %c0_18] : memref<128x64xf32, #tpu.memory_space<vmem>>, vector<99x64xf32>
    %34 = tpu.concatenate %25, %26, %27, %28, %29, %30, %31, %32, %33 in 1 : vector<99x64xf32>, vector<99x64xf32>, vector<99x64xf32>, vector<99x64xf32>, vector<99x64xf32>, vector<99x64xf32>, vector<99x64xf32>, vector<99x64xf32>, vector<99x64xf32> -> vector<99x576xf32>
    %35 = arith.truncf %34 : vector<99x576xf32> to vector<99x576xbf16>
    %c0_19 = arith.constant 0 : index
    %c0_20 = arith.constant 0 : index
    %c0_21 = arith.constant 0 : index
    %36 = vector.load %arg2[%c0_19, %c0_20, %c0_21] : memref<4x576x64xbf16, #tpu.memory_space<vmem>>, vector<1x576x64xbf16>
    %37 = vector.shape_cast %36 : vector<1x576x64xbf16> to vector<576x64xbf16>
    %cst_22 = arith.constant dense<0.000000e+00> : vector<99x64xf32>
    %38 = tpu.matmul %35, %37, %cst_22 {dimension_numbers = #tpu.dot_dimension_numbers<[1], [0], [0], [1], [0, 0, 1, 1], [], []>} : vector<99x576xbf16>, vector<576x64xbf16>, vector<99x64xf32> -> vector<99x64xf32>
    %c0_23 = arith.constant 0 : index
    %c0_24 = arith.constant 0 : index
    %39 = vector.load %arg3[%c0_23, %c0_24] : memref<4x64xf32, #tpu.memory_space<vmem>>, vector<1x64xf32>
    %40 = vector.broadcast %39 : vector<1x64xf32> to vector<99x64xf32>
    %41 = arith.addf %38, %40 : vector<99x64xf32>
    %cst_25 = arith.constant 0.000000e+00 : f32
    %42 = vector.broadcast %cst_25 : f32 to vector<99x64xf32>
    %43 = arith.maximumf %41, %42 : vector<99x64xf32>
    %cst_26 = arith.constant 0.000000e+00 : f32
    %44 = vector.shape_cast %18 : vector<99x1xi1> to vector<99x1xi1>
    %45 = vector.broadcast %44 : vector<99x1xi1> to vector<99x64xi1>
    %46 = vector.broadcast %cst_26 : f32 to vector<99x64xf32>
    %47 = arith.select %45, %43, %46 : vector<99x64xi1>, vector<99x64xf32>
    %c12_27 = arith.constant 12 : index
    %c0_28 = arith.constant 0 : index
    %48 = vector.load %arg6[%c12_27, %c0_28] : memref<128x64xf32, #tpu.memory_space<vmem>>, vector<99x64xf32>
    tpu.vector_store %arg6[%c12_27, %c0_28], %47 {strides = array<i32>} : memref<128x64xf32, #tpu.memory_space<vmem>>, vector<99x64xf32>,
    %c0_29 = arith.constant 0 : index
    %c0_30 = arith.constant 0 : index
    %49 = vector.load %arg6[%c0_29, %c0_30] : memref<128x64xf32, #tpu.memory_space<vmem>>, vector<99x64xf32>
    %c1_31 = arith.constant 1 : index
    %c0_32 = arith.constant 0 : index
    %50 = vector.load %arg6[%c1_31, %c0_32] : memref<128x64xf32, #tpu.memory_space<vmem>>, vector<99x64xf32>
    %c2_33 = arith.constant 2 : index
    %c0_34 = arith.constant 0 : index
    %51 = vector.load %arg6[%c2_33, %c0_34] : memref<128x64xf32, #tpu.memory_space<vmem>>, vector<99x64xf32>
    %c11_35 = arith.constant 11 : index
    %c0_36 = arith.constant 0 : index
    %52 = vector.load %arg6[%c11_35, %c0_36] : memref<128x64xf32, #tpu.memory_space<vmem>>, vector<99x64xf32>
    %c12_37 = arith.constant 12 : index
    %c0_38 = arith.constant 0 : index
    %53 = vector.load %arg6[%c12_37, %c0_38] : memref<128x64xf32, #tpu.memory_space<vmem>>, vector<99x64xf32>
    %c13_39 = arith.constant 13 : index
    %c0_40 = arith.constant 0 : index
    %54 = vector.load %arg6[%c13_39, %c0_40] : memref<128x64xf32, #tpu.memory_space<vmem>>, vector<99x64xf32>
    %c22_41 = arith.constant 22 : index
    %c0_42 = arith.constant 0 : index
    %55 = vector.load %arg6[%c22_41, %c0_42] : memref<128x64xf32, #tpu.memory_space<vmem>>, vector<99x64xf32>
    %c23_43 = arith.constant 23 : index
    %c0_44 = arith.constant 0 : index
    %56 = vector.load %arg6[%c23_43, %c0_44] : memref<128x64xf32, #tpu.memory_space<vmem>>, vector<99x64xf32>
    %c24_45 = arith.constant 24 : index
    %c0_46 = arith.constant 0 : index
    %57 = vector.load %arg6[%c24_45, %c0_46] : memref<128x64xf32, #tpu.memory_space<vmem>>, vector<99x64xf32>
    %58 = tpu.concatenate %49, %50, %51, %52, %53, %54, %55, %56, %57 in 1 : vector<99x64xf32>, vector<99x64xf32>, vector<99x64xf32>, vector<99x64xf32>, vector<99x64xf32>, vector<99x64xf32>, vector<99x64xf32>, vector<99x64xf32>, vector<99x64xf32> -> vector<99x576xf32>
    %59 = arith.truncf %58 : vector<99x576xf32> to vector<99x576xbf16>
    %c1_47 = arith.constant 1 : index
    %c0_48 = arith.constant 0 : index
    %c0_49 = arith.constant 0 : index
    %60 = vector.load %arg2[%c1_47, %c0_48, %c0_49] : memref<4x576x64xbf16, #tpu.memory_space<vmem>>, vector<1x576x64xbf16>
    %61 = vector.shape_cast %60 : vector<1x576x64xbf16> to vector<576x64xbf16>
    %cst_50 = arith.constant dense<0.000000e+00> : vector<99x64xf32>
    %62 = tpu.matmul %59, %61, %cst_50 {dimension_numbers = #tpu.dot_dimension_numbers<[1], [0], [0], [1], [0, 0, 1, 1], [], []>} : vector<99x576xbf16>, vector<576x64xbf16>, vector<99x64xf32> -> vector<99x64xf32>
    %c1_51 = arith.constant 1 : index
    %c0_52 = arith.constant 0 : index
    %63 = vector.load %arg3[%c1_51, %c0_52] : memref<4x64xf32, #tpu.memory_space<vmem>>, vector<1x64xf32>
    %64 = vector.broadcast %63 : vector<1x64xf32> to vector<99x64xf32>
    %65 = arith.addf %62, %64 : vector<99x64xf32>
    %c12_53 = arith.constant 12 : index
    %c0_54 = arith.constant 0 : index
    %66 = vector.load %arg5[%c12_53, %c0_54] : memref<128x64xf32, #tpu.memory_space<vmem>>, vector<99x64xf32>
    %67 = arith.addf %65, %66 : vector<99x64xf32>
    %cst_55 = arith.constant 0.000000e+00 : f32
    %68 = vector.broadcast %cst_55 : f32 to vector<99x64xf32>
    %69 = arith.maximumf %67, %68 : vector<99x64xf32>
    %cst_56 = arith.constant 0.000000e+00 : f32
    %70 = vector.shape_cast %18 : vector<99x1xi1> to vector<99x1xi1>
    %71 = vector.broadcast %70 : vector<99x1xi1> to vector<99x64xi1>
    %72 = vector.broadcast %cst_56 : f32 to vector<99x64xf32>
    %73 = arith.select %71, %69, %72 : vector<99x64xi1>, vector<99x64xf32>
    %c12_57 = arith.constant 12 : index
    %c0_58 = arith.constant 0 : index
    %74 = vector.load %arg5[%c12_57, %c0_58] : memref<128x64xf32, #tpu.memory_space<vmem>>, vector<99x64xf32>
    tpu.vector_store %arg5[%c12_57, %c0_58], %73 {strides = array<i32>} : memref<128x64xf32, #tpu.memory_space<vmem>>, vector<99x64xf32>,
    %c0_59 = arith.constant 0 : index
    %c0_60 = arith.constant 0 : index
    %75 = vector.load %arg5[%c0_59, %c0_60] : memref<128x64xf32, #tpu.memory_space<vmem>>, vector<99x64xf32>
    %c1_61 = arith.constant 1 : index
    %c0_62 = arith.constant 0 : index
    %76 = vector.load %arg5[%c1_61, %c0_62] : memref<128x64xf32, #tpu.memory_space<vmem>>, vector<99x64xf32>
    %c2_63 = arith.constant 2 : index
    %c0_64 = arith.constant 0 : index
    %77 = vector.load %arg5[%c2_63, %c0_64] : memref<128x64xf32, #tpu.memory_space<vmem>>, vector<99x64xf32>
    %c11_65 = arith.constant 11 : index
    %c0_66 = arith.constant 0 : index
    %78 = vector.load %arg5[%c11_65, %c0_66] : memref<128x64xf32, #tpu.memory_space<vmem>>, vector<99x64xf32>
    %c12_67 = arith.constant 12 : index
    %c0_68 = arith.constant 0 : index
    %79 = vector.load %arg5[%c12_67, %c0_68] : memref<128x64xf32, #tpu.memory_space<vmem>>, vector<99x64xf32>
    %c13_69 = arith.constant 13 : index
    %c0_70 = arith.constant 0 : index
    %80 = vector.load %arg5[%c13_69, %c0_70] : memref<128x64xf32, #tpu.memory_space<vmem>>, vector<99x64xf32>
    %c22_71 = arith.constant 22 : index
    %c0_72 = arith.constant 0 : index
    %81 = vector.load %arg5[%c22_71, %c0_72] : memref<128x64xf32, #tpu.memory_space<vmem>>, vector<99x64xf32>
    %c23_73 = arith.constant 23 : index
    %c0_74 = arith.constant 0 : index
    %82 = vector.load %arg5[%c23_73, %c0_74] : memref<128x64xf32, #tpu.memory_space<vmem>>, vector<99x64xf32>
    %c24_75 = arith.constant 24 : index
    %c0_76 = arith.constant 0 : index
    %83 = vector.load %arg5[%c24_75, %c0_76] : memref<128x64xf32, #tpu.memory_space<vmem>>, vector<99x64xf32>
    %84 = tpu.concatenate %75, %76, %77, %78, %79, %80, %81, %82, %83 in 1 : vector<99x64xf32>, vector<99x64xf32>, vector<99x64xf32>, vector<99x64xf32>, vector<99x64xf32>, vector<99x64xf32>, vector<99x64xf32>, vector<99x64xf32>, vector<99x64xf32> -> vector<99x576xf32>
    %85 = arith.truncf %84 : vector<99x576xf32> to vector<99x576xbf16>
    %c2_77 = arith.constant 2 : index
    %c0_78 = arith.constant 0 : index
    %c0_79 = arith.constant 0 : index
    %86 = vector.load %arg2[%c2_77, %c0_78, %c0_79] : memref<4x576x64xbf16, #tpu.memory_space<vmem>>, vector<1x576x64xbf16>
    %87 = vector.shape_cast %86 : vector<1x576x64xbf16> to vector<576x64xbf16>
    %cst_80 = arith.constant dense<0.000000e+00> : vector<99x64xf32>
    %88 = tpu.matmul %85, %87, %cst_80 {dimension_numbers = #tpu.dot_dimension_numbers<[1], [0], [0], [1], [0, 0, 1, 1], [], []>} : vector<99x576xbf16>, vector<576x64xbf16>, vector<99x64xf32> -> vector<99x64xf32>
    %c2_81 = arith.constant 2 : index
    %c0_82 = arith.constant 0 : index
    %89 = vector.load %arg3[%c2_81, %c0_82] : memref<4x64xf32, #tpu.memory_space<vmem>>, vector<1x64xf32>
    %90 = vector.broadcast %89 : vector<1x64xf32> to vector<99x64xf32>
    %91 = arith.addf %88, %90 : vector<99x64xf32>
    %cst_83 = arith.constant 0.000000e+00 : f32
    %92 = vector.broadcast %cst_83 : f32 to vector<99x64xf32>
    %93 = arith.maximumf %91, %92 : vector<99x64xf32>
    %cst_84 = arith.constant 0.000000e+00 : f32
    %94 = vector.shape_cast %18 : vector<99x1xi1> to vector<99x1xi1>
    %95 = vector.broadcast %94 : vector<99x1xi1> to vector<99x64xi1>
    %96 = vector.broadcast %cst_84 : f32 to vector<99x64xf32>
    %97 = arith.select %95, %93, %96 : vector<99x64xi1>, vector<99x64xf32>
    %c12_85 = arith.constant 12 : index
    %c0_86 = arith.constant 0 : index
    %98 = vector.load %arg6[%c12_85, %c0_86] : memref<128x64xf32, #tpu.memory_space<vmem>>, vector<99x64xf32>
    tpu.vector_store %arg6[%c12_85, %c0_86], %97 {strides = array<i32>} : memref<128x64xf32, #tpu.memory_space<vmem>>, vector<99x64xf32>,
    %c0_87 = arith.constant 0 : index
    %c0_88 = arith.constant 0 : index
    %99 = vector.load %arg6[%c0_87, %c0_88] : memref<128x64xf32, #tpu.memory_space<vmem>>, vector<99x64xf32>
    %c1_89 = arith.constant 1 : index
    %c0_90 = arith.constant 0 : index
    %100 = vector.load %arg6[%c1_89, %c0_90] : memref<128x64xf32, #tpu.memory_space<vmem>>, vector<99x64xf32>
    %c2_91 = arith.constant 2 : index
    %c0_92 = arith.constant 0 : index
    %101 = vector.load %arg6[%c2_91, %c0_92] : memref<128x64xf32, #tpu.memory_space<vmem>>, vector<99x64xf32>
    %c11_93 = arith.constant 11 : index
    %c0_94 = arith.constant 0 : index
    %102 = vector.load %arg6[%c11_93, %c0_94] : memref<128x64xf32, #tpu.memory_space<vmem>>, vector<99x64xf32>
    %c12_95 = arith.constant 12 : index
    %c0_96 = arith.constant 0 : index
    %103 = vector.load %arg6[%c12_95, %c0_96] : memref<128x64xf32, #tpu.memory_space<vmem>>, vector<99x64xf32>
    %c13_97 = arith.constant 13 : index
    %c0_98 = arith.constant 0 : index
    %104 = vector.load %arg6[%c13_97, %c0_98] : memref<128x64xf32, #tpu.memory_space<vmem>>, vector<99x64xf32>
    %c22_99 = arith.constant 22 : index
    %c0_100 = arith.constant 0 : index
    %105 = vector.load %arg6[%c22_99, %c0_100] : memref<128x64xf32, #tpu.memory_space<vmem>>, vector<99x64xf32>
    %c23_101 = arith.constant 23 : index
    %c0_102 = arith.constant 0 : index
    %106 = vector.load %arg6[%c23_101, %c0_102] : memref<128x64xf32, #tpu.memory_space<vmem>>, vector<99x64xf32>
    %c24_103 = arith.constant 24 : index
    %c0_104 = arith.constant 0 : index
    %107 = vector.load %arg6[%c24_103, %c0_104] : memref<128x64xf32, #tpu.memory_space<vmem>>, vector<99x64xf32>
    %108 = tpu.concatenate %99, %100, %101, %102, %103, %104, %105, %106, %107 in 1 : vector<99x64xf32>, vector<99x64xf32>, vector<99x64xf32>, vector<99x64xf32>, vector<99x64xf32>, vector<99x64xf32>, vector<99x64xf32>, vector<99x64xf32>, vector<99x64xf32> -> vector<99x576xf32>
    %109 = arith.truncf %108 : vector<99x576xf32> to vector<99x576xbf16>
    %c3 = arith.constant 3 : index
    %c0_105 = arith.constant 0 : index
    %c0_106 = arith.constant 0 : index
    %110 = vector.load %arg2[%c3, %c0_105, %c0_106] : memref<4x576x64xbf16, #tpu.memory_space<vmem>>, vector<1x576x64xbf16>
    %111 = vector.shape_cast %110 : vector<1x576x64xbf16> to vector<576x64xbf16>
    %cst_107 = arith.constant dense<0.000000e+00> : vector<99x64xf32>
    %112 = tpu.matmul %109, %111, %cst_107 {dimension_numbers = #tpu.dot_dimension_numbers<[1], [0], [0], [1], [0, 0, 1, 1], [], []>} : vector<99x576xbf16>, vector<576x64xbf16>, vector<99x64xf32> -> vector<99x64xf32>
    %c3_108 = arith.constant 3 : index
    %c0_109 = arith.constant 0 : index
    %113 = vector.load %arg3[%c3_108, %c0_109] : memref<4x64xf32, #tpu.memory_space<vmem>>, vector<1x64xf32>
    %114 = vector.broadcast %113 : vector<1x64xf32> to vector<99x64xf32>
    %115 = arith.addf %112, %114 : vector<99x64xf32>
    %c12_110 = arith.constant 12 : index
    %c0_111 = arith.constant 0 : index
    %116 = vector.load %arg5[%c12_110, %c0_111] : memref<128x64xf32, #tpu.memory_space<vmem>>, vector<99x64xf32>
    %117 = arith.addf %115, %116 : vector<99x64xf32>
    %cst_112 = arith.constant 0.000000e+00 : f32
    %118 = vector.broadcast %cst_112 : f32 to vector<99x64xf32>
    %119 = arith.maximumf %117, %118 : vector<99x64xf32>
    %cst_113 = arith.constant 0.000000e+00 : f32
    %120 = vector.shape_cast %18 : vector<99x1xi1> to vector<99x1xi1>
    %121 = vector.broadcast %120 : vector<99x1xi1> to vector<99x64xi1>
    %122 = vector.broadcast %cst_113 : f32 to vector<99x64xf32>
    %123 = arith.select %121, %119, %122 : vector<99x64xi1>, vector<99x64xf32>
    %cst_114 = arith.constant dense<0.000000e+00> : vector<64xf32>
    %124 = vector.multi_reduction <add>, %123, %cst_114 [0] : vector<99x64xf32> to vector<64xf32>
    %125 = vector.shape_cast %124 : vector<64xf32> to vector<1x64xf32>
    %cst_115 = arith.constant 0.0123456791 : f32
    %126 = vector.broadcast %cst_115 : f32 to vector<1x64xf32>
    %127 = arith.mulf %125, %126 : vector<1x64xf32>
    %c0_116 = arith.constant 0 : index
    %c0_117 = arith.constant 0 : index
    %c0_118 = arith.constant 0 : index
    %128 = vector.load %arg4[%c0_116, %c0_117, %c0_118] : memref<1x1x64xf32, #tpu.memory_space<vmem>>, vector<1x1x64xf32>
    %129 = vector.shape_cast %128 : vector<1x1x64xf32> to vector<1x64xf32>
    %130 = vector.shape_cast %127 : vector<1x64xf32> to vector<1x1x64xf32>
    tpu.vector_store %arg4[%c0_116, %c0_117, %c0_118], %130 {strides = array<i32>} : memref<1x1x64xf32, #tpu.memory_space<vmem>>, vector<1x1x64xf32>,
    return
  }
  func.func @transform_0(%arg0: i32) -> (i32, i32, i32) {
    %c0_i32 = arith.constant 0 : i32
    %c0_i32_0 = arith.constant 0 : i32
    %c0_i32_1 = arith.constant 0 : i32
    return %arg0, %c0_i32, %c0_i32_0 : i32, i32, i32
  }
  func.func @transform_1(%arg0: i32) -> (i32, i32, i32) {
    %c0_i32 = arith.constant 0 : i32
    %c0_i32_0 = arith.constant 0 : i32
    %c0_i32_1 = arith.constant 0 : i32
    %c0_i32_2 = arith.constant 0 : i32
    return %c0_i32, %c0_i32_0, %c0_i32_1 : i32, i32, i32
  }
  func.func @transform_2(%arg0: i32) -> (i32, i32) {
    %c0_i32 = arith.constant 0 : i32
    %c0_i32_0 = arith.constant 0 : i32
    %c0_i32_1 = arith.constant 0 : i32
    return %c0_i32, %c0_i32_0 : i32, i32
  }
  func.func @transform_3(%arg0: i32) -> (i32, i32, i32) {
    %c0_i32 = arith.constant 0 : i32
    %c0_i32_0 = arith.constant 0 : i32
    %c0_i32_1 = arith.constant 0 : i32
    return %arg0, %c0_i32, %c0_i32_0 : i32, i32, i32
  }
}

</mosaic_0001>

<llo_original>
// kernel: tile.8
$region0: #{tile.8}
  #allocation0 [shape = 's32[1]{0}', space=sflag, size = 0x4, scoped, tag = 'scoped memory for tile.8']
  %s0 = inlined_call_operand.vmem [shape: f32[64], index: 0, kind: input, shape index: {}]
  %s1 = inlined_call_operand.vmem [shape: f32[17,64], index: 1, kind: output, shape index: {}]
  // Predicated region
  $region2: #{tile.8} parent=0 // pred_check
    _
  $region3: #{tile.8} parent=0 // pred_check_branch
    %3 = sbr.rel (0) target = $region5
  $region4: #{tile.8} parent=0 // pred_region
    _
  $region5: #{tile.8} parent=0 // pred_fallthru
    _
  %v4 = vld [vmem:[%s0] ss:$0 sm:$0xff]
  %5 = vst [vmem:[%s1] sm:$0xff] %v4
  %s6 = scalar_lea.vmem %s1, 8
  %7 = vst [vmem:[%s6] sm:$0xff] %v4
  %s8 = scalar_lea.vmem %s1, 16
  %9 = vst [vmem:[%s8] sm:$0xff] %v4

// kernel: tile.9
$region0: #{tile.9}
  %s0 = inlined_call_operand.vmem [shape: f32[17,64], index: 0, kind: input, shape index: {}]
  %s1 = inlined_call_operand.vmem [shape: f32[1,1088], index: 1, kind: output, shape index: {}]
  $region1: #{tile.9} parent=0
    #allocation0 [shape = 'u8[36864]{0}', space=vmem, size = 0x9000, scoped, tag = 'scoped mem for output reshape']
    %v2 = vld [vmem:[%s0] ss:$2 sm:$0xff]
    %vm3 = vcmask 523264
    %4 = vst.msk [vmem:[#allocation0] ss:$8 sm:$0xf] %vm3, %v2
    %5 = vst.msk [vmem:[#allocation0] ss:$8 sm:$0xf0] %vm3, %v2
    %s6 = scalar_lea.vmem %s0, 16
    %v7 = vld [vmem:[%s6] sm:$0x1]
    %vm8 = vcmask 523264
    %s9 = scalar_lea.vmem [#allocation0], 64
    %10 = vst.msk [vmem:[%s9] sm:$0x1] %vm8, %v7
    %s11 = scalar_lea.vmem %s0, 1
    %v12 = vld [vmem:[%s11] ss:$2 sm:$0xff]
    %13 = vrot.lane.b32.xlu0 %v12, 64
    %v14 = vpop.permute.xlu0 %13
    %vm15 = vcmask 1048064
    %16 = vst.msk [vmem:[#allocation0] ss:$8 sm:$0xf] %vm15, %v14
    %17 = vst.msk [vmem:[#allocation0] ss:$8 sm:$0xf0] %vm15, %v14
    %s19 = sshllo.u32 0, 1
    %v21 = vld [vmem:[#allocation0] sm:%s19]
    %s22 = sshllo.u32 0, 1
    %23 = vst [vmem:[%s1] sm:%s22] %v21
    %s24 = scalar_lea.vmem [#allocation0], 8
    %v25 = vld [vmem:[%s24] sm:%s19]
    %s26 = sshllo.u32 0, 1
    %s27 = scalar_lea.vmem %s1, 1
    %28 = vst [vmem:[%s27] sm:%s26] %v25
    %s29 = scalar_lea.vmem [#allocation0], 16
    %v30 = vld [vmem:[%s29] sm:%s19]
    %s31 = sshllo.u32 0, 1
    %s32 = smul.addr 1, 2
    %s33 = scalar_lea.vmem %s1, %s32
    %34 = vst [vmem:[%s33] sm:%s31] %v30
    %s35 = scalar_lea.vmem [#allocation0], 24
    %v36 = vld [vmem:[%s35] sm:%s19]
    %s37 = sshllo.u32 0, 1
    %s38 = smul.addr 1, 3
    %s39 = scalar_lea.vmem %s1, %s38
    %40 = vst [vmem:[%s39] sm:%s37] %v36
    %s41 = scalar_lea.vmem [#allocation0], 32
    %v42 = vld [vmem:[%s41] sm:%s19]
    %s43 = sshllo.u32 0, 1
    %s44 = smul.addr 1, 4
    %s45 = scalar_lea.vmem %s1, %s44
    %46 = vst [vmem:[%s45] sm:%s43] %v42
    %s47 = scalar_lea.vmem [#allocation0], 40
    %v48 = vld [vmem:[%s47] sm:%s19]
    %s49 = sshllo.u32 0, 1
    %s50 = smul.addr 1, 5
    %s51 = scalar_lea.vmem %s1, %s50
    %52 = vst [vmem:[%s51] sm:%s49] %v48
    %s53 = scalar_lea.vmem [#allocation0], 48
    %v54 = vld [vmem:[%s53] sm:%s19]
    %s55 = sshllo.u32 0, 1
    %s56 = smul.addr 1, 6
    %s57 = scalar_lea.vmem %s1, %s56
    %58 = vst [vmem:[%s57] sm:%s55] %v54
    %s59 = scalar_lea.vmem [#allocation0], 56
    %v60 = vld [vmem:[%s59] sm:%s19]
    %s61 = sshllo.u32 0, 1
    %s62 = smul.addr 1, 7
    %s63 = scalar_lea.vmem %s1, %s62
    %64 = vst [vmem:[%s63] sm:%s61] %v60
    %s65 = scalar_lea.vmem [#allocation0], 64
    %v66 = vld [vmem:[%s65] sm:%s19]
    %s67 = sshllo.u32 0, 1
    %s68 = smul.addr 1, 8
    %s69 = scalar_lea.vmem %s1, %s68
    %70 = vst [vmem:[%s69] sm:%s67] %v66

// kernel: resnet_backbone_2d_forward.2
$region0: #{resnet_backbone_2d_forward.2}
  #allocation0 [shape = 'u32[]', space=smem, size = 0x4, offset = 0x4, fixed_abs, tag = 'smem constant byte address 0x4 - core index']
  #allocation1 [shape = 'u32[144,128]{1,0:T(1,128)}', space=vmem, size = 0x12000, scoped, tag = 'internal scratch']
  %s0 = inlined_call_operand.vmem [shape: bf16[2,17,32], index: 0, kind: input, shape index: {}]
  %s1 = inlined_call_operand.vmem [shape: bf16[32,1088], index: 1, kind: input, shape index: {}]
  %s2 = inlined_call_operand.vmem [shape: f32[1,1088], index: 2, kind: input, shape index: {}]
  %s3 = inlined_call_operand.vmem [shape: bf16[2,9,576], index: 3, kind: output, shape index: {}]
  %s4 = sld [smem:[#allocation0]]
  $region45: #{resnet_backbone_2d_forward.2} parent=0
    _
  %s6 = ssub.s32 1, %s4
  %s7 = scalar_select 0, %s6, %s4
  loop: start=0, step=1, limit=4
  $region2: #{resnet_backbone_2d_forward.2} parent=0 // loop_pre_header
    _
  $region3: #{resnet_backbone_2d_forward.2} parent=0 // loop_header
    %s9 = sphi 0, %s13
    %p10 = scmp.ge.s32.totalorder %s9, 4
    %s19 = sphi 0, %s21
    %s22 = sphi 0, %s19
    %s23 = sphi 0, %s22
    %s39 = sphi 0, %s23
    %s43 = sphi 0, %s43
    %s45 = sphi 0, %s43
    %s46 = sphi 0, %s45
    %s60 = sphi 0, %s46
    %s64 = sphi 0, %s64
    %s66 = sphi 0, %s64
    %s67 = sphi 0, %s66
    %s81 = sphi 0, %s67
    %s87 = sphi 0, %s89
    %s90 = sphi 0, %s87
    %s91 = sphi 0, %s90
    %s107 = sphi 0, %s91
  $region4: #{resnet_backbone_2d_forward.2} parent=0 // loop_header_branch
    %12 = sbr.rel (%p10) target = $region8
  $region5: #{resnet_backbone_2d_forward.2} parent=0 // loop_body
    %s14 = ssub.s32 %s9, 1
    %s15 = ssub.s32 %s9, 2
    %s16 = sadd.s32 %s9, 1
    %s17 = ssub.s32 %s9, %s16
    %p18 = scmp.eq.s32.totalorder %s17, 0
    %s20 = sadd.s32 %s19, 1
    %s21 = scalar_select %p18, %s19, %s20
    %p24 = pneg %p18
    %p25 = scmp.eq.s32.totalorder %s9, 1
    %p26 = por %p24, %p25
    %p27 = scmp.ne.s32.totalorder %s19, %s22
    %p28 = scmp.eq.s32.totalorder %s9, 0
    %p29 = por %p27, %p28
    %p30 = scmp.ne.s32.totalorder %s19, %s22
    %p31 = scmp.eq.s32.totalorder %s14, 1
    %p32 = por %p30, %p31
    %p33 = scmp.ne.s32.totalorder %s22, %s23
    %p34 = scmp.eq.s32.totalorder %s14, 0
    %p35 = por %p33, %p34
    %p36 = scmp.ne.s32.totalorder %s22, %s23
    %p37 = scmp.eq.s32.totalorder %s15, 1
    %p38 = por %p36, %p37
    %p40 = scmp.ne.s32.totalorder %s23, %s39
    %p41 = scmp.eq.s32.totalorder %s15, 0
    %p42 = por %p40, %p41
    %s44 = sadd.s32 %s43, 1
    %p47 = scmp.eq.s32.totalorder %s9, 1
    %p48 = scmp.ne.s32.totalorder %s43, %s45
    %p49 = scmp.eq.s32.totalorder %s9, 0
    %p50 = por %p48, %p49
    %p51 = scmp.ne.s32.totalorder %s43, %s45
    %p52 = scmp.eq.s32.totalorder %s14, 1
    %p53 = por %p51, %p52
    %p54 = scmp.ne.s32.totalorder %s45, %s46
    %p55 = scmp.eq.s32.totalorder %s14, 0
    %p56 = por %p54, %p55
    %p57 = scmp.ne.s32.totalorder %s45, %s46
    %p58 = scmp.eq.s32.totalorder %s15, 1
    %p59 = por %p57, %p58
    %p61 = scmp.ne.s32.totalorder %s46, %s60
    %p62 = scmp.eq.s32.totalorder %s15, 0
    %p63 = por %p61, %p62
    %s65 = sadd.s32 %s64, 1
    %p68 = scmp.eq.s32.totalorder %s9, 1
    %p69 = scmp.ne.s32.totalorder %s64, %s66
    %p70 = scmp.eq.s32.totalorder %s9, 0
    %p71 = por %p69, %p70
    %p72 = scmp.ne.s32.totalorder %s64, %s66
    %p73 = scmp.eq.s32.totalorder %s14, 1
    %p74 = por %p72, %p73
    %p75 = scmp.ne.s32.totalorder %s66, %s67
    %p76 = scmp.eq.s32.totalorder %s14, 0
    %p77 = por %p75, %p76
    %p78 = scmp.ne.s32.totalorder %s66, %s67
    %p79 = scmp.eq.s32.totalorder %s15, 1
    %p80 = por %p78, %p79
    %p82 = scmp.ne.s32.totalorder %s67, %s81
    %p83 = scmp.eq.s32.totalorder %s15, 0
    %p84 = por %p82, %p83
    %s85 = ssub.s32 %s9, %s16
    %p86 = scmp.eq.s32.totalorder %s85, 0
    %s88 = sadd.s32 %s87, 1
    %s89 = scalar_select %p86, %s87, %s88
    %p92 = pneg %p86
    %p93 = scmp.eq.s32.totalorder %s9, 1
    %p94 = por %p92, %p93
    %p95 = scmp.ne.s32.totalorder %s87, %s90
    %p96 = scmp.eq.s32.totalorder %s9, 0
    %p97 = por %p95, %p96
    %p98 = scmp.ne.s32.totalorder %s87, %s90
    %p99 = scmp.eq.s32.totalorder %s14, 1
    %p100 = por %p98, %p99
    %p101 = scmp.ne.s32.totalorder %s90, %s91
    %p102 = scmp.eq.s32.totalorder %s14, 0
    %p103 = por %p101, %p102
    %p104 = scmp.ne.s32.totalorder %s90, %s91
    %p105 = scmp.eq.s32.totalorder %s15, 1
    %p106 = por %p104, %p105
    %p108 = scmp.ne.s32.totalorder %s91, %s107
    %p109 = scmp.eq.s32.totalorder %s15, 0
    %p110 = por %p108, %p109
    %p111 = scmp.le.s32.totalorder 1, %s9
    %p112 = scmp.lt.s32.totalorder %s9, 3
    %p113 = pnand %p111, %p112
    %p114 = pneg %p113
    // Predicated region
    $region9: #{resnet_backbone_2d_forward.2} parent=5 // pred_check
      _
    $region10: #{resnet_backbone_2d_forward.2} parent=5 // pred_check_branch
      %116 = sbr.rel (%p113) target = $region12
    $region11: #{resnet_backbone_2d_forward.2} parent=5 // pred_region
      %s117 = ssub.s32 %s9, 1
      // Predicated region
      $region13: #{resnet_backbone_2d_forward.2} parent=11 // pred_check
        %p118 = pneg %p56
      $region14: #{resnet_backbone_2d_forward.2} parent=11 // pred_check_branch
        %120 = sbr.rel (%p118) target = $region16
      $region15: #{resnet_backbone_2d_forward.2} parent=11 // pred_region
        _
      $region16: #{resnet_backbone_2d_forward.2} parent=11 // pred_fallthru
        _
      // Predicated region
      $region17: #{resnet_backbone_2d_forward.2} parent=11 // pred_check
        %p121 = pneg %p77
      $region18: #{resnet_backbone_2d_forward.2} parent=11 // pred_check_branch
        %123 = sbr.rel (%p121) target = $region20
      $region19: #{resnet_backbone_2d_forward.2} parent=11 // pred_region
        _
      $region20: #{resnet_backbone_2d_forward.2} parent=11 // pred_fallthru
        _
    $region12: #{resnet_backbone_2d_forward.2} parent=5 // pred_fallthru
      _
    %p124 = scmp.lt.s32.totalorder %s9, 2
    // Predicated region
    $region21: #{resnet_backbone_2d_forward.2} parent=5 // pred_check
      %p125 = pneg %p124
    $region22: #{resnet_backbone_2d_forward.2} parent=5 // pred_check_branch
      %127 = sbr.rel (%p125) target = $region24
    $region23: #{resnet_backbone_2d_forward.2} parent=5 // pred_region
      // Predicated region
      $region25: #{resnet_backbone_2d_forward.2} parent=23 // pred_check
        %p128 = pneg %p29
      $region26: #{resnet_backbone_2d_forward.2} parent=23 // pred_check_branch
        %130 = sbr.rel (%p128) target = $region28
      $region27: #{resnet_backbone_2d_forward.2} parent=23 // pred_region
        %p131 = scmp.lt.s32.totalorder %s9, 1
        %s132 = scalar_select %p131, %s9, 1
        %s133 = smul.addr %s132, 3
        %s134 = smul.addr %s133, 4
        %s135 = scalar_lea.vmem %s0, %s134
      $region28: #{resnet_backbone_2d_forward.2} parent=23 // pred_fallthru
        _
    $region24: #{resnet_backbone_2d_forward.2} parent=5 // pred_fallthru
      _
    %p136 = scmp.le.s32.totalorder 1, %s9
    %p137 = scmp.lt.s32.totalorder %s9, 3
    %p138 = pnand %p136, %p137
    %p139 = pneg %p138
    // Predicated region
    $region29: #{resnet_backbone_2d_forward.2} parent=5 // pred_check
      _
    $region30: #{resnet_backbone_2d_forward.2} parent=5 // pred_check_branch
      %141 = sbr.rel (%p138) target = $region32
    $region31: #{resnet_backbone_2d_forward.2} parent=5 // pred_region
      %s142 = ssub.s32 %s9, 1
      %p143 = scmp.lt.s32.totalorder %s14, 1
      %s144 = scalar_select %p143, %s14, 1
      %s145 = smul.addr %s144, 3
      %s146 = smul.addr %s145, 4
      %s147 = scalar_lea.vmem %s0, %s146
      %p148 = pneg %p35
      %p149 = pneg %p32
      %p150 = pneg %p56
      %p151 = pneg %p53
      %p152 = pneg %p77
      %p153 = pneg %p74
      %p154 = pneg %p103
      %p155 = pneg %p100
      %p156 = scmp.lt.s32.totalorder %s14, 1
      %s157 = scalar_select %p156, %s14, 1
      %s158 = smul.addr %s157, 10
      %s159 = smul.addr %s158, 4
      %s160 = scalar_lea.vmem %s3, %s159
      %p161 = scmp.lt.s32.totalorder %s14, 1
      %s162 = scalar_select %p161, %s14, 1
      %s163 = smul.addr %s162, 3
      %s164 = smul.addr %s163, 4
      %s165 = scalar_lea.vmem %s0, %s164
      %p166 = scmp.lt.s32.totalorder %s14, 1
      %s167 = scalar_select %p166, %s14, 1
      %s168 = smul.addr %s167, 10
      %s169 = smul.addr %s168, 4
      %s170 = scalar_lea.vmem %s3, %s169
      %v172 = vld [vmem:[%s165] sm:$0xf]
      %v173 = vld [vmem:[%s165 + $0x4] sm:$0xf]
      %v174 = vld [vmem:[%s165 + $0x8] sm:$0x1]
      %v175 = vld [vmem:[%s1] sm:$0xff]
      %v176 = vld [vmem:[%s1 + $0x8] sm:$0xff]
      %v177 = vld [vmem:[%s1 + $0x10] sm:$0xff]
      %v178 = vld [vmem:[%s1 + $0x18] sm:$0xff]
      %v179 = vld [vmem:[%s1 + $0x20] sm:$0xf]
      %v180 = vld [vmem:[%s1 + $0x24] sm:$0xff]
      %v181 = vld [vmem:[%s1 + $0x2c] sm:$0xff]
      %v182 = vld [vmem:[%s1 + $0x34] sm:$0xff]
      %v183 = vld [vmem:[%s1 + $0x3c] sm:$0xff]
      %v184 = vld [vmem:[%s1 + $0x44] sm:$0xf]
      %v185 = vld [vmem:[%s1 + $0x48] sm:$0xff]
      %v186 = vld [vmem:[%s1 + $0x50] sm:$0xff]
      %v187 = vld [vmem:[%s1 + $0x58] sm:$0xff]
      %v188 = vld [vmem:[%s1 + $0x60] sm:$0xff]
      %v189 = vld [vmem:[%s1 + $0x68] sm:$0xf]
      %v190 = vld [vmem:[%s1 + $0x6c] sm:$0xff]
      %v191 = vld [vmem:[%s1 + $0x74] sm:$0xff]
      %v192 = vld [vmem:[%s1 + $0x7c] sm:$0xff]
      %v193 = vld [vmem:[%s1 + $0x84] sm:$0xff]
      %v194 = vld [vmem:[%s1 + $0x8c] sm:$0xf]
      %v195 = vld [vmem:[%s2] sm:$0xff]
      %v196 = vld [vmem:[%s2 + $0x8] sm:$0x1]
      %v199 = vlaneseq
      %v200 = vshrl.u32 %v199, 7
      %v201 = vsub.s32 0, %v200
      %v202 = vrot.slane %v195, %v201
      %v203 = vlaneseq
      %v204 = vshrl.u32 %v203, 7
      %v205 = vsub.s32 1, %v204
      %v206 = vrot.slane %v195, %v205
      %v207 = vlaneseq
      %v208 = vshrl.u32 %v207, 7
      %v209 = vsub.s32 2, %v208
      %v210 = vrot.slane %v195, %v209
      %v211 = vlaneseq
      %v212 = vshrl.u32 %v211, 7
      %v213 = vsub.s32 3, %v212
      %v214 = vrot.slane %v195, %v213
      %v215 = vlaneseq
      %v216 = vshrl.u32 %v215, 7
      %v217 = vsub.s32 4, %v216
      %v218 = vrot.slane %v195, %v217
      %v219 = vlaneseq
      %v220 = vshrl.u32 %v219, 7
      %v221 = vsub.s32 5, %v220
      %v222 = vrot.slane %v195, %v221
      %v223 = vlaneseq
      %v224 = vshrl.u32 %v223, 7
      %v225 = vsub.s32 6, %v224
      %v226 = vrot.slane %v195, %v225
      %v227 = vlaneseq
      %v228 = vshrl.u32 %v227, 7
      %v229 = vsub.s32 7, %v228
      %v230 = vrot.slane %v195, %v229
      %v231 = vlaneseq
      %v232 = vshrl.u32 %v231, 7
      %v233 = vsub.s32 0, %v232
      %v234 = vrot.slane %v196, %v233
      %v247 = vunpack.c.l.b16 %v172
      %v248 = vunpack.c.l.b16 %v173
      %v249 = vunpack.c.l.b16 %v174
      %v250 = vpack.c.b16 %v248, %v247
      %v251 = vpack.c.b16 %v249, %v249
      %v272 = vunpack.c.l.b16 %v175
      %v273 = vunpack.c.h.b16 %v175
      %v274 = vunpack.c.l.b16 %v176
      %v275 = vunpack.c.h.b16 %v176
      %v276 = vunpack.c.l.b16 %v177
      %v277 = vunpack.c.h.b16 %v177
      %v278 = vunpack.c.l.b16 %v178
      %v279 = vunpack.c.h.b16 %v178
      %v280 = vunpack.c.l.b16 %v179
      %v281 = vunpack.c.l.b16 %v180
      %v282 = vunpack.c.h.b16 %v180
      %v283 = vunpack.c.l.b16 %v181
      %v284 = vunpack.c.h.b16 %v181
      %v285 = vunpack.c.l.b16 %v182
      %v286 = vunpack.c.h.b16 %v182
      %v287 = vunpack.c.l.b16 %v183
      %v288 = vunpack.c.h.b16 %v183
      %v289 = vunpack.c.l.b16 %v184
      %v290 = vunpack.c.l.b16 %v185
      %v291 = vunpack.c.h.b16 %v185
      %v292 = vunpack.c.l.b16 %v186
      %v293 = vunpack.c.h.b16 %v186
      %v294 = vunpack.c.l.b16 %v187
      %v295 = vunpack.c.h.b16 %v187
      %v296 = vunpack.c.l.b16 %v188
      %v297 = vunpack.c.h.b16 %v188
      %v298 = vunpack.c.l.b16 %v189
      %v299 = vunpack.c.l.b16 %v190
      %v300 = vunpack.c.h.b16 %v190
      %v301 = vunpack.c.l.b16 %v191
      %v302 = vunpack.c.h.b16 %v191
      %v303 = vunpack.c.l.b16 %v192
      %v304 = vunpack.c.h.b16 %v192
      %v305 = vunpack.c.l.b16 %v193
      %v306 = vunpack.c.h.b16 %v193
      %v307 = vunpack.c.l.b16 %v194
      %v308 = vpack.c.b16 %v281, %v272
      %v309 = vpack.c.b16 %v282, %v273
      %v310 = vpack.c.b16 %v283, %v274
      %v311 = vpack.c.b16 %v284, %v275
      %v312 = vpack.c.b16 %v285, %v276
      %v313 = vpack.c.b16 %v286, %v277
      %v314 = vpack.c.b16 %v287, %v278
      %v315 = vpack.c.b16 %v288, %v279
      %v316 = vpack.c.b16 %v289, %v280
      %v317 = vpack.c.b16 %v299, %v290
      %v318 = vpack.c.b16 %v300, %v291
      %v319 = vpack.c.b16 %v301, %v292
      %v320 = vpack.c.b16 %v302, %v293
      %v321 = vpack.c.b16 %v303, %v294
      %v322 = vpack.c.b16 %v304, %v295
      %v323 = vpack.c.b16 %v305, %v296
      %v324 = vpack.c.b16 %v306, %v297
      %v325 = vpack.c.b16 %v307, %v298
      %vm344 = vcmask 261120
      %v346 = vsel %vm344, %v250, 0
      %v349 = vsel %vm344, %v251, 0
      %351 = vmatprep.subr.bf16.mxu0 %v309
      %352 = vmatpush1.bf16.msra.mxu0 %v308
      %353 = vmatprep.subr.bf16.mxu0 %v318
      %354 = vmatpush1.bf16.msra.mxu0 %v317
      %355 = vmatprep.subr.bf16.mxu0 0
      %356 = vmatpush1.bf16.msra.mxu0 0
      %357 = vmatprep.subr.bf16.mxu0 0
      %358 = vmatpush1.bf16.msra.mxu0 0
      %359 = vmatprep.subr.bf16.mxu0 0
      %360 = vmatpush1.bf16.msra.mxu0 0
      %361 = vmatprep.subr.bf16.mxu0 0
      %362 = vmatpush1.bf16.msra.mxu0 0
      %363 = vmatprep.subr.bf16.mxu0 0
      %364 = vmatpush1.bf16.msra.mxu0 0
      %365 = vmatprep.subr.bf16.mxu0 0
      %366 = vmatpush1.bf16.msra.mxu0 0
      %367 = vmatprep.subr.bf16.mxu0 0
      %368 = vmatpush1.bf16.msra.mxu0 0
      %369 = vmatprep.subr.bf16.mxu0 0
      %370 = vmatpush1.bf16.msra.mxu0 0
      %371 = vmatprep.subr.bf16.mxu0 0
      %372 = vmatpush1.bf16.msra.mxu0 0
      %373 = vmatprep.subr.bf16.mxu0 0
      %374 = vmatpush1.bf16.msra.mxu0 0
      %375 = vmatprep.subr.bf16.mxu0 0
      %376 = vmatpush1.bf16.msra.mxu0 0
      %377 = vmatprep.subr.bf16.mxu0 0
      %378 = vmatpush1.bf16.msra.mxu0 0
      %379 = vmatprep.subr.bf16.mxu0 0
      %380 = vmatpush1.bf16.msra.mxu0 0
      %381 = vmatprep.subr.bf16.mxu0 0
      %382 = vmatpush1.bf16.msra.mxu0 0
      %383 = vmatprep.mubr.bf16.mxu0 0
      %384 = vmatmul.mubr.bf16.gmra.mrb[0].mxu0 %v346
      %v385 = vpop.f32.mrb[0].mxu0
      %v386 = vadd.f32 %v202, %v385
      %v387 = vpop.f32.mrb[0].mxu0
      %v388 = vadd.f32 %v206, %v387
      %v389 = vpop.f32.mrb[0].mxu0
      %v390 = vadd.f32 %v202, %v389
      %v391 = vpop.f32.mrb[0].mxu0
      %v392 = vadd.f32 %v206, %v391
      %393 = vmatprep.mubr.bf16.mxu0 0
      %394 = vmatmul.mubr.bf16.gmra.mrb[0].mxu0 %v349
      %v395 = vpop.f32.mrb[0].mxu0
      %v396 = vadd.f32 %v202, %v395
      %v397 = vpop.f32.mrb[0].mxu0
      %v398 = vadd.f32 %v206, %v397
      %v399 = vpop.f32.mrb[0].mxu0
      %v400 = vpop.f32.mrb[0].mxu0
      %401 = vdwg.mxu0
      %402 = vmatprep.subr.bf16.mxu0 %v311
      %403 = vmatpush1.bf16.msra.mxu0 %v310
      %404 = vmatprep.subr.bf16.mxu0 %v320
      %405 = vmatpush1.bf16.msra.mxu0 %v319
      %406 = vmatprep.subr.bf16.mxu0 0
      %407 = vmatpush1.bf16.msra.mxu0 0
      %408 = vmatprep.subr.bf16.mxu0 0
      %409 = vmatpush1.bf16.msra.mxu0 0
      %410 = vmatprep.subr.bf16.mxu0 0
      %411 = vmatpush1.bf16.msra.mxu0 0
      %412 = vmatprep.subr.bf16.mxu0 0
      %413 = vmatpush1.bf16.msra.mxu0 0
      %414 = vmatprep.subr.bf16.mxu0 0
      %415 = vmatpush1.bf16.msra.mxu0 0
      %416 = vmatprep.subr.bf16.mxu0 0
      %417 = vmatpush1.bf16.msra.mxu0 0
      %418 = vmatprep.subr.bf16.mxu0 0
      %419 = vmatpush1.bf16.msra.mxu0 0
      %420 = vmatprep.subr.bf16.mxu0 0
      %421 = vmatpush1.bf16.msra.mxu0 0
      %422 = vmatprep.subr.bf16.mxu0 0
      %423 = vmatpush1.bf16.msra.mxu0 0
      %424 = vmatprep.subr.bf16.mxu0 0
      %425 = vmatpush1.bf16.msra.mxu0 0
      %426 = vmatprep.subr.bf16.mxu0 0
      %427 = vmatpush1.bf16.msra.mxu0 0
      %428 = vmatprep.subr.bf16.mxu0 0
      %429 = vmatpush1.bf16.msra.mxu0 0
      %430 = vmatprep.subr.bf16.mxu0 0
      %431 = vmatpush1.bf16.msra.mxu0 0
      %432 = vmatprep.subr.bf16.mxu0 0
      %433 = vmatpush1.bf16.msra.mxu0 0
      %434 = vmatprep.mubr.bf16.mxu0 0
      %435 = vmatmul.mubr.bf16.gmra.mrb[0].mxu0 %v346
      %v436 = vpop.f32.mrb[0].mxu0
      %v437 = vadd.f32 %v210, %v436
      %v438 = vpop.f32.mrb[0].mxu0
      %v439 = vadd.f32 %v214, %v438
      %v440 = vpop.f32.mrb[0].mxu0
      %v441 = vadd.f32 %v210, %v440
      %v442 = vpop.f32.mrb[0].mxu0
      %v443 = vadd.f32 %v214, %v442
      %444 = vmatprep.mubr.bf16.mxu0 0
      %445 = vmatmul.mubr.bf16.gmra.mrb[0].mxu0 %v349
      %v446 = vpop.f32.mrb[0].mxu0
      %v447 = vadd.f32 %v210, %v446
      %v448 = vpop.f32.mrb[0].mxu0
      %v449 = vadd.f32 %v214, %v448
      %v450 = vpop.f32.mrb[0].mxu0
      %v451 = vpop.f32.mrb[0].mxu0
      %452 = vdwg.mxu0
      %453 = vmatprep.subr.bf16.mxu0 %v313
      %454 = vmatpush1.bf16.msra.mxu0 %v312
      %455 = vmatprep.subr.bf16.mxu0 %v322
      %456 = vmatpush1.bf16.msra.mxu0 %v321
      %457 = vmatprep.subr.bf16.mxu0 0
      %458 = vmatpush1.bf16.msra.mxu0 0
      %459 = vmatprep.subr.bf16.mxu0 0
      %460 = vmatpush1.bf16.msra.mxu0 0
      %461 = vmatprep.subr.bf16.mxu0 0
      %462 = vmatpush1.bf16.msra.mxu0 0
      %463 = vmatprep.subr.bf16.mxu0 0
      %464 = vmatpush1.bf16.msra.mxu0 0
      %465 = vmatprep.subr.bf16.mxu0 0
      %466 = vmatpush1.bf16.msra.mxu0 0
      %467 = vmatprep.subr.bf16.mxu0 0
      %468 = vmatpush1.bf16.msra.mxu0 0
      %469 = vmatprep.subr.bf16.mxu0 0
      %470 = vmatpush1.bf16.msra.mxu0 0
      %471 = vmatprep.subr.bf16.mxu0 0
      %472 = vmatpush1.bf16.msra.mxu0 0
      %473 = vmatprep.subr.bf16.mxu0 0
      %474 = vmatpush1.bf16.msra.mxu0 0
      %475 = vmatprep.subr.bf16.mxu0 0
      %476 = vmatpush1.bf16.msra.mxu0 0
      %477 = vmatprep.subr.bf16.mxu0 0
      %478 = vmatpush1.bf16.msra.mxu0 0
      %479 = vmatprep.subr.bf16.mxu0 0
      %480 = vmatpush1.bf16.msra.mxu0 0
      %481 = vmatprep.subr.bf16.mxu0 0
      %482 = vmatpush1.bf16.msra.mxu0 0
      %483 = vmatprep.subr.bf16.mxu0 0
      %484 = vmatpush1.bf16.msra.mxu0 0
      %485 = vmatprep.mubr.bf16.mxu0 0
      %486 = vmatmul.mubr.bf16.gmra.mrb[0].mxu0 %v346
      %v487 = vpop.f32.mrb[0].mxu0
      %v488 = vadd.f32 %v218, %v487
      %v489 = vpop.f32.mrb[0].mxu0
      %v490 = vadd.f32 %v222, %v489
      %v491 = vpop.f32.mrb[0].mxu0
      %v492 = vadd.f32 %v218, %v491
      %v493 = vpop.f32.mrb[0].mxu0
      %v494 = vadd.f32 %v222, %v493
      %495 = vmatprep.mubr.bf16.mxu0 0
      %496 = vmatmul.mubr.bf16.gmra.mrb[0].mxu0 %v349
      %v497 = vpop.f32.mrb[0].mxu0
      %v498 = vadd.f32 %v218, %v497
      %v499 = vpop.f32.mrb[0].mxu0
      %v500 = vadd.f32 %v222, %v499
      %v501 = vpop.f32.mrb[0].mxu0
      %v502 = vpop.f32.mrb[0].mxu0
      %503 = vdwg.mxu0
      %504 = vmatprep.subr.bf16.mxu0 %v315
      %505 = vmatpush1.bf16.msra.mxu0 %v314
      %506 = vmatprep.subr.bf16.mxu0 %v324
      %507 = vmatpush1.bf16.msra.mxu0 %v323
      %508 = vmatprep.subr.bf16.mxu0 0
      %509 = vmatpush1.bf16.msra.mxu0 0
      %510 = vmatprep.subr.bf16.mxu0 0
      %511 = vmatpush1.bf16.msra.mxu0 0
      %512 = vmatprep.subr.bf16.mxu0 0
      %513 = vmatpush1.bf16.msra.mxu0 0
      %514 = vmatprep.subr.bf16.mxu0 0
      %515 = vmatpush1.bf16.msra.mxu0 0
      %516 = vmatprep.subr.bf16.mxu0 0
      %517 = vmatpush1.bf16.msra.mxu0 0
      %518 = vmatprep.subr.bf16.mxu0 0
      %519 = vmatpush1.bf16.msra.mxu0 0
      %520 = vmatprep.subr.bf16.mxu0 0
      %521 = vmatpush1.bf16.msra.mxu0 0
      %522 = vmatprep.subr.bf16.mxu0 0
      %523 = vmatpush1.bf16.msra.mxu0 0
      %524 = vmatprep.subr.bf16.mxu0 0
      %525 = vmatpush1.bf16.msra.mxu0 0
      %526 = vmatprep.subr.bf16.mxu0 0
      %527 = vmatpush1.bf16.msra.mxu0 0
      %528 = vmatprep.subr.bf16.mxu0 0
      %529 = vmatpush1.bf16.msra.mxu0 0
      %530 = vmatprep.subr.bf16.mxu0 0
      %531 = vmatpush1.bf16.msra.mxu0 0
      %532 = vmatprep.subr.bf16.mxu0 0
      %533 = vmatpush1.bf16.msra.mxu0 0
      %534 = vmatprep.subr.bf16.mxu0 0
      %535 = vmatpush1.bf16.msra.mxu0 0
      %536 = vmatprep.mubr.bf16.mxu0 0
      %537 = vmatmul.mubr.bf16.gmra.mrb[0].mxu0 %v346
      %v538 = vpop.f32.mrb[0].mxu0
      %v539 = vadd.f32 %v226, %v538
      %v540 = vpop.f32.mrb[0].mxu0
      %v541 = vadd.f32 %v230, %v540
      %v542 = vpop.f32.mrb[0].mxu0
      %v543 = vadd.f32 %v226, %v542
      %v544 = vpop.f32.mrb[0].mxu0
      %v545 = vadd.f32 %v230, %v544
      %546 = vmatprep.mubr.bf16.mxu0 0
      %547 = vmatmul.mubr.bf16.gmra.mrb[0].mxu0 %v349
      %v548 = vpop.f32.mrb[0].mxu0
      %v549 = vadd.f32 %v226, %v548
      %v550 = vpop.f32.mrb[0].mxu0
      %v551 = vadd.f32 %v230, %v550
      %v552 = vpop.f32.mrb[0].mxu0
      %v553 = vpop.f32.mrb[0].mxu0
      %554 = vdwg.mxu0
      %555 = vmatprep.subr.bf16.mxu0 0
      %556 = vmatpush1.bf16.msra.mxu0 %v316
      %557 = vmatprep.subr.bf16.mxu0 0
      %558 = vmatpush1.bf16.msra.mxu0 %v325
      %559 = vmatprep.subr.bf16.mxu0 0
      %560 = vmatpush1.bf16.msra.mxu0 0
      %561 = vmatprep.subr.bf16.mxu0 0
      %562 = vmatpush1.bf16.msra.mxu0 0
      %563 = vmatprep.subr.bf16.mxu0 0
      %564 = vmatpush1.bf16.msra.mxu0 0
      %565 = vmatprep.subr.bf16.mxu0 0
      %566 = vmatpush1.bf16.msra.mxu0 0
      %567 = vmatprep.subr.bf16.mxu0 0
      %568 = vmatpush1.bf16.msra.mxu0 0
      %569 = vmatprep.subr.bf16.mxu0 0
      %570 = vmatpush1.bf16.msra.mxu0 0
      %571 = vmatprep.subr.bf16.mxu0 0
      %572 = vmatpush1.bf16.msra.mxu0 0
      %573 = vmatprep.subr.bf16.mxu0 0
      %574 = vmatpush1.bf16.msra.mxu0 0
      %575 = vmatprep.subr.bf16.mxu0 0
      %576 = vmatpush1.bf16.msra.mxu0 0
      %577 = vmatprep.subr.bf16.mxu0 0
      %578 = vmatpush1.bf16.msra.mxu0 0
      %579 = vmatprep.subr.bf16.mxu0 0
      %580 = vmatpush1.bf16.msra.mxu0 0
      %581 = vmatprep.subr.bf16.mxu0 0
      %582 = vmatpush1.bf16.msra.mxu0 0
      %583 = vmatprep.subr.bf16.mxu0 0
      %584 = vmatpush1.bf16.msra.mxu0 0
      %585 = vmatprep.subr.bf16.mxu0 0
      %586 = vmatpush1.bf16.msra.mxu0 0
      %587 = vmatprep.mubr.bf16.mxu0 0
      %588 = vmatmul.mubr.bf16.gmra.mrb[0].mxu0 %v346
      %v589 = vpop.f32.mrb[0].mxu0
      %v590 = vadd.f32 %v234, %v589
      %v591 = vpop.f32.mrb[0].mxu0
      %v592 = vpop.f32.mrb[0].mxu0
      %v593 = vadd.f32 %v234, %v592
      %v594 = vpop.f32.mrb[0].mxu0
      %595 = vmatprep.mubr.bf16.mxu0 0
      %596 = vmatmul.mubr.bf16.gmra.mrb[0].mxu0 %v349
      %v597 = vpop.f32.mrb[0].mxu0
      %v598 = vadd.f32 %v234, %v597
      %v599 = vpop.f32.mrb[0].mxu0
      %v600 = vpop.f32.mrb[0].mxu0
      %v601 = vpop.f32.mrb[0].mxu0
      %602 = vdwg.mxu0
      %v612 = vrot.slane %v386, 1
      %v613 = vrot.slane %v388, 1
      %v614 = vrot.slane %v437, 1
      %v615 = vrot.slane %v439, 1
      %v616 = vrot.slane %v488, 1
      %v617 = vrot.slane %v490, 1
      %v618 = vrot.slane %v539, 1
      %v619 = vrot.slane %v541, 1
      %v620 = vrot.slane %v590, 1
      %v630 = vmax.f32 %v386, %v612
      %v631 = vmax.f32 %v388, %v613
      %v632 = vmax.f32 %v437, %v614
      %v633 = vmax.f32 %v439, %v615
      %v634 = vmax.f32 %v488, %v616
      %v635 = vmax.f32 %v490, %v617
      %v636 = vmax.f32 %v539, %v618
      %v637 = vmax.f32 %v541, %v619
      %v638 = vmax.f32 %v590, %v620
      %v639 = vrot.slane %v386, 2
      %v640 = vrot.slane %v388, 2
      %v641 = vrot.slane %v437, 2
      %v642 = vrot.slane %v439, 2
      %v643 = vrot.slane %v488, 2
      %v644 = vrot.slane %v490, 2
      %v645 = vrot.slane %v539, 2
      %v646 = vrot.slane %v541, 2
      %v647 = vrot.slane %v590, 2
      %v657 = vmax.f32 %v630, %v639
      %v658 = vmax.f32 %v631, %v640
      %v659 = vmax.f32 %v632, %v641
      %v660 = vmax.f32 %v633, %v642
      %v661 = vmax.f32 %v634, %v643
      %v662 = vmax.f32 %v635, %v644
      %v663 = vmax.f32 %v636, %v645
      %v664 = vmax.f32 %v637, %v646
      %v665 = vmax.f32 %v638, %v647
      %v675 = vrot.slane %v390, 1
      %v676 = vrot.slane %v392, 1
      %v677 = vrot.slane %v441, 1
      %v678 = vrot.slane %v443, 1
      %v679 = vrot.slane %v492, 1
      %v680 = vrot.slane %v494, 1
      %v681 = vrot.slane %v543, 1
      %v682 = vrot.slane %v545, 1
      %v683 = vrot.slane %v593, 1
      %v693 = vmax.f32 %v386, %v675
      %v694 = vmax.f32 %v388, %v676
      %v695 = vmax.f32 %v437, %v677
      %v696 = vmax.f32 %v439, %v678
      %v697 = vmax.f32 %v488, %v679
      %v698 = vmax.f32 %v490, %v680
      %v699 = vmax.f32 %v539, %v681
      %v700 = vmax.f32 %v541, %v682
      %v701 = vmax.f32 %v590, %v683
      %v702 = vrot.slane %v390, 2
      %v703 = vrot.slane %v392, 2
      %v704 = vrot.slane %v441, 2
      %v705 = vrot.slane %v443, 2
      %v706 = vrot.slane %v492, 2
      %v707 = vrot.slane %v494, 2
      %v708 = vrot.slane %v543, 2
      %v709 = vrot.slane %v545, 2
      %v710 = vrot.slane %v593, 2
      %v720 = vmax.f32 %v693, %v702
      %v721 = vmax.f32 %v694, %v703
      %v722 = vmax.f32 %v695, %v704
      %v723 = vmax.f32 %v696, %v705
      %v724 = vmax.f32 %v697, %v706
      %v725 = vmax.f32 %v698, %v707
      %v726 = vmax.f32 %v699, %v708
      %v727 = vmax.f32 %v700, %v709
      %v728 = vmax.f32 %v701, %v710
      %v729 = vmax.f32 %v390, %v675
      %v730 = vmax.f32 %v392, %v676
      %v731 = vmax.f32 %v441, %v677
      %v732 = vmax.f32 %v443, %v678
      %v733 = vmax.f32 %v492, %v679
      %v734 = vmax.f32 %v494, %v680
      %v735 = vmax.f32 %v543, %v681
      %v736 = vmax.f32 %v545, %v682
      %v737 = vmax.f32 %v593, %v683
      %v738 = vmax.f32 %v729, %v702
      %v739 = vmax.f32 %v730, %v703
      %v740 = vmax.f32 %v731, %v704
      %v741 = vmax.f32 %v732, %v705
      %v742 = vmax.f32 %v733, %v706
      %v743 = vmax.f32 %v734, %v707
      %v744 = vmax.f32 %v735, %v708
      %v745 = vmax.f32 %v736, %v709
      %v746 = vmax.f32 %v737, %v710
      %v756 = vrot.slane %v396, 1
      %v757 = vrot.slane %v398, 1
      %v758 = vrot.slane %v447, 1
      %v759 = vrot.slane %v449, 1
      %v760 = vrot.slane %v498, 1
      %v761 = vrot.slane %v500, 1
      %v762 = vrot.slane %v549, 1
      %v763 = vrot.slane %v551, 1
      %v764 = vrot.slane %v598, 1
      %v774 = vmax.f32 %v390, %v756
      %v775 = vmax.f32 %v392, %v757
      %v776 = vmax.f32 %v441, %v758
      %v777 = vmax.f32 %v443, %v759
      %v778 = vmax.f32 %v492, %v760
      %v779 = vmax.f32 %v494, %v761
      %v780 = vmax.f32 %v543, %v762
      %v781 = vmax.f32 %v545, %v763
      %v782 = vmax.f32 %v593, %v764
      %v792 = vrot.slane %v657, 1
      %v793 = vrot.slane %v658, 1
      %v794 = vrot.slane %v659, 1
      %v795 = vrot.slane %v660, 1
      %v796 = vrot.slane %v661, 1
      %v797 = vrot.slane %v662, 1
      %v798 = vrot.slane %v663, 1
      %v799 = vrot.slane %v664, 1
      %v800 = vrot.slane %v665, 1
      %v810 = vrot.slane %v657, 2
      %v811 = vrot.slane %v658, 2
      %v812 = vrot.slane %v659, 2
      %v813 = vrot.slane %v660, 2
      %v814 = vrot.slane %v661, 2
      %v815 = vrot.slane %v662, 2
      %v816 = vrot.slane %v663, 2
      %v817 = vrot.slane %v664, 2
      %v818 = vrot.slane %v665, 2
      %v837 = vrot.slane %v720, 3
      %v838 = vrot.slane %v721, 3
      %v839 = vrot.slane %v722, 3
      %v840 = vrot.slane %v723, 3
      %v841 = vrot.slane %v724, 3
      %v842 = vrot.slane %v725, 3
      %v843 = vrot.slane %v726, 3
      %v844 = vrot.slane %v727, 3
      %v845 = vrot.slane %v728, 3
      %v864 = vrot.slane %v738, 4
      %v865 = vrot.slane %v739, 4
      %v866 = vrot.slane %v740, 4
      %v867 = vrot.slane %v741, 4
      %v868 = vrot.slane %v742, 4
      %v869 = vrot.slane %v743, 4
      %v870 = vrot.slane %v744, 4
      %v871 = vrot.slane %v745, 4
      %v872 = vrot.slane %v746, 4
      %v882 = vrot.slane %v738, 5
      %v883 = vrot.slane %v739, 5
      %v884 = vrot.slane %v740, 5
      %v885 = vrot.slane %v741, 5
      %v886 = vrot.slane %v742, 5
      %v887 = vrot.slane %v743, 5
      %v888 = vrot.slane %v744, 5
      %v889 = vrot.slane %v745, 5
      %v890 = vrot.slane %v746, 5
      %v900 = vrot.slane %v738, 6
      %v901 = vrot.slane %v739, 6
      %v902 = vrot.slane %v740, 6
      %v903 = vrot.slane %v741, 6
      %v904 = vrot.slane %v742, 6
      %v905 = vrot.slane %v743, 6
      %v906 = vrot.slane %v744, 6
      %v907 = vrot.slane %v745, 6
      %v908 = vrot.slane %v746, 6
      %v927 = vrot.slane %v774, 7
      %v928 = vrot.slane %v775, 7
      %v929 = vrot.slane %v776, 7
      %v930 = vrot.slane %v777, 7
      %v931 = vrot.slane %v778, 7
      %v932 = vrot.slane %v779, 7
      %v933 = vrot.slane %v780, 7
      %v934 = vrot.slane %v781, 7
      %v935 = vrot.slane %v782, 7
      %vm944 = vcmask 1040384
      %v945 = vsel %vm944, %v630, %v657
      %v946 = vsel %vm944, %v631, %v658
      %v947 = vsel %vm944, %v632, %v659
      %v948 = vsel %vm944, %v633, %v660
      %v949 = vsel %vm944, %v634, %v661
      %v950 = vsel %vm944, %v635, %v662
      %v951 = vsel %vm944, %v636, %v663
      %v952 = vsel %vm944, %v637, %v664
      %v953 = vsel %vm944, %v638, %v665
      %vm954 = vcmask 1041408
      %v955 = vsel %vm954, %v945, %v792
      %v956 = vsel %vm954, %v946, %v793
      %v957 = vsel %vm954, %v947, %v794
      %v958 = vsel %vm954, %v948, %v795
      %v959 = vsel %vm954, %v949, %v796
      %v960 = vsel %vm954, %v950, %v797
      %v961 = vsel %vm954, %v951, %v798
      %v962 = vsel %vm954, %v952, %v799
      %v963 = vsel %vm954, %v953, %v800
      %vm964 = vcmask 1042432
      %v965 = vsel %vm964, %v955, %v810
      %v966 = vsel %vm964, %v956, %v811
      %v967 = vsel %vm964, %v957, %v812
      %v968 = vsel %vm964, %v958, %v813
      %v969 = vsel %vm964, %v959, %v814
      %v970 = vsel %vm964, %v960, %v815
      %v971 = vsel %vm964, %v961, %v816
      %v972 = vsel %vm964, %v962, %v817
      %v973 = vsel %vm964, %v963, %v818
      %vm974 = vcmask 1043456
      %v975 = vsel %vm974, %v965, %v837
      %v976 = vsel %vm974, %v966, %v838
      %v977 = vsel %vm974, %v967, %v839
      %v978 = vsel %vm974, %v968, %v840
      %v979 = vsel %vm974, %v969, %v841
      %v980 = vsel %vm974, %v970, %v842
      %v981 = vsel %vm974, %v971, %v843
      %v982 = vsel %vm974, %v972, %v844
      %v983 = vsel %vm974, %v973, %v845
      %vm984 = vcmask 1044480
      %v985 = vsel %vm984, %v975, %v864
      %v986 = vsel %vm984, %v976, %v865
      %v987 = vsel %vm984, %v977, %v866
      %v988 = vsel %vm984, %v978, %v867
      %v989 = vsel %vm984, %v979, %v868
      %v990 = vsel %vm984, %v980, %v869
      %v991 = vsel %vm984, %v981, %v870
      %v992 = vsel %vm984, %v982, %v871
      %v993 = vsel %vm984, %v983, %v872
      %vm994 = vcmask 1045504
      %v995 = vsel %vm994, %v985, %v882
      %v996 = vsel %vm994, %v986, %v883
      %v997 = vsel %vm994, %v987, %v884
      %v998 = vsel %vm994, %v988, %v885
      %v999 = vsel %vm994, %v989, %v886
      %v1000 = vsel %vm994, %v990, %v887
      %v1001 = vsel %vm994, %v991, %v888
      %v1002 = vsel %vm994, %v992, %v889
      %v1003 = vsel %vm994, %v993, %v890
      %vm1004 = vcmask 1046528
      %v1005 = vsel %vm1004, %v995, %v900
      %v1006 = vsel %vm1004, %v996, %v901
      %v1007 = vsel %vm1004, %v997, %v902
      %v1008 = vsel %vm1004, %v998, %v903
      %v1009 = vsel %vm1004, %v999, %v904
      %v1010 = vsel %vm1004, %v1000, %v905
      %v1011 = vsel %vm1004, %v1001, %v906
      %v1012 = vsel %vm1004, %v1002, %v907
      %v1013 = vsel %vm1004, %v1003, %v908
      %1015 = vrot.lane.b32.xlu0 %v1005, 64
      %v1016 = vpop.permute.xlu0 %1015
      %1017 = vrot.lane.b32.xlu0 %v927, 64
      %v1018 = vpop.permute.xlu0 %1017
      %v1021 = vmax.f32 %v1005, %v1016
      %v1022 = vmax.f32 %v927, %v1018
      %1024 = vrot.lane.b32.xlu0 %v1006, 64
      %v1025 = vpop.permute.xlu0 %1024
      %1026 = vrot.lane.b32.xlu0 %v928, 64
      %v1027 = vpop.permute.xlu0 %1026
      %v1030 = vmax.f32 %v1005, %v1025
      %v1031 = vmax.f32 %v927, %v1027
      %v1032 = vmax.f32 %v1030, %v1006
      %v1033 = vmax.f32 %v1031, %v928
      %1035 = vrot.lane.b32.xlu0 %v1007, 64
      %v1036 = vpop.permute.xlu0 %1035
      %1037 = vrot.lane.b32.xlu0 %v929, 64
      %v1038 = vpop.permute.xlu0 %1037
      %v1041 = vmax.f32 %v1006, %v1036
      %v1042 = vmax.f32 %v928, %v1038
      %v1043 = vmax.f32 %v1041, %v1007
      %v1044 = vmax.f32 %v1042, %v929
      %1046 = vrot.lane.b32.xlu0 %v1008, 64
      %v1047 = vpop.permute.xlu0 %1046
      %1048 = vrot.lane.b32.xlu0 %v930, 64
      %v1049 = vpop.permute.xlu0 %1048
      %v1052 = vmax.f32 %v1007, %v1047
      %v1053 = vmax.f32 %v929, %v1049
      %v1054 = vmax.f32 %v1052, %v1008
      %v1055 = vmax.f32 %v1053, %v930
      %1057 = vrot.lane.b32.xlu0 %v1009, 64
      %v1058 = vpop.permute.xlu0 %1057
      %1059 = vrot.lane.b32.xlu0 %v931, 64
      %v1060 = vpop.permute.xlu0 %1059
      %v1063 = vmax.f32 %v1008, %v1058
      %v1064 = vmax.f32 %v930, %v1060
      %v1065 = vmax.f32 %v1063, %v1009
      %v1066 = vmax.f32 %v1064, %v931
      %1068 = vrot.lane.b32.xlu0 %v1010, 64
      %v1069 = vpop.permute.xlu0 %1068
      %1070 = vrot.lane.b32.xlu0 %v932, 64
      %v1071 = vpop.permute.xlu0 %1070
      %v1074 = vmax.f32 %v1009, %v1069
      %v1075 = vmax.f32 %v931, %v1071
      %v1076 = vmax.f32 %v1074, %v1010
      %v1077 = vmax.f32 %v1075, %v932
      %1079 = vrot.lane.b32.xlu0 %v1011, 64
      %v1080 = vpop.permute.xlu0 %1079
      %1081 = vrot.lane.b32.xlu0 %v933, 64
      %v1082 = vpop.permute.xlu0 %1081
      %v1085 = vmax.f32 %v1010, %v1080
      %v1086 = vmax.f32 %v932, %v1082
      %v1087 = vmax.f32 %v1085, %v1011
      %v1088 = vmax.f32 %v1086, %v933
      %1090 = vrot.lane.b32.xlu0 %v1012, 64
      %v1091 = vpop.permute.xlu0 %1090
      %1092 = vrot.lane.b32.xlu0 %v934, 64
      %v1093 = vpop.permute.xlu0 %1092
      %v1096 = vmax.f32 %v1011, %v1091
      %v1097 = vmax.f32 %v933, %v1093
      %v1098 = vmax.f32 %v1096, %v1012
      %v1099 = vmax.f32 %v1097, %v934
      %1101 = vrot.lane.b32.xlu0 %v1013, 64
      %v1102 = vpop.permute.xlu0 %1101
      %1103 = vrot.lane.b32.xlu0 %v935, 64
      %v1104 = vpop.permute.xlu0 %1103
      %v1107 = vmax.f32 %v1012, %v1102
      %v1108 = vmax.f32 %v934, %v1104
      %1111 = vrot.lane.b32.xlu0 %v1043, 64
      %v1112 = vpop.permute.xlu0 %1111
      %1113 = vrot.lane.b32.xlu0 %v1044, 64
      %v1114 = vpop.permute.xlu0 %1113
      %1119 = vrot.lane.b32.xlu0 %v1065, 64
      %v1120 = vpop.permute.xlu0 %1119
      %1121 = vrot.lane.b32.xlu0 %v1066, 64
      %v1122 = vpop.permute.xlu0 %1121
      %1127 = vrot.lane.b32.xlu0 %v1087, 64
      %v1128 = vpop.permute.xlu0 %1127
      %1129 = vrot.lane.b32.xlu0 %v1088, 64
      %v1130 = vpop.permute.xlu0 %1129
      %1135 = vrot.lane.b32.xlu0 %v1107, 64
      %v1136 = vpop.permute.xlu0 %1135
      %1137 = vrot.lane.b32.xlu0 %v1108, 64
      %v1138 = vpop.permute.xlu0 %1137
      %vm1141 = vcmask 523264
      %v1142 = vsel %vm1141, %v1021, %v1032
      %v1143 = vsel %vm1141, %v1022, %v1033
      %v1144 = vsel %vm1141, %v1112, %v1054
      %v1145 = vsel %vm1141, %v1114, %v1055
      %v1146 = vsel %vm1141, %v1120, %v1076
      %v1147 = vsel %vm1141, %v1122, %v1077
      %v1148 = vsel %vm1141, %v1128, %v1098
      %v1149 = vsel %vm1141, %v1130, %v1099
      %v1150 = vpack.c.bf16 %v1143, %v1142
      %v1151 = vpack.c.bf16 %v1145, %v1144
      %v1152 = vpack.c.bf16 %v1147, %v1146
      %v1153 = vpack.c.bf16 %v1149, %v1148
      %v1154 = vpack.c.bf16 %v1138, %v1136
      %v1160 = vunpack.c.l.b16 %v1150
      %v1161 = vunpack.c.l.b16 %v1151
      %v1162 = vunpack.c.l.b16 %v1152
      %v1163 = vunpack.c.l.b16 %v1153
      %v1164 = vunpack.c.l.b16 %v1154
      %v1165 = vunpack.c.h.b16 %v1150
      %v1166 = vunpack.c.h.b16 %v1151
      %v1167 = vunpack.c.h.b16 %v1152
      %v1168 = vunpack.c.h.b16 %v1153
      %v1169 = vunpack.c.h.b16 %v1154
      %v1170 = vpack.c.b16 %v1161, %v1160
      %v1171 = vpack.c.b16 %v1163, %v1162
      %v1172 = vpack.c.b16 %v1164, %v1164
      %v1173 = vpack.c.b16 %v1166, %v1165
      %v1174 = vpack.c.b16 %v1168, %v1167
      %v1175 = vpack.c.b16 %v1169, %v1169
      %1182 = vst [vmem:[%s170] sm:$0xff] %v1170
      %1183 = vst [vmem:[%s170 + $0x8] sm:$0xff] %v1171
      %vm1184 = vcmask 519168
      %1185 = vst.msk [vmem:[%s170 + $0x10] sm:$0xf] %vm1184, %v1172
      %vm1186 = vcmask 1040384
      %vm1187 = vsmask.f32 256
      %vm1188 = vmand %vm1186, %vm1187
      %vm1189 = vcmask 1044484
      %vm1190 = vsmask.f32 4352
      %vm1191 = vmand %vm1189, %vm1190
      %vm1192 = vmor %vm1191, %vm1188
      %v1193 = vld [vmem:[%s170 + $0x14] sm:$0x11]
      %v1194 = vsel %vm1192, %v1173, %v1193
      %1195 = vst [vmem:[%s170 + $0x14] sm:$0x11] %v1194
      %v1196 = vld [vmem:[%s170 + $0x1c] sm:$0x11]
      %v1197 = vsel %vm1192, %v1174, %v1196
      %1198 = vst [vmem:[%s170 + $0x1c] sm:$0x11] %v1197
      %vm1199 = vcmask 516096
      %vm1200 = vmand %vm1199, %vm1187
      %v1201 = vld [vmem:[%s170 + $0x24] sm:$0x1]
      %v1202 = vsel %vm1200, %v1175, %v1201
      %1203 = vst [vmem:[%s170 + $0x24] sm:$0x1] %v1202
      %p1204 = scmp.lt.s32.totalorder %s14, 1
      %s1205 = scalar_select %p1204, %s14, 1
      %s1206 = smul.addr %s1205, 10
      %s1207 = smul.addr %s1206, 4
      %s1208 = scalar_lea.vmem %s3, %s1207
      // Predicated region
      $region33: #{resnet_backbone_2d_forward.2} parent=31 // pred_check
        %p1209 = pneg %p100
      $region34: #{resnet_backbone_2d_forward.2} parent=31 // pred_check_branch
        %1211 = sbr.rel (%p1209) target = $region36
      $region35: #{resnet_backbone_2d_forward.2} parent=31 // pred_region
        _
      $region36: #{resnet_backbone_2d_forward.2} parent=31 // pred_fallthru
        _
    $region32: #{resnet_backbone_2d_forward.2} parent=5 // pred_fallthru
      _
    %p1212 = scmp.le.s32.totalorder 2, %s9
    // Predicated region
    $region37: #{resnet_backbone_2d_forward.2} parent=5 // pred_check
      %p1213 = pneg %p1212
    $region38: #{resnet_backbone_2d_forward.2} parent=5 // pred_check_branch
      %1215 = sbr.rel (%p1213) target = $region40
    $region39: #{resnet_backbone_2d_forward.2} parent=5 // pred_region
      %s1216 = ssub.s32 %s9, 2
      // Predicated region
      $region41: #{resnet_backbone_2d_forward.2} parent=39 // pred_check
        %p1217 = pneg %p106
      $region42: #{resnet_backbone_2d_forward.2} parent=39 // pred_check_branch
        %1219 = sbr.rel (%p1217) target = $region44
      $region43: #{resnet_backbone_2d_forward.2} parent=39 // pred_region
        %p1220 = scmp.lt.s32.totalorder %s15, 1
        %s1221 = scalar_select %p1220, %s15, 1
        %s1222 = smul.addr %s1221, 10
        %s1223 = smul.addr %s1222, 4
        %s1224 = scalar_lea.vmem %s3, %s1223
      $region44: #{resnet_backbone_2d_forward.2} parent=39 // pred_fallthru
        _
    $region40: #{resnet_backbone_2d_forward.2} parent=5 // pred_fallthru
      _
  $region6: #{resnet_backbone_2d_forward.2} parent=0 // loop_footer
    %s13 = sadd.s32 1, %s9
  $region7: #{resnet_backbone_2d_forward.2} parent=0 // loop_footer_branch
    %8 = sbr.rel target = $region3
  $region8: #{resnet_backbone_2d_forward.2} parent=0 // loop_exit
    _

// kernel: resnet_backbone_2d_forward.3
$region0: #{resnet_backbone_2d_forward.3}
  #allocation0 [shape = 'u32[]', space=smem, size = 0x4, offset = 0x4, fixed_abs, tag = 'smem constant byte address 0x4 - core index']
  #allocation1 [shape = 'u32[144,128]{1,0:T(1,128)}', space=vmem, size = 0x12000, scoped, tag = 'internal scratch']
  #allocation2 [shape = 'f32[128,64]{1,0:T(8,128)}', space=vmem, size = 0x10000, scoped, tag = 'scratch operand']
  #allocation3 [shape = 'f32[128,64]{1,0:T(8,128)}', space=vmem, size = 0x10000, scoped, tag = 'scratch operand']
  %s0 = inlined_call_operand.vmem [shape: bf16[2,128,64], index: 0, kind: input, shape index: {}]
  %s1 = inlined_call_operand.vmem [shape: bf16[4,576,64], index: 1, kind: input, shape index: {}]
  %s2 = inlined_call_operand.vmem [shape: f32[4,64], index: 2, kind: input, shape index: {}]
  %s3 = inlined_call_operand.hbm [shape: f32[2,1,64], index: 3, kind: output, shape index: {}]
  %s4 = sld [smem:[#allocation0]]
  $region45: #{resnet_backbone_2d_forward.3} parent=0
    _
  %s6 = ssub.s32 1, %s4
  %s7 = scalar_select 0, %s6, %s4
  $region1: #{resnet_backbone_2d_forward.3} parent=0
    #allocation4 [shape = 'u8[1024]{0}', space=vmem, size = 0x400, scoped, tag = 'output window, operand 0']
    #allocation5 [shape = 's32[2]{0}', space=sflag, size = 0x8, scoped, tag = 'scoped memory for resnet_backbone_2d_forward.3']
    %8 = vsyncpa [#allocation5], 0
    %s9 = scalar_lea.sflag [#allocation5], 1
    %10 = vsyncpa %s9, 0
    loop: start=0, step=1, limit=4
    $region2: #{resnet_backbone_2d_forward.3} parent=1 // loop_pre_header
      _
    $region3: #{resnet_backbone_2d_forward.3} parent=1 // loop_header
      %s12 = sphi 0, %s16
      %p13 = scmp.ge.s32.totalorder %s12, 4
      %s22 = sphi 0, %s24
      %s25 = sphi 0, %s22
      %s26 = sphi 0, %s25
      %s42 = sphi 0, %s26
      %s46 = sphi 0, %s46
      %s48 = sphi 0, %s46
      %s49 = sphi 0, %s48
      %s63 = sphi 0, %s49
      %s67 = sphi 0, %s67
      %s69 = sphi 0, %s67
      %s70 = sphi 0, %s69
      %s84 = sphi 0, %s70
      %s90 = sphi 0, %s92
      %s93 = sphi 0, %s90
      %s94 = sphi 0, %s93
      %s110 = sphi 0, %s94
    $region4: #{resnet_backbone_2d_forward.3} parent=1 // loop_header_branch
      %15 = sbr.rel (%p13) target = $region8
    $region5: #{resnet_backbone_2d_forward.3} parent=1 // loop_body
      %s17 = ssub.s32 %s12, 1
      %s18 = ssub.s32 %s12, 2
      %s19 = sadd.s32 %s12, 1
      %s20 = ssub.s32 %s12, %s19
      %p21 = scmp.eq.s32.totalorder %s20, 0
      %s23 = sadd.s32 %s22, 1
      %s24 = scalar_select %p21, %s22, %s23
      %p27 = pneg %p21
      %p28 = scmp.eq.s32.totalorder %s12, 1
      %p29 = por %p27, %p28
      %p30 = scmp.ne.s32.totalorder %s22, %s25
      %p31 = scmp.eq.s32.totalorder %s12, 0
      %p32 = por %p30, %p31
      %p33 = scmp.ne.s32.totalorder %s22, %s25
      %p34 = scmp.eq.s32.totalorder %s17, 1
      %p35 = por %p33, %p34
      %p36 = scmp.ne.s32.totalorder %s25, %s26
      %p37 = scmp.eq.s32.totalorder %s17, 0
      %p38 = por %p36, %p37
      %p39 = scmp.ne.s32.totalorder %s25, %s26
      %p40 = scmp.eq.s32.totalorder %s18, 1
      %p41 = por %p39, %p40
      %p43 = scmp.ne.s32.totalorder %s26, %s42
      %p44 = scmp.eq.s32.totalorder %s18, 0
      %p45 = por %p43, %p44
      %s47 = sadd.s32 %s46, 1
      %p50 = scmp.eq.s32.totalorder %s12, 1
      %p51 = scmp.ne.s32.totalorder %s46, %s48
      %p52 = scmp.eq.s32.totalorder %s12, 0
      %p53 = por %p51, %p52
      %p54 = scmp.ne.s32.totalorder %s46, %s48
      %p55 = scmp.eq.s32.totalorder %s17, 1
      %p56 = por %p54, %p55
      %p57 = scmp.ne.s32.totalorder %s48, %s49
      %p58 = scmp.eq.s32.totalorder %s17, 0
      %p59 = por %p57, %p58
      %p60 = scmp.ne.s32.totalorder %s48, %s49
      %p61 = scmp.eq.s32.totalorder %s18, 1
      %p62 = por %p60, %p61
      %p64 = scmp.ne.s32.totalorder %s49, %s63
      %p65 = scmp.eq.s32.totalorder %s18, 0
      %p66 = por %p64, %p65
      %s68 = sadd.s32 %s67, 1
      %p71 = scmp.eq.s32.totalorder %s12, 1
      %p72 = scmp.ne.s32.totalorder %s67, %s69
      %p73 = scmp.eq.s32.totalorder %s12, 0
      %p74 = por %p72, %p73
      %p75 = scmp.ne.s32.totalorder %s67, %s69
      %p76 = scmp.eq.s32.totalorder %s17, 1
      %p77 = por %p75, %p76
      %p78 = scmp.ne.s32.totalorder %s69, %s70
      %p79 = scmp.eq.s32.totalorder %s17, 0
      %p80 = por %p78, %p79
      %p81 = scmp.ne.s32.totalorder %s69, %s70
      %p82 = scmp.eq.s32.totalorder %s18, 1
      %p83 = por %p81, %p82
      %p85 = scmp.ne.s32.totalorder %s70, %s84
      %p86 = scmp.eq.s32.totalorder %s18, 0
      %p87 = por %p85, %p86
      %s88 = ssub.s32 %s12, %s19
      %p89 = scmp.eq.s32.totalorder %s88, 0
      %s91 = sadd.s32 %s90, 1
      %s92 = scalar_select %p89, %s90, %s91
      %p95 = pneg %p89
      %p96 = scmp.eq.s32.totalorder %s12, 1
      %p97 = por %p95, %p96
      %p98 = scmp.ne.s32.totalorder %s90, %s93
      %p99 = scmp.eq.s32.totalorder %s12, 0
      %p100 = por %p98, %p99
      %p101 = scmp.ne.s32.totalorder %s90, %s93
      %p102 = scmp.eq.s32.totalorder %s17, 1
      %p103 = por %p101, %p102
      %p104 = scmp.ne.s32.totalorder %s93, %s94
      %p105 = scmp.eq.s32.totalorder %s17, 0
      %p106 = por %p104, %p105
      %p107 = scmp.ne.s32.totalorder %s93, %s94
      %p108 = scmp.eq.s32.totalorder %s18, 1
      %p109 = por %p107, %p108
      %p111 = scmp.ne.s32.totalorder %s94, %s110
      %p112 = scmp.eq.s32.totalorder %s18, 0
      %p113 = por %p111, %p112
      %p114 = scmp.le.s32.totalorder 1, %s12
      %p115 = scmp.lt.s32.totalorder %s12, 3
      %p116 = pnand %p114, %p115
      %p117 = pneg %p116
      // Predicated region
      $region9: #{resnet_backbone_2d_forward.3} parent=5 // pred_check
        _
      $region10: #{resnet_backbone_2d_forward.3} parent=5 // pred_check_branch
        %119 = sbr.rel (%p116) target = $region12
      $region11: #{resnet_backbone_2d_forward.3} parent=5 // pred_region
        %s120 = ssub.s32 %s12, 1
        // Predicated region
        $region13: #{resnet_backbone_2d_forward.3} parent=11 // pred_check
          %p121 = pneg %p59
        $region14: #{resnet_backbone_2d_forward.3} parent=11 // pred_check_branch
          %123 = sbr.rel (%p121) target = $region16
        $region15: #{resnet_backbone_2d_forward.3} parent=11 // pred_region
          _
        $region16: #{resnet_backbone_2d_forward.3} parent=11 // pred_fallthru
          _
        // Predicated region
        $region17: #{resnet_backbone_2d_forward.3} parent=11 // pred_check
          %p124 = pneg %p80
        $region18: #{resnet_backbone_2d_forward.3} parent=11 // pred_check_branch
          %126 = sbr.rel (%p124) target = $region20
        $region19: #{resnet_backbone_2d_forward.3} parent=11 // pred_region
          _
        $region20: #{resnet_backbone_2d_forward.3} parent=11 // pred_fallthru
          _
      $region12: #{resnet_backbone_2d_forward.3} parent=5 // pred_fallthru
        _
      %p127 = scmp.lt.s32.totalorder %s12, 2
      // Predicated region
      $region21: #{resnet_backbone_2d_forward.3} parent=5 // pred_check
        %p128 = pneg %p127
      $region22: #{resnet_backbone_2d_forward.3} parent=5 // pred_check_branch
        %130 = sbr.rel (%p128) target = $region24
      $region23: #{resnet_backbone_2d_forward.3} parent=5 // pred_region
        // Predicated region
        $region25: #{resnet_backbone_2d_forward.3} parent=23 // pred_check
          %p131 = pneg %p32
        $region26: #{resnet_backbone_2d_forward.3} parent=23 // pred_check_branch
          %133 = sbr.rel (%p131) target = $region28
        $region27: #{resnet_backbone_2d_forward.3} parent=23 // pred_region
          %p134 = scmp.lt.s32.totalorder %s12, 1
          %s135 = scalar_select %p134, %s12, 1
          %s136 = smul.addr %s135, 16
          %s137 = smul.addr %s136, 4
          %s138 = scalar_lea.vmem %s0, %s137
        $region28: #{resnet_backbone_2d_forward.3} parent=23 // pred_fallthru
          _
      $region24: #{resnet_backbone_2d_forward.3} parent=5 // pred_fallthru
        _
      %p139 = scmp.le.s32.totalorder 1, %s12
      %p140 = scmp.lt.s32.totalorder %s12, 3
      %p141 = pnand %p139, %p140
      %p142 = pneg %p141
      // Predicated region
      $region29: #{resnet_backbone_2d_forward.3} parent=5 // pred_check
        _
      $region30: #{resnet_backbone_2d_forward.3} parent=5 // pred_check_branch
        %144 = sbr.rel (%p141) target = $region32
      $region31: #{resnet_backbone_2d_forward.3} parent=5 // pred_region
        %s145 = ssub.s32 %s12, 1
        %p146 = scmp.lt.s32.totalorder %s17, 1
        %s147 = scalar_select %p146, %s17, 1
        %s148 = smul.addr %s147, 16
        %s149 = smul.addr %s148, 4
        %s150 = scalar_lea.vmem %s0, %s149
        %p151 = pneg %p38
        %p152 = pneg %p35
        %p153 = pneg %p59
        %p154 = pneg %p56
        %p155 = pneg %p80
        %p156 = pneg %p77
        %p157 = pneg %p106
        %p158 = pneg %p103
        %s159 = sand.u32 %s93, 1
        %s160 = scalar_lea.sflag [#allocation5], %s159
        %s161 = sand.u32 %s93, 1
        %s162 = scalar_lea.vmem [#allocation4], %s161
        %p163 = scmp.lt.s32.totalorder %s17, 1
        %s164 = scalar_select %p163, %s17, 1
        %s165 = smul.addr %s164, 16
        %s166 = smul.addr %s165, 4
        %s167 = scalar_lea.vmem %s0, %s166
        %v169 = vlaneseq
        %v170 = vshrl.u32 %v169, 7
        %v171 = vadd.s32 %v170, 8
        %v172 = vadd.s32 %v170, 16
        %v173 = vadd.s32 %v170, 24
        %v174 = vadd.s32 %v170, 32
        %v175 = vadd.s32 %v170, 40
        %v176 = vadd.s32 %v170, 48
        %v177 = vadd.s32 %v170, 56
        %v178 = vadd.s32 %v170, 64
        %v179 = vadd.s32 %v170, 72
        %v180 = vadd.s32 %v170, 80
        %v181 = vadd.s32 %v170, 88
        %v182 = vadd.s32 %v170, 96
        %vm183 = vcmp.lt.s32.totalorder %v170, 0
        %v184 = vsub.s32 0, %v170
        %v185 = vsel %vm183, %v184, %v170
        %v186 = vmul.u32.u64.compose %v185, 3123612579
        %v187 = vextract.low.u32 %v186
        %v188 = vextract.high.u32 %v186
        %v189 = vshrl.u32 %v188, 3
        %v190 = vmul.u32 %v189, 11
        %v191 = vsub.s32 %v185, %v190
        %v192 = vsub.s32 0, %v191
        %v193 = vsel %vm183, %v192, %v191
        %vm194 = vcmp.lt.s32.totalorder %v171, 0
        %v195 = vsub.s32 0, %v171
        %v196 = vsel %vm194, %v195, %v171
        %v197 = vmul.u32.u64.compose %v196, 3123612579
        %v198 = vextract.low.u32 %v197
        %v199 = vextract.high.u32 %v197
        %v200 = vshrl.u32 %v199, 3
        %v201 = vmul.u32 %v200, 11
        %v202 = vsub.s32 %v196, %v201
        %v203 = vsub.s32 0, %v202
        %v204 = vsel %vm194, %v203, %v202
        %vm205 = vcmp.lt.s32.totalorder %v172, 0
        %v206 = vsub.s32 0, %v172
        %v207 = vsel %vm205, %v206, %v172
        %v208 = vmul.u32.u64.compose %v207, 3123612579
        %v209 = vextract.low.u32 %v208
        %v210 = vextract.high.u32 %v208
        %v211 = vshrl.u32 %v210, 3
        %v212 = vmul.u32 %v211, 11
        %v213 = vsub.s32 %v207, %v212
        %v214 = vsub.s32 0, %v213
        %v215 = vsel %vm205, %v214, %v213
        %vm216 = vcmp.lt.s32.totalorder %v173, 0
        %v217 = vsub.s32 0, %v173
        %v218 = vsel %vm216, %v217, %v173
        %v219 = vmul.u32.u64.compose %v218, 3123612579
        %v220 = vextract.low.u32 %v219
        %v221 = vextract.high.u32 %v219
        %v222 = vshrl.u32 %v221, 3
        %v223 = vmul.u32 %v222, 11
        %v224 = vsub.s32 %v218, %v223
        %v225 = vsub.s32 0, %v224
        %v226 = vsel %vm216, %v225, %v224
        %vm227 = vcmp.lt.s32.totalorder %v174, 0
        %v228 = vsub.s32 0, %v174
        %v229 = vsel %vm227, %v228, %v174
        %v230 = vmul.u32.u64.compose %v229, 3123612579
        %v231 = vextract.low.u32 %v230
        %v232 = vextract.high.u32 %v230
        %v233 = vshrl.u32 %v232, 3
        %v234 = vmul.u32 %v233, 11
        %v235 = vsub.s32 %v229, %v234
        %v236 = vsub.s32 0, %v235
        %v237 = vsel %vm227, %v236, %v235
        %vm238 = vcmp.lt.s32.totalorder %v175, 0
        %v239 = vsub.s32 0, %v175
        %v240 = vsel %vm238, %v239, %v175
        %v241 = vmul.u32.u64.compose %v240, 3123612579
        %v242 = vextract.low.u32 %v241
        %v243 = vextract.high.u32 %v241
        %v244 = vshrl.u32 %v243, 3
        %v245 = vmul.u32 %v244, 11
        %v246 = vsub.s32 %v240, %v245
        %v247 = vsub.s32 0, %v246
        %v248 = vsel %vm238, %v247, %v246
        %vm249 = vcmp.lt.s32.totalorder %v176, 0
        %v250 = vsub.s32 0, %v176
        %v251 = vsel %vm249, %v250, %v176
        %v252 = vmul.u32.u64.compose %v251, 3123612579
        %v253 = vextract.low.u32 %v252
        %v254 = vextract.high.u32 %v252
        %v255 = vshrl.u32 %v254, 3
        %v256 = vmul.u32 %v255, 11
        %v257 = vsub.s32 %v251, %v256
        %v258 = vsub.s32 0, %v257
        %v259 = vsel %vm249, %v258, %v257
        %vm260 = vcmp.lt.s32.totalorder %v177, 0
        %v261 = vsub.s32 0, %v177
        %v262 = vsel %vm260, %v261, %v177
        %v263 = vmul.u32.u64.compose %v262, 3123612579
        %v264 = vextract.low.u32 %v263
        %v265 = vextract.high.u32 %v263
        %v266 = vshrl.u32 %v265, 3
        %v267 = vmul.u32 %v266, 11
        %v268 = vsub.s32 %v262, %v267
        %v269 = vsub.s32 0, %v268
        %v270 = vsel %vm260, %v269, %v268
        %vm271 = vcmp.lt.s32.totalorder %v178, 0
        %v272 = vsub.s32 0, %v178
        %v273 = vsel %vm271, %v272, %v178
        %v274 = vmul.u32.u64.compose %v273, 3123612579
        %v275 = vextract.low.u32 %v274
        %v276 = vextract.high.u32 %v274
        %v277 = vshrl.u32 %v276, 3
        %v278 = vmul.u32 %v277, 11
        %v279 = vsub.s32 %v273, %v278
        %v280 = vsub.s32 0, %v279
        %v281 = vsel %vm271, %v280, %v279
        %vm282 = vcmp.lt.s32.totalorder %v179, 0
        %v283 = vsub.s32 0, %v179
        %v284 = vsel %vm282, %v283, %v179
        %v285 = vmul.u32.u64.compose %v284, 3123612579
        %v286 = vextract.low.u32 %v285
        %v287 = vextract.high.u32 %v285
        %v288 = vshrl.u32 %v287, 3
        %v289 = vmul.u32 %v288, 11
        %v290 = vsub.s32 %v284, %v289
        %v291 = vsub.s32 0, %v290
        %v292 = vsel %vm282, %v291, %v290
        %vm293 = vcmp.lt.s32.totalorder %v180, 0
        %v294 = vsub.s32 0, %v180
        %v295 = vsel %vm293, %v294, %v180
        %v296 = vmul.u32.u64.compose %v295, 3123612579
        %v297 = vextract.low.u32 %v296
        %v298 = vextract.high.u32 %v296
        %v299 = vshrl.u32 %v298, 3
        %v300 = vmul.u32 %v299, 11
        %v301 = vsub.s32 %v295, %v300
        %v302 = vsub.s32 0, %v301
        %v303 = vsel %vm293, %v302, %v301
        %vm304 = vcmp.lt.s32.totalorder %v181, 0
        %v305 = vsub.s32 0, %v181
        %v306 = vsel %vm304, %v305, %v181
        %v307 = vmul.u32.u64.compose %v306, 3123612579
        %v308 = vextract.low.u32 %v307
        %v309 = vextract.high.u32 %v307
        %v310 = vshrl.u32 %v309, 3
        %v311 = vmul.u32 %v310, 11
        %v312 = vsub.s32 %v306, %v311
        %v313 = vsub.s32 0, %v312
        %v314 = vsel %vm304, %v313, %v312
        %vm315 = vcmp.lt.s32.totalorder %v182, 0
        %v316 = vsub.s32 0, %v182
        %v317 = vsel %vm315, %v316, %v182
        %v318 = vmul.u32.u64.compose %v317, 3123612579
        %v319 = vextract.low.u32 %v318
        %v320 = vextract.high.u32 %v318
        %v321 = vshrl.u32 %v320, 3
        %v322 = vmul.u32 %v321, 11
        %v323 = vsub.s32 %v317, %v322
        %v324 = vsub.s32 0, %v323
        %v325 = vsel %vm315, %v324, %v323
        %vm326 = vcmp.ne.s32.totalorder %v193, 0
        %vm327 = vcmp.ne.s32.totalorder %v204, 0
        %vm328 = vcmp.ne.s32.totalorder %v215, 0
        %vm329 = vcmp.ne.s32.totalorder %v226, 0
        %vm330 = vcmp.ne.s32.totalorder %v237, 0
        %vm331 = vcmp.ne.s32.totalorder %v248, 0
        %vm332 = vcmp.ne.s32.totalorder %v259, 0
        %vm333 = vcmp.ne.s32.totalorder %v270, 0
        %vm334 = vcmp.ne.s32.totalorder %v281, 0
        %vm335 = vcmp.ne.s32.totalorder %v292, 0
        %vm336 = vcmp.ne.s32.totalorder %v303, 0
        %vm337 = vcmp.ne.s32.totalorder %v314, 0
        %vm338 = vcmp.ne.s32.totalorder %v325, 0
        %vm339 = vcmp.lt.s32.totalorder %v193, 0
        %vm340 = vcmp.lt.s32.totalorder %v204, 0
        %vm341 = vcmp.lt.s32.totalorder %v215, 0
        %vm342 = vcmp.lt.s32.totalorder %v226, 0
        %vm343 = vcmp.lt.s32.totalorder %v237, 0
        %vm344 = vcmp.lt.s32.totalorder %v248, 0
        %vm345 = vcmp.lt.s32.totalorder %v259, 0
        %vm346 = vcmp.lt.s32.totalorder %v270, 0
        %vm347 = vcmp.lt.s32.totalorder %v281, 0
        %vm348 = vcmp.lt.s32.totalorder %v292, 0
        %vm349 = vcmp.lt.s32.totalorder %v303, 0
        %vm350 = vcmp.lt.s32.totalorder %v314, 0
        %vm351 = vcmp.lt.s32.totalorder %v325, 0
        %vm352 = vmand %vm339, %vm326
        %vm353 = vmand %vm340, %vm327
        %vm354 = vmand %vm341, %vm328
        %vm355 = vmand %vm342, %vm329
        %vm356 = vmand %vm343, %vm330
        %vm357 = vmand %vm344, %vm331
        %vm358 = vmand %vm345, %vm332
        %vm359 = vmand %vm346, %vm333
        %vm360 = vmand %vm347, %vm334
        %vm361 = vmand %vm348, %vm335
        %vm362 = vmand %vm349, %vm336
        %vm363 = vmand %vm350, %vm337
        %vm364 = vmand %vm351, %vm338
        %v365 = vadd.s32 %v193, 11
        %v366 = vadd.s32 %v204, 11
        %v367 = vadd.s32 %v215, 11
        %v368 = vadd.s32 %v226, 11
        %v369 = vadd.s32 %v237, 11
        %v370 = vadd.s32 %v248, 11
        %v371 = vadd.s32 %v259, 11
        %v372 = vadd.s32 %v270, 11
        %v373 = vadd.s32 %v281, 11
        %v374 = vadd.s32 %v292, 11
        %v375 = vadd.s32 %v303, 11
        %v376 = vadd.s32 %v314, 11
        %v377 = vadd.s32 %v325, 11
        %v378 = vsel %vm352, %v365, %v193
        %v379 = vsel %vm353, %v366, %v204
        %v380 = vsel %vm354, %v367, %v215
        %v381 = vsel %vm355, %v368, %v226
        %v382 = vsel %vm356, %v369, %v237
        %v383 = vsel %vm357, %v370, %v248
        %v384 = vsel %vm358, %v371, %v259
        %v385 = vsel %vm359, %v372, %v270
        %v386 = vsel %vm360, %v373, %v281
        %v387 = vsel %vm361, %v374, %v292
        %v388 = vsel %vm362, %v375, %v303
        %v389 = vsel %vm363, %v376, %v314
        %v390 = vsel %vm364, %v377, %v325
        %vm391 = vcmp.lt.s32.totalorder %v378, 9
        %vm392 = vcmp.lt.s32.totalorder %v379, 9
        %vm393 = vcmp.lt.s32.totalorder %v380, 9
        %vm394 = vcmp.lt.s32.totalorder %v381, 9
        %vm395 = vcmp.lt.s32.totalorder %v382, 9
        %vm396 = vcmp.lt.s32.totalorder %v383, 9
        %vm397 = vcmp.lt.s32.totalorder %v384, 9
        %vm398 = vcmp.lt.s32.totalorder %v385, 9
        %vm399 = vcmp.lt.s32.totalorder %v386, 9
        %vm400 = vcmp.lt.s32.totalorder %v387, 9
        %vm401 = vcmp.lt.s32.totalorder %v388, 9
        %vm402 = vcmp.lt.s32.totalorder %v389, 9
        %vm403 = vcmp.lt.s32.totalorder %v390, 9
        %v404 = vld [vmem:[%s167] sm:$0xf]
        %v405 = vld [vmem:[%s167 + $0x4] sm:$0xf]
        %v406 = vld [vmem:[%s167 + $0x8] sm:$0xf]
        %v407 = vld [vmem:[%s167 + $0xc] sm:$0xf]
        %v408 = vld [vmem:[%s167 + $0x10] sm:$0xf]
        %v409 = vld [vmem:[%s167 + $0x14] sm:$0xf]
        %v410 = vld [vmem:[%s167 + $0x18] sm:$0xf]
        %v411 = vld [vmem:[%s167 + $0x1c] sm:$0xf]
        %v412 = vld [vmem:[%s167 + $0x20] sm:$0xf]
        %v413 = vld [vmem:[%s167 + $0x24] sm:$0xf]
        %v414 = vld [vmem:[%s167 + $0x28] sm:$0xf]
        %v415 = vld [vmem:[%s167 + $0x2c] sm:$0xf]
        %v416 = vld [vmem:[%s167 + $0x30] sm:$0xf]
        %v417 = vld [vmem:[%s167 + $0x34] sm:$0xf]
        %v418 = vld [vmem:[%s167 + $0x38] sm:$0xf]
        %v419 = vld [vmem:[%s167 + $0x3c] sm:$0xf]
        %v420 = vunpack.c.l.bf16 %v404
        %v421 = vunpack.c.l.bf16 %v405
        %v422 = vunpack.c.l.bf16 %v406
        %v423 = vunpack.c.l.bf16 %v407
        %v424 = vunpack.c.l.bf16 %v408
        %v425 = vunpack.c.l.bf16 %v409
        %v426 = vunpack.c.l.bf16 %v410
        %v427 = vunpack.c.l.bf16 %v411
        %v428 = vunpack.c.l.bf16 %v412
        %v429 = vunpack.c.l.bf16 %v413
        %v430 = vunpack.c.l.bf16 %v414
        %v431 = vunpack.c.l.bf16 %v415
        %v432 = vunpack.c.l.bf16 %v416
        %v433 = vunpack.c.l.bf16 %v417
        %v434 = vunpack.c.l.bf16 %v418
        %v435 = vunpack.c.l.bf16 %v419
        %vm436 = vcmask 523264
        %437 = vst.msk [vmem:[#allocation2] sm:$0xff] %vm436, %v420
        %438 = vst.msk [vmem:[#allocation2 + $0x8] sm:$0xff] %vm436, %v421
        %439 = vst.msk [vmem:[#allocation2 + $0x10] sm:$0xff] %vm436, %v422
        %440 = vst.msk [vmem:[#allocation2 + $0x18] sm:$0xff] %vm436, %v423
        %441 = vst.msk [vmem:[#allocation2 + $0x20] sm:$0xff] %vm436, %v424
        %442 = vst.msk [vmem:[#allocation2 + $0x28] sm:$0xff] %vm436, %v425
        %443 = vst.msk [vmem:[#allocation2 + $0x30] sm:$0xff] %vm436, %v426
        %444 = vst.msk [vmem:[#allocation2 + $0x38] sm:$0xff] %vm436, %v427
        %445 = vst.msk [vmem:[#allocation2 + $0x40] sm:$0xff] %vm436, %v428
        %446 = vst.msk [vmem:[#allocation2 + $0x48] sm:$0xff] %vm436, %v429
        %447 = vst.msk [vmem:[#allocation2 + $0x50] sm:$0xff] %vm436, %v430
        %448 = vst.msk [vmem:[#allocation2 + $0x58] sm:$0xff] %vm436, %v431
        %449 = vst.msk [vmem:[#allocation2 + $0x60] sm:$0xff] %vm436, %v432
        %450 = vst.msk [vmem:[#allocation2 + $0x68] sm:$0xff] %vm436, %v433
        %451 = vst.msk [vmem:[#allocation2 + $0x70] sm:$0xff] %vm436, %v434
        %452 = vst.msk [vmem:[#allocation2 + $0x78] sm:$0xff] %vm436, %v435
        %453 = vst.msk [vmem:[#allocation3] sm:$0xff] %vm436, 0.0
        %454 = vst.msk [vmem:[#allocation3 + $0x8] sm:$0xff] %vm436, 0.0
        %455 = vst.msk [vmem:[#allocation3 + $0x10] sm:$0xff] %vm436, 0.0
        %456 = vst.msk [vmem:[#allocation3 + $0x18] sm:$0xff] %vm436, 0.0
        %457 = vst.msk [vmem:[#allocation3 + $0x20] sm:$0xff] %vm436, 0.0
        %458 = vst.msk [vmem:[#allocation3 + $0x28] sm:$0xff] %vm436, 0.0
        %459 = vst.msk [vmem:[#allocation3 + $0x30] sm:$0xff] %vm436, 0.0
        %460 = vst.msk [vmem:[#allocation3 + $0x38] sm:$0xff] %vm436, 0.0
        %461 = vst.msk [vmem:[#allocation3 + $0x40] sm:$0xff] %vm436, 0.0
        %462 = vst.msk [vmem:[#allocation3 + $0x48] sm:$0xff] %vm436, 0.0
        %463 = vst.msk [vmem:[#allocation3 + $0x50] sm:$0xff] %vm436, 0.0
        %464 = vst.msk [vmem:[#allocation3 + $0x58] sm:$0xff] %vm436, 0.0
        %465 = vst.msk [vmem:[#allocation3 + $0x60] sm:$0xff] %vm436, 0.0
        %466 = vst.msk [vmem:[#allocation3 + $0x68] sm:$0xff] %vm436, 0.0
        %467 = vst.msk [vmem:[#allocation3 + $0x70] sm:$0xff] %vm436, 0.0
        %468 = vst.msk [vmem:[#allocation3 + $0x78] sm:$0xff] %vm436, 0.0
        %v469 = vld [vmem:[#allocation2] sm:$0xff]
        %v470 = vld [vmem:[#allocation2 + $0x8] sm:$0xff]
        %v471 = vld [vmem:[#allocation2 + $0x10] sm:$0xff]
        %v472 = vld [vmem:[#allocation2 + $0x18] sm:$0xff]
        %v473 = vld [vmem:[#allocation2 + $0x20] sm:$0xff]
        %v474 = vld [vmem:[#allocation2 + $0x28] sm:$0xff]
        %v475 = vld [vmem:[#allocation2 + $0x30] sm:$0xff]
        %v476 = vld [vmem:[#allocation2 + $0x38] sm:$0xff]
        %v477 = vld [vmem:[#allocation2 + $0x40] sm:$0xff]
        %v478 = vld [vmem:[#allocation2 + $0x48] sm:$0xff]
        %v479 = vld [vmem:[#allocation2 + $0x50] sm:$0xff]
        %v480 = vld [vmem:[#allocation2 + $0x58] sm:$0xff]
        %v481 = vld [vmem:[#allocation2 + $0x60] sm:$0x7]
        %v482 = vld [vmem:[#allocation2 + $0x1] sm:$0xff]
        %v483 = vld [vmem:[#allocation2 + $0x9] sm:$0xff]
        %v484 = vld [vmem:[#allocation2 + $0x11] sm:$0xff]
        %v485 = vld [vmem:[#allocation2 + $0x19] sm:$0xff]
        %v486 = vld [vmem:[#allocation2 + $0x21] sm:$0xff]
        %v487 = vld [vmem:[#allocation2 + $0x29] sm:$0xff]
        %v488 = vld [vmem:[#allocation2 + $0x31] sm:$0xff]
        %v489 = vld [vmem:[#allocation2 + $0x39] sm:$0xff]
        %v490 = vld [vmem:[#allocation2 + $0x41] sm:$0xff]
        %v491 = vld [vmem:[#allocation2 + $0x49] sm:$0xff]
        %v492 = vld [vmem:[#allocation2 + $0x51] sm:$0xff]
        %v493 = vld [vmem:[#allocation2 + $0x59] sm:$0xff]
        %v494 = vld [vmem:[#allocation2 + $0x61] sm:$0x7]
        %v495 = vld [vmem:[#allocation2 + $0x2] sm:$0xff]
        %v496 = vld [vmem:[#allocation2 + $0xa] sm:$0xff]
        %v497 = vld [vmem:[#allocation2 + $0x12] sm:$0xff]
        %v498 = vld [vmem:[#allocation2 + $0x1a] sm:$0xff]
        %v499 = vld [vmem:[#allocation2 + $0x22] sm:$0xff]
        %v500 = vld [vmem:[#allocation2 + $0x2a] sm:$0xff]
        %v501 = vld [vmem:[#allocation2 + $0x32] sm:$0xff]
        %v502 = vld [vmem:[#allocation2 + $0x3a] sm:$0xff]
        %v503 = vld [vmem:[#allocation2 + $0x42] sm:$0xff]
        %v504 = vld [vmem:[#allocation2 + $0x4a] sm:$0xff]
        %v505 = vld [vmem:[#allocation2 + $0x52] sm:$0xff]
        %v506 = vld [vmem:[#allocation2 + $0x5a] sm:$0xff]
        %v507 = vld [vmem:[#allocation2 + $0x62] sm:$0x7]
        %v508 = vld [vmem:[#allocation2 + $0xb] sm:$0xff]
        %v509 = vld [vmem:[#allocation2 + $0x13] sm:$0xff]
        %v510 = vld [vmem:[#allocation2 + $0x1b] sm:$0xff]
        %v511 = vld [vmem:[#allocation2 + $0x23] sm:$0xff]
        %v512 = vld [vmem:[#allocation2 + $0x2b] sm:$0xff]
        %v513 = vld [vmem:[#allocation2 + $0x33] sm:$0xff]
        %v514 = vld [vmem:[#allocation2 + $0x3b] sm:$0xff]
        %v515 = vld [vmem:[#allocation2 + $0x43] sm:$0xff]
        %v516 = vld [vmem:[#allocation2 + $0x4b] sm:$0xff]
        %v517 = vld [vmem:[#allocation2 + $0x53] sm:$0xff]
        %v518 = vld [vmem:[#allocation2 + $0x5b] sm:$0xff]
        %v519 = vld [vmem:[#allocation2 + $0x63] sm:$0xff]
        %v520 = vld [vmem:[#allocation2 + $0x6b] sm:$0x7]
        %v521 = vld [vmem:[#allocation2 + $0xc] sm:$0xff]
        %v522 = vld [vmem:[#allocation2 + $0x14] sm:$0xff]
        %v523 = vld [vmem:[#allocation2 + $0x1c] sm:$0xff]
        %v524 = vld [vmem:[#allocation2 + $0x24] sm:$0xff]
        %v525 = vld [vmem:[#allocation2 + $0x2c] sm:$0xff]
        %v526 = vld [vmem:[#allocation2 + $0x34] sm:$0xff]
        %v527 = vld [vmem:[#allocation2 + $0x3c] sm:$0xff]
        %v528 = vld [vmem:[#allocation2 + $0x44] sm:$0xff]
        %v529 = vld [vmem:[#allocation2 + $0x4c] sm:$0xff]
        %v530 = vld [vmem:[#allocation2 + $0x54] sm:$0xff]
        %v531 = vld [vmem:[#allocation2 + $0x5c] sm:$0xff]
        %v532 = vld [vmem:[#allocation2 + $0x64] sm:$0xff]
        %v533 = vld [vmem:[#allocation2 + $0x6c] sm:$0x7]
        %v534 = vld [vmem:[#allocation2 + $0xd] sm:$0xff]
        %v535 = vld [vmem:[#allocation2 + $0x15] sm:$0xff]
        %v536 = vld [vmem:[#allocation2 + $0x1d] sm:$0xff]
        %v537 = vld [vmem:[#allocation2 + $0x25] sm:$0xff]
        %v538 = vld [vmem:[#allocation2 + $0x2d] sm:$0xff]
        %v539 = vld [vmem:[#allocation2 + $0x35] sm:$0xff]
        %v540 = vld [vmem:[#allocation2 + $0x3d] sm:$0xff]
        %v541 = vld [vmem:[#allocation2 + $0x45] sm:$0xff]
        %v542 = vld [vmem:[#allocation2 + $0x4d] sm:$0xff]
        %v543 = vld [vmem:[#allocation2 + $0x55] sm:$0xff]
        %v544 = vld [vmem:[#allocation2 + $0x5d] sm:$0xff]
        %v545 = vld [vmem:[#allocation2 + $0x65] sm:$0xff]
        %v546 = vld [vmem:[#allocation2 + $0x6d] sm:$0x7]
        %v547 = vld [vmem:[#allocation2 + $0x16] sm:$0xff]
        %v548 = vld [vmem:[#allocation2 + $0x1e] sm:$0xff]
        %v549 = vld [vmem:[#allocation2 + $0x26] sm:$0xff]
        %v550 = vld [vmem:[#allocation2 + $0x2e] sm:$0xff]
        %v551 = vld [vmem:[#allocation2 + $0x36] sm:$0xff]
        %v552 = vld [vmem:[#allocation2 + $0x3e] sm:$0xff]
        %v553 = vld [vmem:[#allocation2 + $0x46] sm:$0xff]
        %v554 = vld [vmem:[#allocation2 + $0x4e] sm:$0xff]
        %v555 = vld [vmem:[#allocation2 + $0x56] sm:$0xff]
        %v556 = vld [vmem:[#allocation2 + $0x5e] sm:$0xff]
        %v557 = vld [vmem:[#allocation2 + $0x66] sm:$0xff]
        %v558 = vld [vmem:[#allocation2 + $0x6e] sm:$0xff]
        %v559 = vld [vmem:[#allocation2 + $0x76] sm:$0x7]
        %v560 = vld [vmem:[#allocation2 + $0x17] sm:$0xff]
        %v561 = vld [vmem:[#allocation2 + $0x1f] sm:$0xff]
        %v562 = vld [vmem:[#allocation2 + $0x27] sm:$0xff]
        %v563 = vld [vmem:[#allocation2 + $0x2f] sm:$0xff]
        %v564 = vld [vmem:[#allocation2 + $0x37] sm:$0xff]
        %v565 = vld [vmem:[#allocation2 + $0x3f] sm:$0xff]
        %v566 = vld [vmem:[#allocation2 + $0x47] sm:$0xff]
        %v567 = vld [vmem:[#allocation2 + $0x4f] sm:$0xff]
        %v568 = vld [vmem:[#allocation2 + $0x57] sm:$0xff]
        %v569 = vld [vmem:[#allocation2 + $0x5f] sm:$0xff]
        %v570 = vld [vmem:[#allocation2 + $0x67] sm:$0xff]
        %v571 = vld [vmem:[#allocation2 + $0x6f] sm:$0xff]
        %v572 = vld [vmem:[#allocation2 + $0x77] sm:$0x7]
        %v573 = vld [vmem:[#allocation2 + $0x60] sm:$0xff]
        %v574 = vld [vmem:[#allocation2 + $0x68] sm:$0xff]
        %v575 = vld [vmem:[#allocation2 + $0x70] sm:$0xff]
        %v576 = vld [vmem:[#allocation2 + $0x78] sm:$0x7]
        %590 = vrot.lane.b32.xlu0 %v482, 64
        %v591 = vpop.permute.xlu0 %590
        %592 = vrot.lane.b32.xlu0 %v483, 64
        %v593 = vpop.permute.xlu0 %592
        %594 = vrot.lane.b32.xlu0 %v484, 64
        %v595 = vpop.permute.xlu0 %594
        %596 = vrot.lane.b32.xlu0 %v485, 64
        %v597 = vpop.permute.xlu0 %596
        %598 = vrot.lane.b32.xlu0 %v486, 64
        %v599 = vpop.permute.xlu0 %598
        %600 = vrot.lane.b32.xlu0 %v487, 64
        %v601 = vpop.permute.xlu0 %600
        %602 = vrot.lane.b32.xlu0 %v488, 64
        %v603 = vpop.permute.xlu0 %602
        %604 = vrot.lane.b32.xlu0 %v489, 64
        %v605 = vpop.permute.xlu0 %604
        %606 = vrot.lane.b32.xlu0 %v490, 64
        %v607 = vpop.permute.xlu0 %606
        %608 = vrot.lane.b32.xlu0 %v491, 64
        %v609 = vpop.permute.xlu0 %608
        %610 = vrot.lane.b32.xlu0 %v492, 64
        %v611 = vpop.permute.xlu0 %610
        %612 = vrot.lane.b32.xlu0 %v493, 64
        %v613 = vpop.permute.xlu0 %612
        %614 = vrot.lane.b32.xlu0 %v494, 64
        %v615 = vpop.permute.xlu0 %614
        %642 = vrot.lane.b32.xlu0 %v508, 64
        %v643 = vpop.permute.xlu0 %642
        %644 = vrot.lane.b32.xlu0 %v509, 64
        %v645 = vpop.permute.xlu0 %644
        %646 = vrot.lane.b32.xlu0 %v510, 64
        %v647 = vpop.permute.xlu0 %646
        %648 = vrot.lane.b32.xlu0 %v511, 64
        %v649 = vpop.permute.xlu0 %648
        %650 = vrot.lane.b32.xlu0 %v512, 64
        %v651 = vpop.permute.xlu0 %650
        %652 = vrot.lane.b32.xlu0 %v513, 64
        %v653 = vpop.permute.xlu0 %652
        %654 = vrot.lane.b32.xlu0 %v514, 64
        %v655 = vpop.permute.xlu0 %654
        %656 = vrot.lane.b32.xlu0 %v515, 64
        %v657 = vpop.permute.xlu0 %656
        %658 = vrot.lane.b32.xlu0 %v516, 64
        %v659 = vpop.permute.xlu0 %658
        %660 = vrot.lane.b32.xlu0 %v517, 64
        %v661 = vpop.permute.xlu0 %660
        %662 = vrot.lane.b32.xlu0 %v518, 64
        %v663 = vpop.permute.xlu0 %662
        %664 = vrot.lane.b32.xlu0 %v519, 64
        %v665 = vpop.permute.xlu0 %664
        %666 = vrot.lane.b32.xlu0 %v520, 64
        %v667 = vpop.permute.xlu0 %666
        %694 = vrot.lane.b32.xlu0 %v534, 64
        %v695 = vpop.permute.xlu0 %694
        %696 = vrot.lane.b32.xlu0 %v535, 64
        %v697 = vpop.permute.xlu0 %696
        %698 = vrot.lane.b32.xlu0 %v536, 64
        %v699 = vpop.permute.xlu0 %698
        %700 = vrot.lane.b32.xlu0 %v537, 64
        %v701 = vpop.permute.xlu0 %700
        %702 = vrot.lane.b32.xlu0 %v538, 64
        %v703 = vpop.permute.xlu0 %702
        %704 = vrot.lane.b32.xlu0 %v539, 64
        %v705 = vpop.permute.xlu0 %704
        %706 = vrot.lane.b32.xlu0 %v540, 64
        %v707 = vpop.permute.xlu0 %706
        %708 = vrot.lane.b32.xlu0 %v541, 64
        %v709 = vpop.permute.xlu0 %708
        %710 = vrot.lane.b32.xlu0 %v542, 64
        %v711 = vpop.permute.xlu0 %710
        %712 = vrot.lane.b32.xlu0 %v543, 64
        %v713 = vpop.permute.xlu0 %712
        %714 = vrot.lane.b32.xlu0 %v544, 64
        %v715 = vpop.permute.xlu0 %714
        %716 = vrot.lane.b32.xlu0 %v545, 64
        %v717 = vpop.permute.xlu0 %716
        %718 = vrot.lane.b32.xlu0 %v546, 64
        %v719 = vpop.permute.xlu0 %718
        %746 = vrot.lane.b32.xlu0 %v560, 64
        %v747 = vpop.permute.xlu0 %746
        %748 = vrot.lane.b32.xlu0 %v561, 64
        %v749 = vpop.permute.xlu0 %748
        %750 = vrot.lane.b32.xlu0 %v562, 64
        %v751 = vpop.permute.xlu0 %750
        %752 = vrot.lane.b32.xlu0 %v563, 64
        %v753 = vpop.permute.xlu0 %752
        %754 = vrot.lane.b32.xlu0 %v564, 64
        %v755 = vpop.permute.xlu0 %754
        %756 = vrot.lane.b32.xlu0 %v565, 64
        %v757 = vpop.permute.xlu0 %756
        %758 = vrot.lane.b32.xlu0 %v566, 64
        %v759 = vpop.permute.xlu0 %758
        %760 = vrot.lane.b32.xlu0 %v567, 64
        %v761 = vpop.permute.xlu0 %760
        %762 = vrot.lane.b32.xlu0 %v568, 64
        %v763 = vpop.permute.xlu0 %762
        %764 = vrot.lane.b32.xlu0 %v569, 64
        %v765 = vpop.permute.xlu0 %764
        %766 = vrot.lane.b32.xlu0 %v570, 64
        %v767 = vpop.permute.xlu0 %766
        %768 = vrot.lane.b32.xlu0 %v571, 64
        %v769 = vpop.permute.xlu0 %768
        %770 = vrot.lane.b32.xlu0 %v572, 64
        %v771 = vpop.permute.xlu0 %770
        %v785 = vsel %vm436, %v469, %v591
        %v786 = vsel %vm436, %v470, %v593
        %v787 = vsel %vm436, %v471, %v595
        %v788 = vsel %vm436, %v472, %v597
        %v789 = vsel %vm436, %v473, %v599
        %v790 = vsel %vm436, %v474, %v601
        %v791 = vsel %vm436, %v475, %v603
        %v792 = vsel %vm436, %v476, %v605
        %v793 = vsel %vm436, %v477, %v607
        %v794 = vsel %vm436, %v478, %v609
        %v795 = vsel %vm436, %v479, %v611
        %v796 = vsel %vm436, %v480, %v613
        %v797 = vsel %vm436, %v481, %v615
        %v798 = vsel %vm436, %v495, %v643
        %v799 = vsel %vm436, %v496, %v645
        %v800 = vsel %vm436, %v497, %v647
        %v801 = vsel %vm436, %v498, %v649
        %v802 = vsel %vm436, %v499, %v651
        %v803 = vsel %vm436, %v500, %v653
        %v804 = vsel %vm436, %v501, %v655
        %v805 = vsel %vm436, %v502, %v657
        %v806 = vsel %vm436, %v503, %v659
        %v807 = vsel %vm436, %v504, %v661
        %v808 = vsel %vm436, %v505, %v663
        %v809 = vsel %vm436, %v506, %v665
        %v810 = vsel %vm436, %v507, %v667
        %v811 = vsel %vm436, %v521, %v695
        %v812 = vsel %vm436, %v522, %v697
        %v813 = vsel %vm436, %v523, %v699
        %v814 = vsel %vm436, %v524, %v701
        %v815 = vsel %vm436, %v525, %v703
        %v816 = vsel %vm436, %v526, %v705
        %v817 = vsel %vm436, %v527, %v707
        %v818 = vsel %vm436, %v528, %v709
        %v819 = vsel %vm436, %v529, %v711
        %v820 = vsel %vm436, %v530, %v713
        %v821 = vsel %vm436, %v531, %v715
        %v822 = vsel %vm436, %v532, %v717
        %v823 = vsel %vm436, %v533, %v719
        %v824 = vsel %vm436, %v547, %v747
        %v825 = vsel %vm436, %v548, %v749
        %v826 = vsel %vm436, %v549, %v751
        %v827 = vsel %vm436, %v550, %v753
        %v828 = vsel %vm436, %v551, %v755
        %v829 = vsel %vm436, %v552, %v757
        %v830 = vsel %vm436, %v553, %v759
        %v831 = vsel %vm436, %v554, %v761
        %v832 = vsel %vm436, %v555, %v763
        %v833 = vsel %vm436, %v556, %v765
        %v834 = vsel %vm436, %v557, %v767
        %v835 = vsel %vm436, %v558, %v769
        %v836 = vsel %vm436, %v559, %v771
        %v837 = vpack.c.bf16 %v786, %v785
        %v838 = vpack.c.bf16 %v799, %v798
        %v839 = vpack.c.bf16 %v812, %v811
        %v840 = vpack.c.bf16 %v825, %v824
        %v841 = vpack.c.bf16 %v473, %v472
        %v842 = vpack.c.bf16 %v788, %v787
        %v843 = vpack.c.bf16 %v801, %v800
        %v844 = vpack.c.bf16 %v814, %v813
        %v845 = vpack.c.bf16 %v827, %v826
        %v846 = vpack.c.bf16 %v475, %v474
        %v847 = vpack.c.bf16 %v790, %v789
        %v848 = vpack.c.bf16 %v803, %v802
        %v849 = vpack.c.bf16 %v816, %v815
        %v850 = vpack.c.bf16 %v829, %v828
        %v851 = vpack.c.bf16 %v477, %v476
        %v852 = vpack.c.bf16 %v792, %v791
        %v853 = vpack.c.bf16 %v805, %v804
        %v854 = vpack.c.bf16 %v818, %v817
        %v855 = vpack.c.bf16 %v831, %v830
        %v856 = vpack.c.bf16 %v479, %v478
        %v857 = vpack.c.bf16 %v794, %v793
        %v858 = vpack.c.bf16 %v807, %v806
        %v859 = vpack.c.bf16 %v820, %v819
        %v860 = vpack.c.bf16 %v833, %v832
        %v861 = vpack.c.bf16 %v573, %v480
        %v862 = vpack.c.bf16 %v796, %v795
        %v863 = vpack.c.bf16 %v809, %v808
        %v864 = vpack.c.bf16 %v822, %v821
        %v865 = vpack.c.bf16 %v835, %v834
        %v866 = vpack.c.bf16 %v575, %v574
        %v867 = vpack.c.bf16 %v797, %v797
        %v868 = vpack.c.bf16 %v810, %v810
        %v869 = vpack.c.bf16 %v823, %v823
        %v870 = vpack.c.bf16 %v836, %v836
        %v871 = vpack.c.bf16 %v576, %v576
        %v872 = vld [vmem:[%s1] sm:$0xf]
        %v873 = vld [vmem:[%s1 + $0x4] sm:$0xf]
        %v874 = vld [vmem:[%s1 + $0x8] sm:$0xf]
        %v875 = vld [vmem:[%s1 + $0xc] sm:$0xf]
        %v876 = vld [vmem:[%s1 + $0x10] sm:$0xf]
        %v877 = vld [vmem:[%s1 + $0x14] sm:$0xf]
        %v878 = vld [vmem:[%s1 + $0x18] sm:$0xf]
        %v879 = vld [vmem:[%s1 + $0x1c] sm:$0xf]
        %v880 = vld [vmem:[%s1 + $0x20] sm:$0xf]
        %v881 = vld [vmem:[%s1 + $0x24] sm:$0xf]
        %v882 = vld [vmem:[%s1 + $0x28] sm:$0xf]
        %v883 = vld [vmem:[%s1 + $0x2c] sm:$0xf]
        %v884 = vld [vmem:[%s1 + $0x30] sm:$0xf]
        %v885 = vld [vmem:[%s1 + $0x34] sm:$0xf]
        %v886 = vld [vmem:[%s1 + $0x38] sm:$0xf]
        %v887 = vld [vmem:[%s1 + $0x3c] sm:$0xf]
        %v888 = vld [vmem:[%s1 + $0x40] sm:$0xf]
        %v889 = vld [vmem:[%s1 + $0x44] sm:$0xf]
        %v890 = vld [vmem:[%s1 + $0x48] sm:$0xf]
        %v891 = vld [vmem:[%s1 + $0x4c] sm:$0xf]
        %v892 = vld [vmem:[%s1 + $0x50] sm:$0xf]
        %v893 = vld [vmem:[%s1 + $0x54] sm:$0xf]
        %v894 = vld [vmem:[%s1 + $0x58] sm:$0xf]
        %v895 = vld [vmem:[%s1 + $0x5c] sm:$0xf]
        %v896 = vld [vmem:[%s1 + $0x60] sm:$0xf]
        %v897 = vld [vmem:[%s1 + $0x64] sm:$0xf]
        %v898 = vld [vmem:[%s1 + $0x68] sm:$0xf]
        %v899 = vld [vmem:[%s1 + $0x6c] sm:$0xf]
        %v900 = vld [vmem:[%s1 + $0x70] sm:$0xf]
        %v901 = vld [vmem:[%s1 + $0x74] sm:$0xf]
        %v902 = vld [vmem:[%s1 + $0x78] sm:$0xf]
        %v903 = vld [vmem:[%s1 + $0x7c] sm:$0xf]
        %v904 = vld [vmem:[%s1 + $0x80] sm:$0xf]
        %v905 = vld [vmem:[%s1 + $0x84] sm:$0xf]
        %v906 = vld [vmem:[%s1 + $0x88] sm:$0xf]
        %v907 = vld [vmem:[%s1 + $0x8c] sm:$0xf]
        %v908 = vld [vmem:[%s1 + $0x90] sm:$0xf]
        %v909 = vld [vmem:[%s1 + $0x94] sm:$0xf]
        %v910 = vld [vmem:[%s1 + $0x98] sm:$0xf]
        %v911 = vld [vmem:[%s1 + $0x9c] sm:$0xf]
        %v912 = vld [vmem:[%s1 + $0xa0] sm:$0xf]
        %v913 = vld [vmem:[%s1 + $0xa4] sm:$0xf]
        %v914 = vld [vmem:[%s1 + $0xa8] sm:$0xf]
        %v915 = vld [vmem:[%s1 + $0xac] sm:$0xf]
        %v916 = vld [vmem:[%s1 + $0xb0] sm:$0xf]
        %v917 = vld [vmem:[%s1 + $0xb4] sm:$0xf]
        %v918 = vld [vmem:[%s1 + $0xb8] sm:$0xf]
        %v919 = vld [vmem:[%s1 + $0xbc] sm:$0xf]
        %v920 = vld [vmem:[%s1 + $0xc0] sm:$0xf]
        %v921 = vld [vmem:[%s1 + $0xc4] sm:$0xf]
        %v922 = vld [vmem:[%s1 + $0xc8] sm:$0xf]
        %v923 = vld [vmem:[%s1 + $0xcc] sm:$0xf]
        %v924 = vld [vmem:[%s1 + $0xd0] sm:$0xf]
        %v925 = vld [vmem:[%s1 + $0xd4] sm:$0xf]
        %v926 = vld [vmem:[%s1 + $0xd8] sm:$0xf]
        %v927 = vld [vmem:[%s1 + $0xdc] sm:$0xf]
        %v928 = vld [vmem:[%s1 + $0xe0] sm:$0xf]
        %v929 = vld [vmem:[%s1 + $0xe4] sm:$0xf]
        %v930 = vld [vmem:[%s1 + $0xe8] sm:$0xf]
        %v931 = vld [vmem:[%s1 + $0xec] sm:$0xf]
        %v932 = vld [vmem:[%s1 + $0xf0] sm:$0xf]
        %v933 = vld [vmem:[%s1 + $0xf4] sm:$0xf]
        %v934 = vld [vmem:[%s1 + $0xf8] sm:$0xf]
        %v935 = vld [vmem:[%s1 + $0xfc] sm:$0xf]
        %v936 = vld [vmem:[%s1 + $0x100] sm:$0xf]
        %v937 = vld [vmem:[%s1 + $0x104] sm:$0xf]
        %v938 = vld [vmem:[%s1 + $0x108] sm:$0xf]
        %v939 = vld [vmem:[%s1 + $0x10c] sm:$0xf]
        %v940 = vld [vmem:[%s1 + $0x110] sm:$0xf]
        %v941 = vld [vmem:[%s1 + $0x114] sm:$0xf]
        %v942 = vld [vmem:[%s1 + $0x118] sm:$0xf]
        %v943 = vld [vmem:[%s1 + $0x11c] sm:$0xf]
        %v944 = vld [vmem:[%s2] sm:$0x1]
        %v945 = vlaneseq
        %v946 = vshrl.u32 %v945, 7
        %v947 = vsub.s32 0, %v946
        %v948 = vrot.slane %v944, %v947
        %v1021 = vunpack.c.l.b16 %v872
        %v1022 = vunpack.c.l.b16 %v873
        %v1023 = vunpack.c.l.b16 %v874
        %v1024 = vunpack.c.l.b16 %v875
        %v1025 = vunpack.c.l.b16 %v876
        %v1026 = vunpack.c.l.b16 %v877
        %v1027 = vunpack.c.l.b16 %v878
        %v1028 = vunpack.c.l.b16 %v879
        %v1029 = vunpack.c.l.b16 %v880
        %v1030 = vunpack.c.l.b16 %v881
        %v1031 = vunpack.c.l.b16 %v882
        %v1032 = vunpack.c.l.b16 %v883
        %v1033 = vunpack.c.l.b16 %v884
        %v1034 = vunpack.c.l.b16 %v885
        %v1035 = vunpack.c.l.b16 %v886
        %v1036 = vunpack.c.l.b16 %v887
        %v1037 = vunpack.c.l.b16 %v888
        %v1038 = vunpack.c.l.b16 %v889
        %v1039 = vunpack.c.l.b16 %v890
        %v1040 = vunpack.c.l.b16 %v891
        %v1041 = vunpack.c.l.b16 %v892
        %v1042 = vunpack.c.l.b16 %v893
        %v1043 = vunpack.c.l.b16 %v894
        %v1044 = vunpack.c.l.b16 %v895
        %v1045 = vunpack.c.l.b16 %v896
        %v1046 = vunpack.c.l.b16 %v897
        %v1047 = vunpack.c.l.b16 %v898
        %v1048 = vunpack.c.l.b16 %v899
        %v1049 = vunpack.c.l.b16 %v900
        %v1050 = vunpack.c.l.b16 %v901
        %v1051 = vunpack.c.l.b16 %v902
        %v1052 = vunpack.c.l.b16 %v903
        %v1053 = vunpack.c.l.b16 %v904
        %v1054 = vunpack.c.l.b16 %v905
        %v1055 = vunpack.c.l.b16 %v906
        %v1056 = vunpack.c.l.b16 %v907
        %v1057 = vunpack.c.l.b16 %v908
        %v1058 = vunpack.c.l.b16 %v909
        %v1059 = vunpack.c.l.b16 %v910
        %v1060 = vunpack.c.l.b16 %v911
        %v1061 = vunpack.c.l.b16 %v912
        %v1062 = vunpack.c.l.b16 %v913
        %v1063 = vunpack.c.l.b16 %v914
        %v1064 = vunpack.c.l.b16 %v915
        %v1065 = vunpack.c.l.b16 %v916
        %v1066 = vunpack.c.l.b16 %v917
        %v1067 = vunpack.c.l.b16 %v918
        %v1068 = vunpack.c.l.b16 %v919
        %v1069 = vunpack.c.l.b16 %v920
        %v1070 = vunpack.c.l.b16 %v921
        %v1071 = vunpack.c.l.b16 %v922
        %v1072 = vunpack.c.l.b16 %v923
        %v1073 = vunpack.c.l.b16 %v924
        %v1074 = vunpack.c.l.b16 %v925
        %v1075 = vunpack.c.l.b16 %v926
        %v1076 = vunpack.c.l.b16 %v927
        %v1077 = vunpack.c.l.b16 %v928
        %v1078 = vunpack.c.l.b16 %v929
        %v1079 = vunpack.c.l.b16 %v930
        %v1080 = vunpack.c.l.b16 %v931
        %v1081 = vunpack.c.l.b16 %v932
        %v1082 = vunpack.c.l.b16 %v933
        %v1083 = vunpack.c.l.b16 %v934
        %v1084 = vunpack.c.l.b16 %v935
        %v1085 = vunpack.c.l.b16 %v936
        %v1086 = vunpack.c.l.b16 %v937
        %v1087 = vunpack.c.l.b16 %v938
        %v1088 = vunpack.c.l.b16 %v939
        %v1089 = vunpack.c.l.b16 %v940
        %v1090 = vunpack.c.l.b16 %v941
        %v1091 = vunpack.c.l.b16 %v942
        %v1092 = vunpack.c.l.b16 %v943
        %v1093 = vpack.c.b16 %v1022, %v1021
        %v1094 = vpack.c.b16 %v1024, %v1023
        %v1095 = vpack.c.b16 %v1026, %v1025
        %v1096 = vpack.c.b16 %v1028, %v1027
        %v1097 = vpack.c.b16 %v1030, %v1029
        %v1098 = vpack.c.b16 %v1032, %v1031
        %v1099 = vpack.c.b16 %v1034, %v1033
        %v1100 = vpack.c.b16 %v1036, %v1035
        %v1101 = vpack.c.b16 %v1038, %v1037
        %v1102 = vpack.c.b16 %v1040, %v1039
        %v1103 = vpack.c.b16 %v1042, %v1041
        %v1104 = vpack.c.b16 %v1044, %v1043
        %v1105 = vpack.c.b16 %v1046, %v1045
        %v1106 = vpack.c.b16 %v1048, %v1047
        %v1107 = vpack.c.b16 %v1050, %v1049
        %v1108 = vpack.c.b16 %v1052, %v1051
        %v1109 = vpack.c.b16 %v1054, %v1053
        %v1110 = vpack.c.b16 %v1056, %v1055
        %v1111 = vpack.c.b16 %v1058, %v1057
        %v1112 = vpack.c.b16 %v1060, %v1059
        %v1113 = vpack.c.b16 %v1062, %v1061
        %v1114 = vpack.c.b16 %v1064, %v1063
        %v1115 = vpack.c.b16 %v1066, %v1065
        %v1116 = vpack.c.b16 %v1068, %v1067
        %v1117 = vpack.c.b16 %v1070, %v1069
        %v1118 = vpack.c.b16 %v1072, %v1071
        %v1119 = vpack.c.b16 %v1074, %v1073
        %v1120 = vpack.c.b16 %v1076, %v1075
        %v1121 = vpack.c.b16 %v1078, %v1077
        %v1122 = vpack.c.b16 %v1080, %v1079
        %v1123 = vpack.c.b16 %v1082, %v1081
        %v1124 = vpack.c.b16 %v1084, %v1083
        %v1125 = vpack.c.b16 %v1086, %v1085
        %v1126 = vpack.c.b16 %v1088, %v1087
        %v1127 = vpack.c.b16 %v1090, %v1089
        %v1128 = vpack.c.b16 %v1092, %v1091
        %v1166 = vsel %vm436, %v841, 0
        %v1169 = vsel %vm436, %v846, 0
        %v1172 = vsel %vm436, %v851, 0
        %v1175 = vsel %vm436, %v856, 0
        %v1178 = vsel %vm436, %v861, 0
        %v1181 = vsel %vm436, %v866, 0
        %v1184 = vsel %vm436, %v871, 0
        %1186 = vmatprep.subr.bf16.mxu0 0
        %1187 = vmatpush1.bf16.msra.mxu0 %v1093
        %1188 = vmatprep.subr.bf16.mxu0 0
        %1189 = vmatpush1.bf16.msra.mxu0 %v1094
        %1190 = vmatprep.subr.bf16.mxu0 0
        %1191 = vmatpush1.bf16.msra.mxu0 %v1095
        %1192 = vmatprep.subr.bf16.mxu0 0
        %1193 = vmatpush1.bf16.msra.mxu0 %v1096
        %1194 = vmatprep.subr.bf16.mxu0 0
        %1195 = vmatpush1.bf16.msra.mxu0 %v1097
        %1196 = vmatprep.subr.bf16.mxu0 0
        %1197 = vmatpush1.bf16.msra.mxu0 %v1098
        %1198 = vmatprep.subr.bf16.mxu0 0
        %1199 = vmatpush1.bf16.msra.mxu0 %v1099
        %1200 = vmatprep.subr.bf16.mxu0 0
        %1201 = vmatpush1.bf16.msra.mxu0 %v1100
        %1202 = vmatprep.subr.bf16.mxu0 0
        %1203 = vmatpush1.bf16.msra.mxu0 %v1101
        %1204 = vmatprep.subr.bf16.mxu0 0
        %1205 = vmatpush1.bf16.msra.mxu0 %v1102
        %1206 = vmatprep.subr.bf16.mxu0 0
        %1207 = vmatpush1.bf16.msra.mxu0 %v1103
        %1208 = vmatprep.subr.bf16.mxu0 0
        %1209 = vmatpush1.bf16.msra.mxu0 %v1104
        %1210 = vmatprep.subr.bf16.mxu0 0
        %1211 = vmatpush1.bf16.msra.mxu0 %v1105
        %1212 = vmatprep.subr.bf16.mxu0 0
        %1213 = vmatpush1.bf16.msra.mxu0 %v1106
        %1214 = vmatprep.subr.bf16.mxu0 0
        %1215 = vmatpush1.bf16.msra.mxu0 %v1107
        %1216 = vmatprep.subr.bf16.mxu0 0
        %1217 = vmatpush1.bf16.msra.mxu0 %v1108
        %1218 = vmatprep.mubr.bf16.mxu0 %v838
        %1219 = vmatmul.mubr.bf16.gmra.mrb[0].mxu0 %v837
        %v1220 = vpop.f32.mrb[0].mxu0
        %v1221 = vadd.f32 %v948, %v1220
        %v1222 = vpop.f32.mrb[0].mxu0
        %v1223 = vpop.f32.mrb[0].mxu0
        %v1224 = vadd.f32 %v948, %v1223
        %v1225 = vpop.f32.mrb[0].mxu0
        %1226 = vmatprep.mubr.bf16.mxu0 %v843
        %1227 = vmatmul.mubr.bf16.gmra.mrb[0].mxu0 %v842
        %v1228 = vpop.f32.mrb[0].mxu0
        %v1229 = vadd.f32 %v948, %v1228
        %v1230 = vpop.f32.mrb[0].mxu0
        %v1231 = vpop.f32.mrb[0].mxu0
        %v1232 = vadd.f32 %v948, %v1231
        %v1233 = vpop.f32.mrb[0].mxu0
        %1234 = vmatprep.mubr.bf16.mxu0 %v848
        %1235 = vmatmul.mubr.bf16.gmra.mrb[0].mxu0 %v847
        %v1236 = vpop.f32.mrb[0].mxu0
        %v1237 = vadd.f32 %v948, %v1236
        %v1238 = vpop.f32.mrb[0].mxu0
        %v1239 = vpop.f32.mrb[0].mxu0
        %v1240 = vadd.f32 %v948, %v1239
        %v1241 = vpop.f32.mrb[0].mxu0
        %1242 = vmatprep.mubr.bf16.mxu0 %v853
        %1243 = vmatmul.mubr.bf16.gmra.mrb[0].mxu0 %v852
        %v1244 = vpop.f32.mrb[0].mxu0
        %v1245 = vadd.f32 %v948, %v1244
        %v1246 = vpop.f32.mrb[0].mxu0
        %v1247 = vpop.f32.mrb[0].mxu0
        %v1248 = vadd.f32 %v948, %v1247
        %v1249 = vpop.f32.mrb[0].mxu0
        %1250 = vmatprep.mubr.bf16.mxu0 %v858
        %1251 = vmatmul.mubr.bf16.gmra.mrb[0].mxu0 %v857
        %v1252 = vpop.f32.mrb[0].mxu0
        %v1253 = vadd.f32 %v948, %v1252
        %v1254 = vpop.f32.mrb[0].mxu0
        %v1255 = vpop.f32.mrb[0].mxu0
        %v1256 = vadd.f32 %v948, %v1255
        %v1257 = vpop.f32.mrb[0].mxu0
        %1258 = vmatprep.mubr.bf16.mxu0 %v863
        %1259 = vmatmul.mubr.bf16.gmra.mrb[0].mxu0 %v862
        %v1260 = vpop.f32.mrb[0].mxu0
        %v1261 = vadd.f32 %v948, %v1260
        %v1262 = vpop.f32.mrb[0].mxu0
        %v1263 = vpop.f32.mrb[0].mxu0
        %v1264 = vadd.f32 %v948, %v1263
        %v1265 = vpop.f32.mrb[0].mxu0
        %1266 = vmatprep.mubr.bf16.mxu0 %v868
        %1267 = vmatmul.mubr.bf16.gmra.mrb[0].mxu0 %v867
        %v1268 = vpop.f32.mrb[0].mxu0
        %v1269 = vadd.f32 %v948, %v1268
        %v1270 = vpop.f32.mrb[0].mxu0
        %v1271 = vpop.f32.mrb[0].mxu0
        %v1272 = vpop.f32.mrb[0].mxu0
        %1273 = vdwg.mxu0
        %1274 = vmatprep.subr.bf16.mxu0 0
        %1275 = vmatpush1.bf16.msra.mxu0 %v1109
        %1276 = vmatprep.subr.bf16.mxu0 0
        %1277 = vmatpush1.bf16.msra.mxu0 %v1110
        %1278 = vmatprep.subr.bf16.mxu0 0
        %1279 = vmatpush1.bf16.msra.mxu0 %v1111
        %1280 = vmatprep.subr.bf16.mxu0 0
        %1281 = vmatpush1.bf16.msra.mxu0 %v1112
        %1282 = vmatprep.subr.bf16.mxu0 0
        %1283 = vmatpush1.bf16.msra.mxu0 %v1113
        %1284 = vmatprep.subr.bf16.mxu0 0
        %1285 = vmatpush1.bf16.msra.mxu0 %v1114
        %1286 = vmatprep.subr.bf16.mxu0 0
        %1287 = vmatpush1.bf16.msra.mxu0 %v1115
        %1288 = vmatprep.subr.bf16.mxu0 0
        %1289 = vmatpush1.bf16.msra.mxu0 %v1116
        %1290 = vmatprep.subr.bf16.mxu0 0
        %1291 = vmatpush1.bf16.msra.mxu0 %v1117
        %1292 = vmatprep.subr.bf16.mxu0 0
        %1293 = vmatpush1.bf16.msra.mxu0 %v1118
        %1294 = vmatprep.subr.bf16.mxu0 0
        %1295 = vmatpush1.bf16.msra.mxu0 %v1119
        %1296 = vmatprep.subr.bf16.mxu0 0
        %1297 = vmatpush1.bf16.msra.mxu0 %v1120
        %1298 = vmatprep.subr.bf16.mxu0 0
        %1299 = vmatpush1.bf16.msra.mxu0 %v1121
        %1300 = vmatprep.subr.bf16.mxu0 0
        %1301 = vmatpush1.bf16.msra.mxu0 %v1122
        %1302 = vmatprep.subr.bf16.mxu0 0
        %1303 = vmatpush1.bf16.msra.mxu0 %v1123
        %1304 = vmatprep.subr.bf16.mxu0 0
        %1305 = vmatpush1.bf16.msra.mxu0 %v1124
        %1306 = vmatprep.mubr.bf16.mxu0 %v840
        %1307 = vmatmul.mubr.bf16.gmra.mrb[0].mxu0 %v839
        %v1308 = vpop.f32.mrb[0].mxu0
        %v1309 = vadd.f32 %v1221, %v1308
        %v1310 = vpop.f32.mrb[0].mxu0
        %v1311 = vpop.f32.mrb[0].mxu0
        %v1312 = vadd.f32 %v1224, %v1311
        %v1313 = vpop.f32.mrb[0].mxu0
        %1314 = vmatprep.mubr.bf16.mxu0 %v845
        %1315 = vmatmul.mubr.bf16.gmra.mrb[0].mxu0 %v844
        %v1316 = vpop.f32.mrb[0].mxu0
        %v1317 = vadd.f32 %v1229, %v1316
        %v1318 = vpop.f32.mrb[0].mxu0
        %v1319 = vpop.f32.mrb[0].mxu0
        %v1320 = vadd.f32 %v1232, %v1319
        %v1321 = vpop.f32.mrb[0].mxu0
        %1322 = vmatprep.mubr.bf16.mxu0 %v850
        %1323 = vmatmul.mubr.bf16.gmra.mrb[0].mxu0 %v849
        %v1324 = vpop.f32.mrb[0].mxu0
        %v1325 = vadd.f32 %v1237, %v1324
        %v1326 = vpop.f32.mrb[0].mxu0
        %v1327 = vpop.f32.mrb[0].mxu0
        %v1328 = vadd.f32 %v1240, %v1327
        %v1329 = vpop.f32.mrb[0].mxu0
        %1330 = vmatprep.mubr.bf16.mxu0 %v855
        %1331 = vmatmul.mubr.bf16.gmra.mrb[0].mxu0 %v854
        %v1332 = vpop.f32.mrb[0].mxu0
        %v1333 = vadd.f32 %v1245, %v1332
        %v1334 = vpop.f32.mrb[0].mxu0
        %v1335 = vpop.f32.mrb[0].mxu0
        %v1336 = vadd.f32 %v1248, %v1335
        %v1337 = vpop.f32.mrb[0].mxu0
        %1338 = vmatprep.mubr.bf16.mxu0 %v860
        %1339 = vmatmul.mubr.bf16.gmra.mrb[0].mxu0 %v859
        %v1340 = vpop.f32.mrb[0].mxu0
        %v1341 = vadd.f32 %v1253, %v1340
        %v1342 = vpop.f32.mrb[0].mxu0
        %v1343 = vpop.f32.mrb[0].mxu0
        %v1344 = vadd.f32 %v1256, %v1343
        %v1345 = vpop.f32.mrb[0].mxu0
        %1346 = vmatprep.mubr.bf16.mxu0 %v865
        %1347 = vmatmul.mubr.bf16.gmra.mrb[0].mxu0 %v864
        %v1348 = vpop.f32.mrb[0].mxu0
        %v1349 = vadd.f32 %v1261, %v1348
        %v1350 = vpop.f32.mrb[0].mxu0
        %v1351 = vpop.f32.mrb[0].mxu0
        %v1352 = vadd.f32 %v1264, %v1351
        %v1353 = vpop.f32.mrb[0].mxu0
        %1354 = vmatprep.mubr.bf16.mxu0 %v870
        %1355 = vmatmul.mubr.bf16.gmra.mrb[0].mxu0 %v869
        %v1356 = vpop.f32.mrb[0].mxu0
        %v1357 = vadd.f32 %v1269, %v1356
        %v1358 = vpop.f32.mrb[0].mxu0
        %v1359 = vpop.f32.mrb[0].mxu0
        %v1360 = vpop.f32.mrb[0].mxu0
        %1361 = vdwg.mxu0
        %1362 = vmatprep.subr.bf16.mxu0 0
        %1363 = vmatpush1.bf16.msra.mxu0 %v1125
        %1364 = vmatprep.subr.bf16.mxu0 0
        %1365 = vmatpush1.bf16.msra.mxu0 %v1126
        %1366 = vmatprep.subr.bf16.mxu0 0
        %1367 = vmatpush1.bf16.msra.mxu0 %v1127
        %1368 = vmatprep.subr.bf16.mxu0 0
        %1369 = vmatpush1.bf16.msra.mxu0 %v1128
        %1370 = vmatprep.subr.bf16.mxu0 0
        %1371 = vmatpush1.bf16.msra.mxu0 0
        %1372 = vmatprep.subr.bf16.mxu0 0
        %1373 = vmatpush1.bf16.msra.mxu0 0
        %1374 = vmatprep.subr.bf16.mxu0 0
        %1375 = vmatpush1.bf16.msra.mxu0 0
        %1376 = vmatprep.subr.bf16.mxu0 0
        %1377 = vmatpush1.bf16.msra.mxu0 0
        %1378 = vmatprep.subr.bf16.mxu0 0
        %1379 = vmatpush1.bf16.msra.mxu0 0
        %1380 = vmatprep.subr.bf16.mxu0 0
        %1381 = vmatpush1.bf16.msra.mxu0 0
        %1382 = vmatprep.subr.bf16.mxu0 0
        %1383 = vmatpush1.bf16.msra.mxu0 0
        %1384 = vmatprep.subr.bf16.mxu0 0
        %1385 = vmatpush1.bf16.msra.mxu0 0
        %1386 = vmatprep.subr.bf16.mxu0 0
        %1387 = vmatpush1.bf16.msra.mxu0 0
        %1388 = vmatprep.subr.bf16.mxu0 0
        %1389 = vmatpush1.bf16.msra.mxu0 0
        %1390 = vmatprep.subr.bf16.mxu0 0
        %1391 = vmatpush1.bf16.msra.mxu0 0
        %1392 = vmatprep.subr.bf16.mxu0 0
        %1393 = vmatpush1.bf16.msra.mxu0 0
        %1394 = vmatprep.mubr.bf16.mxu0 0
        %1395 = vmatmul.mubr.bf16.gmra.mrb[0].mxu0 %v1166
        %v1396 = vpop.f32.mrb[0].mxu0
        %v1397 = vadd.f32 %v1309, %v1396
        %v1398 = vpop.f32.mrb[0].mxu0
        %v1399 = vpop.f32.mrb[0].mxu0
        %v1400 = vadd.f32 %v1312, %v1399
        %v1401 = vpop.f32.mrb[0].mxu0
        %1402 = vmatprep.mubr.bf16.mxu0 0
        %1403 = vmatmul.mubr.bf16.gmra.mrb[0].mxu0 %v1169
        %v1404 = vpop.f32.mrb[0].mxu0
        %v1405 = vadd.f32 %v1317, %v1404
        %v1406 = vpop.f32.mrb[0].mxu0
        %v1407 = vpop.f32.mrb[0].mxu0
        %v1408 = vadd.f32 %v1320, %v1407
        %v1409 = vpop.f32.mrb[0].mxu0
        %1410 = vmatprep.mubr.bf16.mxu0 0
        %1411 = vmatmul.mubr.bf16.gmra.mrb[0].mxu0 %v1172
        %v1412 = vpop.f32.mrb[0].mxu0
        %v1413 = vadd.f32 %v1325, %v1412
        %v1414 = vpop.f32.mrb[0].mxu0
        %v1415 = vpop.f32.mrb[0].mxu0
        %v1416 = vadd.f32 %v1328, %v1415
        %v1417 = vpop.f32.mrb[0].mxu0
        %1418 = vmatprep.mubr.bf16.mxu0 0
        %1419 = vmatmul.mubr.bf16.gmra.mrb[0].mxu0 %v1175
        %v1420 = vpop.f32.mrb[0].mxu0
        %v1421 = vadd.f32 %v1333, %v1420
        %v1422 = vpop.f32.mrb[0].mxu0
        %v1423 = vpop.f32.mrb[0].mxu0
        %v1424 = vadd.f32 %v1336, %v1423
        %v1425 = vpop.f32.mrb[0].mxu0
        %1426 = vmatprep.mubr.bf16.mxu0 0
        %1427 = vmatmul.mubr.bf16.gmra.mrb[0].mxu0 %v1178
        %v1428 = vpop.f32.mrb[0].mxu0
        %v1429 = vadd.f32 %v1341, %v1428
        %v1430 = vpop.f32.mrb[0].mxu0
        %v1431 = vpop.f32.mrb[0].mxu0
        %v1432 = vadd.f32 %v1344, %v1431
        %v1433 = vpop.f32.mrb[0].mxu0
        %1434 = vmatprep.mubr.bf16.mxu0 0
        %1435 = vmatmul.mubr.bf16.gmra.mrb[0].mxu0 %v1181
        %v1436 = vpop.f32.mrb[0].mxu0
        %v1437 = vadd.f32 %v1349, %v1436
        %v1438 = vpop.f32.mrb[0].mxu0
        %v1439 = vpop.f32.mrb[0].mxu0
        %v1440 = vadd.f32 %v1352, %v1439
        %v1441 = vpop.f32.mrb[0].mxu0
        %1442 = vmatprep.mubr.bf16.mxu0 0
        %1443 = vmatmul.mubr.bf16.gmra.mrb[0].mxu0 %v1184
        %v1444 = vpop.f32.mrb[0].mxu0
        %v1445 = vadd.f32 %v1357, %v1444
        %v1446 = vpop.f32.mrb[0].mxu0
        %v1447 = vpop.f32.mrb[0].mxu0
        %v1448 = vpop.f32.mrb[0].mxu0
        %1449 = vdwg.mxu0
        %v1450 = vmax.f32 %v1397, 0.0
        %v1451 = vmax.f32 %v1400, 0.0
        %v1452 = vmax.f32 %v1405, 0.0
        %v1453 = vmax.f32 %v1408, 0.0
        %v1454 = vmax.f32 %v1413, 0.0
        %v1455 = vmax.f32 %v1416, 0.0
        %v1456 = vmax.f32 %v1421, 0.0
        %v1457 = vmax.f32 %v1424, 0.0
        %v1458 = vmax.f32 %v1429, 0.0
        %v1459 = vmax.f32 %v1432, 0.0
        %v1460 = vmax.f32 %v1437, 0.0
        %v1461 = vmax.f32 %v1440, 0.0
        %v1462 = vmax.f32 %v1445, 0.0
        %v1463 = vsel %vm391, 1, 0
        %v1464 = vsel %vm392, 1, 0
        %v1465 = vsel %vm393, 1, 0
        %v1466 = vsel %vm394, 1, 0
        %v1467 = vsel %vm395, 1, 0
        %v1468 = vsel %vm396, 1, 0
        %v1469 = vsel %vm397, 1, 0
        %v1470 = vsel %vm398, 1, 0
        %v1471 = vsel %vm399, 1, 0
        %v1472 = vsel %vm400, 1, 0
        %v1473 = vsel %vm401, 1, 0
        %v1474 = vsel %vm402, 1, 0
        %v1475 = vsel %vm403, 1, 0
        %vm1476 = vcmp.eq.s32.totalorder %v1463, 1
        %vm1477 = vcmp.eq.s32.totalorder %v1464, 1
        %vm1478 = vcmp.eq.s32.totalorder %v1465, 1
        %vm1479 = vcmp.eq.s32.totalorder %v1466, 1
        %vm1480 = vcmp.eq.s32.totalorder %v1467, 1
        %vm1481 = vcmp.eq.s32.totalorder %v1468, 1
        %vm1482 = vcmp.eq.s32.totalorder %v1469, 1
        %vm1483 = vcmp.eq.s32.totalorder %v1470, 1
        %vm1484 = vcmp.eq.s32.totalorder %v1471, 1
        %vm1485 = vcmp.eq.s32.totalorder %v1472, 1
        %vm1486 = vcmp.eq.s32.totalorder %v1473, 1
        %vm1487 = vcmp.eq.s32.totalorder %v1474, 1
        %vm1488 = vcmp.eq.s32.totalorder %v1475, 1
        %v1489 = vsel %vm1476, %v1450, 0.0
        %v1490 = vsel %vm1477, %v1451, 0.0
        %v1491 = vsel %vm1478, %v1452, 0.0
        %v1492 = vsel %vm1479, %v1453, 0.0
        %v1493 = vsel %vm1480, %v1454, 0.0
        %v1494 = vsel %vm1481, %v1455, 0.0
        %v1495 = vsel %vm1482, %v1456, 0.0
        %v1496 = vsel %vm1483, %v1457, 0.0
        %v1497 = vsel %vm1484, %v1458, 0.0
        %v1498 = vsel %vm1485, %v1459, 0.0
        %v1499 = vsel %vm1486, %v1460, 0.0
        %v1500 = vsel %vm1487, %v1461, 0.0
        %v1501 = vsel %vm1488, %v1462, 0.0
        %1502 = vst.msk [vmem:[#allocation3 + $0xc] sm:$0xff] %vm436, %v1489
        %1503 = vst.msk [vmem:[#allocation3 + $0x14] sm:$0xff] %vm436, %v1490
        %1504 = vst.msk [vmem:[#allocation3 + $0x1c] sm:$0xff] %vm436, %v1491
        %1505 = vst.msk [vmem:[#allocation3 + $0x24] sm:$0xff] %vm436, %v1492
        %1506 = vst.msk [vmem:[#allocation3 + $0x2c] sm:$0xff] %vm436, %v1493
        %1507 = vst.msk [vmem:[#allocation3 + $0x34] sm:$0xff] %vm436, %v1494
        %1508 = vst.msk [vmem:[#allocation3 + $0x3c] sm:$0xff] %vm436, %v1495
        %1509 = vst.msk [vmem:[#allocation3 + $0x44] sm:$0xff] %vm436, %v1496
        %1510 = vst.msk [vmem:[#allocation3 + $0x4c] sm:$0xff] %vm436, %v1497
        %1511 = vst.msk [vmem:[#allocation3 + $0x54] sm:$0xff] %vm436, %v1498
        %1512 = vst.msk [vmem:[#allocation3 + $0x5c] sm:$0xff] %vm436, %v1499
        %1513 = vst.msk [vmem:[#allocation3 + $0x64] sm:$0xff] %vm436, %v1500
        %vm1514 = vcmask 518144
        %1515 = vst.msk [vmem:[#allocation3 + $0x6c] sm:$0x7] %vm1514, %v1501
        %v1516 = vld [vmem:[#allocation3] sm:$0xff]
        %v1517 = vld [vmem:[#allocation3 + $0x8] sm:$0xff]
        %v1518 = vld [vmem:[#allocation3 + $0x10] sm:$0xff]
        %v1519 = vld [vmem:[#allocation3 + $0x18] sm:$0xff]
        %v1520 = vld [vmem:[#allocation3 + $0x20] sm:$0xff]
        %v1521 = vld [vmem:[#allocation3 + $0x28] sm:$0xff]
        %v1522 = vld [vmem:[#allocation3 + $0x30] sm:$0xff]
        %v1523 = vld [vmem:[#allocation3 + $0x38] sm:$0xff]
        %v1524 = vld [vmem:[#allocation3 + $0x40] sm:$0xff]
        %v1525 = vld [vmem:[#allocation3 + $0x48] sm:$0xff]
        %v1526 = vld [vmem:[#allocation3 + $0x50] sm:$0xff]
        %v1527 = vld [vmem:[#allocation3 + $0x58] sm:$0xff]
        %v1528 = vld [vmem:[#allocation3 + $0x60] sm:$0x7]
        %v1529 = vld [vmem:[#allocation3 + $0x1] sm:$0xff]
        %v1530 = vld [vmem:[#allocation3 + $0x9] sm:$0xff]
        %v1531 = vld [vmem:[#allocation3 + $0x11] sm:$0xff]
        %v1532 = vld [vmem:[#allocation3 + $0x19] sm:$0xff]
        %v1533 = vld [vmem:[#allocation3 + $0x21] sm:$0xff]
        %v1534 = vld [vmem:[#allocation3 + $0x29] sm:$0xff]
        %v1535 = vld [vmem:[#allocation3 + $0x31] sm:$0xff]
        %v1536 = vld [vmem:[#allocation3 + $0x39] sm:$0xff]
        %v1537 = vld [vmem:[#allocation3 + $0x41] sm:$0xff]
        %v1538 = vld [vmem:[#allocation3 + $0x49] sm:$0xff]
        %v1539 = vld [vmem:[#allocation3 + $0x51] sm:$0xff]
        %v1540 = vld [vmem:[#allocation3 + $0x59] sm:$0xff]
        %v1541 = vld [vmem:[#allocation3 + $0x61] sm:$0x7]
        %v1542 = vld [vmem:[#allocation3 + $0x2] sm:$0xff]
        %v1543 = vld [vmem:[#allocation3 + $0xa] sm:$0xff]
        %v1544 = vld [vmem:[#allocation3 + $0x12] sm:$0xff]
        %v1545 = vld [vmem:[#allocation3 + $0x1a] sm:$0xff]
        %v1546 = vld [vmem:[#allocation3 + $0x22] sm:$0xff]
        %v1547 = vld [vmem:[#allocation3 + $0x2a] sm:$0xff]
        %v1548 = vld [vmem:[#allocation3 + $0x32] sm:$0xff]
        %v1549 = vld [vmem:[#allocation3 + $0x3a] sm:$0xff]
        %v1550 = vld [vmem:[#allocation3 + $0x42] sm:$0xff]
        %v1551 = vld [vmem:[#allocation3 + $0x4a] sm:$0xff]
        %v1552 = vld [vmem:[#allocation3 + $0x52] sm:$0xff]
        %v1553 = vld [vmem:[#allocation3 + $0x5a] sm:$0xff]
        %v1554 = vld [vmem:[#allocation3 + $0x62] sm:$0x7]
        %v1555 = vld [vmem:[#allocation3 + $0xb] sm:$0xff]
        %v1556 = vld [vmem:[#allocation3 + $0x13] sm:$0xff]
        %v1557 = vld [vmem:[#allocation3 + $0x1b] sm:$0xff]
        %v1558 = vld [vmem:[#allocation3 + $0x23] sm:$0xff]
        %v1559 = vld [vmem:[#allocation3 + $0x2b] sm:$0xff]
        %v1560 = vld [vmem:[#allocation3 + $0x33] sm:$0xff]
        %v1561 = vld [vmem:[#allocation3 + $0x3b] sm:$0xff]
        %v1562 = vld [vmem:[#allocation3 + $0x43] sm:$0xff]
        %v1563 = vld [vmem:[#allocation3 + $0x4b] sm:$0xff]
        %v1564 = vld [vmem:[#allocation3 + $0x53] sm:$0xff]
        %v1565 = vld [vmem:[#allocation3 + $0x5b] sm:$0xff]
        %v1566 = vld [vmem:[#allocation3 + $0x63] sm:$0xff]
        %v1567 = vld [vmem:[#allocation3 + $0x6b] sm:$0x7]
        %v1568 = vld [vmem:[#allocation3 + $0xc] sm:$0xff]
        %v1569 = vld [vmem:[#allocation3 + $0x14] sm:$0xff]
        %v1570 = vld [vmem:[#allocation3 + $0x1c] sm:$0xff]
        %v1571 = vld [vmem:[#allocation3 + $0x24] sm:$0xff]
        %v1572 = vld [vmem:[#allocation3 + $0x2c] sm:$0xff]
        %v1573 = vld [vmem:[#allocation3 + $0x34] sm:$0xff]
        %v1574 = vld [vmem:[#allocation3 + $0x3c] sm:$0xff]
        %v1575 = vld [vmem:[#allocation3 + $0x44] sm:$0xff]
        %v1576 = vld [vmem:[#allocation3 + $0x4c] sm:$0xff]
        %v1577 = vld [vmem:[#allocation3 + $0x54] sm:$0xff]
        %v1578 = vld [vmem:[#allocation3 + $0x5c] sm:$0xff]
        %v1579 = vld [vmem:[#allocation3 + $0x64] sm:$0xff]
        %v1580 = vld [vmem:[#allocation3 + $0x6c] sm:$0x7]
        %v1581 = vld [vmem:[#allocation3 + $0xd] sm:$0xff]
        %v1582 = vld [vmem:[#allocation3 + $0x15] sm:$0xff]
        %v1583 = vld [vmem:[#allocation3 + $0x1d] sm:$0xff]
        %v1584 = vld [vmem:[#allocation3 + $0x25] sm:$0xff]
        %v1585 = vld [vmem:[#allocation3 + $0x2d] sm:$0xff]
        %v1586 = vld [vmem:[#allocation3 + $0x35] sm:$0xff]
        %v1587 = vld [vmem:[#allocation3 + $0x3d] sm:$0xff]
        %v1588 = vld [vmem:[#allocation3 + $0x45] sm:$0xff]
        %v1589 = vld [vmem:[#allocation3 + $0x4d] sm:$0xff]
        %v1590 = vld [vmem:[#allocation3 + $0x55] sm:$0xff]
        %v1591 = vld [vmem:[#allocation3 + $0x5d] sm:$0xff]
        %v1592 = vld [vmem:[#allocation3 + $0x65] sm:$0xff]
        %v1593 = vld [vmem:[#allocation3 + $0x6d] sm:$0x7]
        %v1594 = vld [vmem:[#allocation3 + $0x16] sm:$0xff]
        %v1595 = vld [vmem:[#allocation3 + $0x1e] sm:$0xff]
        %v1596 = vld [vmem:[#allocation3 + $0x26] sm:$0xff]
        %v1597 = vld [vmem:[#allocation3 + $0x2e] sm:$0xff]
        %v1598 = vld [vmem:[#allocation3 + $0x36] sm:$0xff]
        %v1599 = vld [vmem:[#allocation3 + $0x3e] sm:$0xff]
        %v1600 = vld [vmem:[#allocation3 + $0x46] sm:$0xff]
        %v1601 = vld [vmem:[#allocation3 + $0x4e] sm:$0xff]
        %v1602 = vld [vmem:[#allocation3 + $0x56] sm:$0xff]
        %v1603 = vld [vmem:[#allocation3 + $0x5e] sm:$0xff]
        %v1604 = vld [vmem:[#allocation3 + $0x66] sm:$0xff]
        %v1605 = vld [vmem:[#allocation3 + $0x6e] sm:$0xff]
        %v1606 = vld [vmem:[#allocation3 + $0x76] sm:$0x7]
        %v1607 = vld [vmem:[#allocation3 + $0x17] sm:$0xff]
        %v1608 = vld [vmem:[#allocation3 + $0x1f] sm:$0xff]
        %v1609 = vld [vmem:[#allocation3 + $0x27] sm:$0xff]
        %v1610 = vld [vmem:[#allocation3 + $0x2f] sm:$0xff]
        %v1611 = vld [vmem:[#allocation3 + $0x37] sm:$0xff]
        %v1612 = vld [vmem:[#allocation3 + $0x3f] sm:$0xff]
        %v1613 = vld [vmem:[#allocation3 + $0x47] sm:$0xff]
        %v1614 = vld [vmem:[#allocation3 + $0x4f] sm:$0xff]
        %v1615 = vld [vmem:[#allocation3 + $0x57] sm:$0xff]
        %v1616 = vld [vmem:[#allocation3 + $0x5f] sm:$0xff]
        %v1617 = vld [vmem:[#allocation3 + $0x67] sm:$0xff]
        %v1618 = vld [vmem:[#allocation3 + $0x6f] sm:$0xff]
        %v1619 = vld [vmem:[#allocation3 + $0x77] sm:$0x7]
        %v1620 = vld [vmem:[#allocation3 + $0x60] sm:$0xff]
        %v1621 = vld [vmem:[#allocation3 + $0x68] sm:$0xff]
        %v1622 = vld [vmem:[#allocation3 + $0x70] sm:$0xff]
        %v1623 = vld [vmem:[#allocation3 + $0x78] sm:$0x7]
        %1637 = vrot.lane.b32.xlu0 %v1529, 64
        %v1638 = vpop.permute.xlu0 %1637
        %1639 = vrot.lane.b32.xlu0 %v1530, 64
        %v1640 = vpop.permute.xlu0 %1639
        %1641 = vrot.lane.b32.xlu0 %v1531, 64
        %v1642 = vpop.permute.xlu0 %1641
        %1643 = vrot.lane.b32.xlu0 %v1532, 64
        %v1644 = vpop.permute.xlu0 %1643
        %1645 = vrot.lane.b32.xlu0 %v1533, 64
        %v1646 = vpop.permute.xlu0 %1645
        %1647 = vrot.lane.b32.xlu0 %v1534, 64
        %v1648 = vpop.permute.xlu0 %1647
        %1649 = vrot.lane.b32.xlu0 %v1535, 64
        %v1650 = vpop.permute.xlu0 %1649
        %1651 = vrot.lane.b32.xlu0 %v1536, 64
        %v1652 = vpop.permute.xlu0 %1651
        %1653 = vrot.lane.b32.xlu0 %v1537, 64
        %v1654 = vpop.permute.xlu0 %1653
        %1655 = vrot.lane.b32.xlu0 %v1538, 64
        %v1656 = vpop.permute.xlu0 %1655
        %1657 = vrot.lane.b32.xlu0 %v1539, 64
        %v1658 = vpop.permute.xlu0 %1657
        %1659 = vrot.lane.b32.xlu0 %v1540, 64
        %v1660 = vpop.permute.xlu0 %1659
        %1661 = vrot.lane.b32.xlu0 %v1541, 64
        %v1662 = vpop.permute.xlu0 %1661
        %1689 = vrot.lane.b32.xlu0 %v1555, 64
        %v1690 = vpop.permute.xlu0 %1689
        %1691 = vrot.lane.b32.xlu0 %v1556, 64
        %v1692 = vpop.permute.xlu0 %1691
        %1693 = vrot.lane.b32.xlu0 %v1557, 64
        %v1694 = vpop.permute.xlu0 %1693
        %1695 = vrot.lane.b32.xlu0 %v1558, 64
        %v1696 = vpop.permute.xlu0 %1695
        %1697 = vrot.lane.b32.xlu0 %v1559, 64
        %v1698 = vpop.permute.xlu0 %1697
        %1699 = vrot.lane.b32.xlu0 %v1560, 64
        %v1700 = vpop.permute.xlu0 %1699
        %1701 = vrot.lane.b32.xlu0 %v1561, 64
        %v1702 = vpop.permute.xlu0 %1701
        %1703 = vrot.lane.b32.xlu0 %v1562, 64
        %v1704 = vpop.permute.xlu0 %1703
        %1705 = vrot.lane.b32.xlu0 %v1563, 64
        %v1706 = vpop.permute.xlu0 %1705
        %1707 = vrot.lane.b32.xlu0 %v1564, 64
        %v1708 = vpop.permute.xlu0 %1707
        %1709 = vrot.lane.b32.xlu0 %v1565, 64
        %v1710 = vpop.permute.xlu0 %1709
        %1711 = vrot.lane.b32.xlu0 %v1566, 64
        %v1712 = vpop.permute.xlu0 %1711
        %1713 = vrot.lane.b32.xlu0 %v1567, 64
        %v1714 = vpop.permute.xlu0 %1713
        %1741 = vrot.lane.b32.xlu0 %v1581, 64
        %v1742 = vpop.permute.xlu0 %1741
        %1743 = vrot.lane.b32.xlu0 %v1582, 64
        %v1744 = vpop.permute.xlu0 %1743
        %1745 = vrot.lane.b32.xlu0 %v1583, 64
        %v1746 = vpop.permute.xlu0 %1745
        %1747 = vrot.lane.b32.xlu0 %v1584, 64
        %v1748 = vpop.permute.xlu0 %1747
        %1749 = vrot.lane.b32.xlu0 %v1585, 64
        %v1750 = vpop.permute.xlu0 %1749
        %1751 = vrot.lane.b32.xlu0 %v1586, 64
        %v1752 = vpop.permute.xlu0 %1751
        %1753 = vrot.lane.b32.xlu0 %v1587, 64
        %v1754 = vpop.permute.xlu0 %1753
        %1755 = vrot.lane.b32.xlu0 %v1588, 64
        %v1756 = vpop.permute.xlu0 %1755
        %1757 = vrot.lane.b32.xlu0 %v1589, 64
        %v1758 = vpop.permute.xlu0 %1757
        %1759 = vrot.lane.b32.xlu0 %v1590, 64
        %v1760 = vpop.permute.xlu0 %1759
        %1761 = vrot.lane.b32.xlu0 %v1591, 64
        %v1762 = vpop.permute.xlu0 %1761
        %1763 = vrot.lane.b32.xlu0 %v1592, 64
        %v1764 = vpop.permute.xlu0 %1763
        %1765 = vrot.lane.b32.xlu0 %v1593, 64
        %v1766 = vpop.permute.xlu0 %1765
        %1793 = vrot.lane.b32.xlu0 %v1607, 64
        %v1794 = vpop.permute.xlu0 %1793
        %1795 = vrot.lane.b32.xlu0 %v1608, 64
        %v1796 = vpop.permute.xlu0 %1795
        %1797 = vrot.lane.b32.xlu0 %v1609, 64
        %v1798 = vpop.permute.xlu0 %1797
        %1799 = vrot.lane.b32.xlu0 %v1610, 64
        %v1800 = vpop.permute.xlu0 %1799
        %1801 = vrot.lane.b32.xlu0 %v1611, 64
        %v1802 = vpop.permute.xlu0 %1801
        %1803 = vrot.lane.b32.xlu0 %v1612, 64
        %v1804 = vpop.permute.xlu0 %1803
        %1805 = vrot.lane.b32.xlu0 %v1613, 64
        %v1806 = vpop.permute.xlu0 %1805
        %1807 = vrot.lane.b32.xlu0 %v1614, 64
        %v1808 = vpop.permute.xlu0 %1807
        %1809 = vrot.lane.b32.xlu0 %v1615, 64
        %v1810 = vpop.permute.xlu0 %1809
        %1811 = vrot.lane.b32.xlu0 %v1616, 64
        %v1812 = vpop.permute.xlu0 %1811
        %1813 = vrot.lane.b32.xlu0 %v1617, 64
        %v1814 = vpop.permute.xlu0 %1813
        %1815 = vrot.lane.b32.xlu0 %v1618, 64
        %v1816 = vpop.permute.xlu0 %1815
        %1817 = vrot.lane.b32.xlu0 %v1619, 64
        %v1818 = vpop.permute.xlu0 %1817
        %v1832 = vsel %vm436, %v1516, %v1638
        %v1833 = vsel %vm436, %v1517, %v1640
        %v1834 = vsel %vm436, %v1518, %v1642
        %v1835 = vsel %vm436, %v1519, %v1644
        %v1836 = vsel %vm436, %v1520, %v1646
        %v1837 = vsel %vm436, %v1521, %v1648
        %v1838 = vsel %vm436, %v1522, %v1650
        %v1839 = vsel %vm436, %v1523, %v1652
        %v1840 = vsel %vm436, %v1524, %v1654
        %v1841 = vsel %vm436, %v1525, %v1656
        %v1842 = vsel %vm436, %v1526, %v1658
        %v1843 = vsel %vm436, %v1527, %v1660
        %v1844 = vsel %vm436, %v1528, %v1662
        %v1845 = vsel %vm436, %v1542, %v1690
        %v1846 = vsel %vm436, %v1543, %v1692
        %v1847 = vsel %vm436, %v1544, %v1694
        %v1848 = vsel %vm436, %v1545, %v1696
        %v1849 = vsel %vm436, %v1546, %v1698
        %v1850 = vsel %vm436, %v1547, %v1700
        %v1851 = vsel %vm436, %v1548, %v1702
        %v1852 = vsel %vm436, %v1549, %v1704
        %v1853 = vsel %vm436, %v1550, %v1706
        %v1854 = vsel %vm436, %v1551, %v1708
        %v1855 = vsel %vm436, %v1552, %v1710
        %v1856 = vsel %vm436, %v1553, %v1712
        %v1857 = vsel %vm436, %v1554, %v1714
        %v1858 = vsel %vm436, %v1568, %v1742
        %v1859 = vsel %vm436, %v1569, %v1744
        %v1860 = vsel %vm436, %v1570, %v1746
        %v1861 = vsel %vm436, %v1571, %v1748
        %v1862 = vsel %vm436, %v1572, %v1750
        %v1863 = vsel %vm436, %v1573, %v1752
        %v1864 = vsel %vm436, %v1574, %v1754
        %v1865 = vsel %vm436, %v1575, %v1756
        %v1866 = vsel %vm436, %v1576, %v1758
        %v1867 = vsel %vm436, %v1577, %v1760
        %v1868 = vsel %vm436, %v1578, %v1762
        %v1869 = vsel %vm436, %v1579, %v1764
        %v1870 = vsel %vm436, %v1580, %v1766
        %v1871 = vsel %vm436, %v1594, %v1794
        %v1872 = vsel %vm436, %v1595, %v1796
        %v1873 = vsel %vm436, %v1596, %v1798
        %v1874 = vsel %vm436, %v1597, %v1800
        %v1875 = vsel %vm436, %v1598, %v1802
        %v1876 = vsel %vm436, %v1599, %v1804
        %v1877 = vsel %vm436, %v1600, %v1806
        %v1878 = vsel %vm436, %v1601, %v1808
        %v1879 = vsel %vm436, %v1602, %v1810
        %v1880 = vsel %vm436, %v1603, %v1812
        %v1881 = vsel %vm436, %v1604, %v1814
        %v1882 = vsel %vm436, %v1605, %v1816
        %v1883 = vsel %vm436, %v1606, %v1818
        %v1884 = vpack.c.bf16 %v1833, %v1832
        %v1885 = vpack.c.bf16 %v1846, %v1845
        %v1886 = vpack.c.bf16 %v1859, %v1858
        %v1887 = vpack.c.bf16 %v1872, %v1871
        %v1888 = vpack.c.bf16 %v1520, %v1519
        %v1889 = vpack.c.bf16 %v1835, %v1834
        %v1890 = vpack.c.bf16 %v1848, %v1847
        %v1891 = vpack.c.bf16 %v1861, %v1860
        %v1892 = vpack.c.bf16 %v1874, %v1873
        %v1893 = vpack.c.bf16 %v1522, %v1521
        %v1894 = vpack.c.bf16 %v1837, %v1836
        %v1895 = vpack.c.bf16 %v1850, %v1849
        %v1896 = vpack.c.bf16 %v1863, %v1862
        %v1897 = vpack.c.bf16 %v1876, %v1875
        %v1898 = vpack.c.bf16 %v1524, %v1523
        %v1899 = vpack.c.bf16 %v1839, %v1838
        %v1900 = vpack.c.bf16 %v1852, %v1851
        %v1901 = vpack.c.bf16 %v1865, %v1864
        %v1902 = vpack.c.bf16 %v1878, %v1877
        %v1903 = vpack.c.bf16 %v1526, %v1525
        %v1904 = vpack.c.bf16 %v1841, %v1840
        %v1905 = vpack.c.bf16 %v1854, %v1853
        %v1906 = vpack.c.bf16 %v1867, %v1866
        %v1907 = vpack.c.bf16 %v1880, %v1879
        %v1908 = vpack.c.bf16 %v1620, %v1527
        %v1909 = vpack.c.bf16 %v1843, %v1842
        %v1910 = vpack.c.bf16 %v1856, %v1855
        %v1911 = vpack.c.bf16 %v1869, %v1868
        %v1912 = vpack.c.bf16 %v1882, %v1881
        %v1913 = vpack.c.bf16 %v1622, %v1621
        %v1914 = vpack.c.bf16 %v1844, %v1844
        %v1915 = vpack.c.bf16 %v1857, %v1857
        %v1916 = vpack.c.bf16 %v1870, %v1870
        %v1917 = vpack.c.bf16 %v1883, %v1883
        %v1918 = vpack.c.bf16 %v1623, %v1623
        %s1919 = scalar_lea.vmem %s1, 288
        %v1920 = vld [vmem:[%s1919] sm:$0xf]
        %v1921 = vld [vmem:[%s1919 + $0x4] sm:$0xf]
        %v1922 = vld [vmem:[%s1919 + $0x8] sm:$0xf]
        %v1923 = vld [vmem:[%s1919 + $0xc] sm:$0xf]
        %v1924 = vld [vmem:[%s1919 + $0x10] sm:$0xf]
        %v1925 = vld [vmem:[%s1919 + $0x14] sm:$0xf]
        %v1926 = vld [vmem:[%s1919 + $0x18] sm:$0xf]
        %v1927 = vld [vmem:[%s1919 + $0x1c] sm:$0xf]
        %v1928 = vld [vmem:[%s1919 + $0x20] sm:$0xf]
        %v1929 = vld [vmem:[%s1919 + $0x24] sm:$0xf]
        %v1930 = vld [vmem:[%s1919 + $0x28] sm:$0xf]
        %v1931 = vld [vmem:[%s1919 + $0x2c] sm:$0xf]
        %v1932 = vld [vmem:[%s1919 + $0x30] sm:$0xf]
        %v1933 = vld [vmem:[%s1919 + $0x34] sm:$0xf]
        %v1934 = vld [vmem:[%s1919 + $0x38] sm:$0xf]
        %v1935 = vld [vmem:[%s1919 + $0x3c] sm:$0xf]
        %v1936 = vld [vmem:[%s1919 + $0x40] sm:$0xf]
        %v1937 = vld [vmem:[%s1919 + $0x44] sm:$0xf]
        %v1938 = vld [vmem:[%s1919 + $0x48] sm:$0xf]
        %v1939 = vld [vmem:[%s1919 + $0x4c] sm:$0xf]
        %v1940 = vld [vmem:[%s1919 + $0x50] sm:$0xf]
        %v1941 = vld [vmem:[%s1919 + $0x54] sm:$0xf]
        %v1942 = vld [vmem:[%s1919 + $0x58] sm:$0xf]
        %v1943 = vld [vmem:[%s1919 + $0x5c] sm:$0xf]
        %v1944 = vld [vmem:[%s1919 + $0x60] sm:$0xf]
        %v1945 = vld [vmem:[%s1919 + $0x64] sm:$0xf]
        %v1946 = vld [vmem:[%s1919 + $0x68] sm:$0xf]
        %v1947 = vld [vmem:[%s1919 + $0x6c] sm:$0xf]
        %v1948 = vld [vmem:[%s1919 + $0x70] sm:$0xf]
        %v1949 = vld [vmem:[%s1919 + $0x74] sm:$0xf]
        %v1950 = vld [vmem:[%s1919 + $0x78] sm:$0xf]
        %v1951 = vld [vmem:[%s1919 + $0x7c] sm:$0xf]
        %v1952 = vld [vmem:[%s1919 + $0x80] sm:$0xf]
        %v1953 = vld [vmem:[%s1919 + $0x84] sm:$0xf]
        %v1954 = vld [vmem:[%s1919 + $0x88] sm:$0xf]
        %v1955 = vld [vmem:[%s1919 + $0x8c] sm:$0xf]
        %v1956 = vld [vmem:[%s1919 + $0x90] sm:$0xf]
        %v1957 = vld [vmem:[%s1919 + $0x94] sm:$0xf]
        %v1958 = vld [vmem:[%s1919 + $0x98] sm:$0xf]
        %v1959 = vld [vmem:[%s1919 + $0x9c] sm:$0xf]
        %v1960 = vld [vmem:[%s1919 + $0xa0] sm:$0xf]
        %v1961 = vld [vmem:[%s1919 + $0xa4] sm:$0xf]
        %v1962 = vld [vmem:[%s1919 + $0xa8] sm:$0xf]
        %v1963 = vld [vmem:[%s1919 + $0xac] sm:$0xf]
        %v1964 = vld [vmem:[%s1919 + $0xb0] sm:$0xf]
        %v1965 = vld [vmem:[%s1919 + $0xb4] sm:$0xf]
        %v1966 = vld [vmem:[%s1919 + $0xb8] sm:$0xf]
        %v1967 = vld [vmem:[%s1919 + $0xbc] sm:$0xf]
        %v1968 = vld [vmem:[%s1919 + $0xc0] sm:$0xf]
        %v1969 = vld [vmem:[%s1919 + $0xc4] sm:$0xf]
        %v1970 = vld [vmem:[%s1919 + $0xc8] sm:$0xf]
        %v1971 = vld [vmem:[%s1919 + $0xcc] sm:$0xf]
        %v1972 = vld [vmem:[%s1919 + $0xd0] sm:$0xf]
        %v1973 = vld [vmem:[%s1919 + $0xd4] sm:$0xf]
        %v1974 = vld [vmem:[%s1919 + $0xd8] sm:$0xf]
        %v1975 = vld [vmem:[%s1919 + $0xdc] sm:$0xf]
        %v1976 = vld [vmem:[%s1919 + $0xe0] sm:$0xf]
        %v1977 = vld [vmem:[%s1919 + $0xe4] sm:$0xf]
        %v1978 = vld [vmem:[%s1919 + $0xe8] sm:$0xf]
        %v1979 = vld [vmem:[%s1919 + $0xec] sm:$0xf]
        %v1980 = vld [vmem:[%s1919 + $0xf0] sm:$0xf]
        %v1981 = vld [vmem:[%s1919 + $0xf4] sm:$0xf]
        %v1982 = vld [vmem:[%s1919 + $0xf8] sm:$0xf]
        %v1983 = vld [vmem:[%s1919 + $0xfc] sm:$0xf]
        %v1984 = vld [vmem:[%s1919 + $0x100] sm:$0xf]
        %v1985 = vld [vmem:[%s1919 + $0x104] sm:$0xf]
        %v1986 = vld [vmem:[%s1919 + $0x108] sm:$0xf]
        %v1987 = vld [vmem:[%s1919 + $0x10c] sm:$0xf]
        %v1988 = vld [vmem:[%s1919 + $0x110] sm:$0xf]
        %v1989 = vld [vmem:[%s1919 + $0x114] sm:$0xf]
        %v1990 = vld [vmem:[%s1919 + $0x118] sm:$0xf]
        %v1991 = vld [vmem:[%s1919 + $0x11c] sm:$0xf]
        %v1992 = vld [vmem:[%s2 + $0x1] sm:$0x1]
        %v1993 = vlaneseq
        %v1994 = vshrl.u32 %v1993, 7
        %v1995 = vsub.s32 0, %v1994
        %v1996 = vrot.slane %v1992, %v1995
        %v2069 = vunpack.c.l.b16 %v1920
        %v2070 = vunpack.c.l.b16 %v1921
        %v2071 = vunpack.c.l.b16 %v1922
        %v2072 = vunpack.c.l.b16 %v1923
        %v2073 = vunpack.c.l.b16 %v1924
        %v2074 = vunpack.c.l.b16 %v1925
        %v2075 = vunpack.c.l.b16 %v1926
        %v2076 = vunpack.c.l.b16 %v1927
        %v2077 = vunpack.c.l.b16 %v1928
        %v2078 = vunpack.c.l.b16 %v1929
        %v2079 = vunpack.c.l.b16 %v1930
        %v2080 = vunpack.c.l.b16 %v1931
        %v2081 = vunpack.c.l.b16 %v1932
        %v2082 = vunpack.c.l.b16 %v1933
        %v2083 = vunpack.c.l.b16 %v1934
        %v2084 = vunpack.c.l.b16 %v1935
        %v2085 = vunpack.c.l.b16 %v1936
        %v2086 = vunpack.c.l.b16 %v1937
        %v2087 = vunpack.c.l.b16 %v1938
        %v2088 = vunpack.c.l.b16 %v1939
        %v2089 = vunpack.c.l.b16 %v1940
        %v2090 = vunpack.c.l.b16 %v1941
        %v2091 = vunpack.c.l.b16 %v1942
        %v2092 = vunpack.c.l.b16 %v1943
        %v2093 = vunpack.c.l.b16 %v1944
        %v2094 = vunpack.c.l.b16 %v1945
        %v2095 = vunpack.c.l.b16 %v1946
        %v2096 = vunpack.c.l.b16 %v1947
        %v2097 = vunpack.c.l.b16 %v1948
        %v2098 = vunpack.c.l.b16 %v1949
        %v2099 = vunpack.c.l.b16 %v1950
        %v2100 = vunpack.c.l.b16 %v1951
        %v2101 = vunpack.c.l.b16 %v1952
        %v2102 = vunpack.c.l.b16 %v1953
        %v2103 = vunpack.c.l.b16 %v1954
        %v2104 = vunpack.c.l.b16 %v1955
        %v2105 = vunpack.c.l.b16 %v1956
        %v2106 = vunpack.c.l.b16 %v1957
        %v2107 = vunpack.c.l.b16 %v1958
        %v2108 = vunpack.c.l.b16 %v1959
        %v2109 = vunpack.c.l.b16 %v1960
        %v2110 = vunpack.c.l.b16 %v1961
        %v2111 = vunpack.c.l.b16 %v1962
        %v2112 = vunpack.c.l.b16 %v1963
        %v2113 = vunpack.c.l.b16 %v1964
        %v2114 = vunpack.c.l.b16 %v1965
        %v2115 = vunpack.c.l.b16 %v1966
        %v2116 = vunpack.c.l.b16 %v1967
        %v2117 = vunpack.c.l.b16 %v1968
        %v2118 = vunpack.c.l.b16 %v1969
        %v2119 = vunpack.c.l.b16 %v1970
        %v2120 = vunpack.c.l.b16 %v1971
        %v2121 = vunpack.c.l.b16 %v1972
        %v2122 = vunpack.c.l.b16 %v1973
        %v2123 = vunpack.c.l.b16 %v1974
        %v2124 = vunpack.c.l.b16 %v1975
        %v2125 = vunpack.c.l.b16 %v1976
        %v2126 = vunpack.c.l.b16 %v1977
        %v2127 = vunpack.c.l.b16 %v1978
        %v2128 = vunpack.c.l.b16 %v1979
        %v2129 = vunpack.c.l.b16 %v1980
        %v2130 = vunpack.c.l.b16 %v1981
        %v2131 = vunpack.c.l.b16 %v1982
        %v2132 = vunpack.c.l.b16 %v1983
        %v2133 = vunpack.c.l.b16 %v1984
        %v2134 = vunpack.c.l.b16 %v1985
        %v2135 = vunpack.c.l.b16 %v1986
        %v2136 = vunpack.c.l.b16 %v1987
        %v2137 = vunpack.c.l.b16 %v1988
        %v2138 = vunpack.c.l.b16 %v1989
        %v2139 = vunpack.c.l.b16 %v1990
        %v2140 = vunpack.c.l.b16 %v1991
        %v2141 = vpack.c.b16 %v2070, %v2069
        %v2142 = vpack.c.b16 %v2072, %v2071
        %v2143 = vpack.c.b16 %v2074, %v2073
        %v2144 = vpack.c.b16 %v2076, %v2075
        %v2145 = vpack.c.b16 %v2078, %v2077
        %v2146 = vpack.c.b16 %v2080, %v2079
        %v2147 = vpack.c.b16 %v2082, %v2081
        %v2148 = vpack.c.b16 %v2084, %v2083
        %v2149 = vpack.c.b16 %v2086, %v2085
        %v2150 = vpack.c.b16 %v2088, %v2087
        %v2151 = vpack.c.b16 %v2090, %v2089
        %v2152 = vpack.c.b16 %v2092, %v2091
        %v2153 = vpack.c.b16 %v2094, %v2093
        %v2154 = vpack.c.b16 %v2096, %v2095
        %v2155 = vpack.c.b16 %v2098, %v2097
        %v2156 = vpack.c.b16 %v2100, %v2099
        %v2157 = vpack.c.b16 %v2102, %v2101
        %v2158 = vpack.c.b16 %v2104, %v2103
        %v2159 = vpack.c.b16 %v2106, %v2105
        %v2160 = vpack.c.b16 %v2108, %v2107
        %v2161 = vpack.c.b16 %v2110, %v2109
        %v2162 = vpack.c.b16 %v2112, %v2111
        %v2163 = vpack.c.b16 %v2114, %v2113
        %v2164 = vpack.c.b16 %v2116, %v2115
        %v2165 = vpack.c.b16 %v2118, %v2117
        %v2166 = vpack.c.b16 %v2120, %v2119
        %v2167 = vpack.c.b16 %v2122, %v2121
        %v2168 = vpack.c.b16 %v2124, %v2123
        %v2169 = vpack.c.b16 %v2126, %v2125
        %v2170 = vpack.c.b16 %v2128, %v2127
        %v2171 = vpack.c.b16 %v2130, %v2129
        %v2172 = vpack.c.b16 %v2132, %v2131
        %v2173 = vpack.c.b16 %v2134, %v2133
        %v2174 = vpack.c.b16 %v2136, %v2135
        %v2175 = vpack.c.b16 %v2138, %v2137
        %v2176 = vpack.c.b16 %v2140, %v2139
        %v2214 = vsel %vm436, %v1888, 0
        %v2217 = vsel %vm436, %v1893, 0
        %v2220 = vsel %vm436, %v1898, 0
        %v2223 = vsel %vm436, %v1903, 0
        %v2226 = vsel %vm436, %v1908, 0
        %v2229 = vsel %vm436, %v1913, 0
        %v2232 = vsel %vm436, %v1918, 0
        %2234 = vmatprep.subr.bf16.mxu0 0
        %2235 = vmatpush1.bf16.msra.mxu0 %v2141
        %2236 = vmatprep.subr.bf16.mxu0 0
        %2237 = vmatpush1.bf16.msra.mxu0 %v2142
        %2238 = vmatprep.subr.bf16.mxu0 0
        %2239 = vmatpush1.bf16.msra.mxu0 %v2143
        %2240 = vmatprep.subr.bf16.mxu0 0
        %2241 = vmatpush1.bf16.msra.mxu0 %v2144
        %2242 = vmatprep.subr.bf16.mxu0 0
        %2243 = vmatpush1.bf16.msra.mxu0 %v2145
        %2244 = vmatprep.subr.bf16.mxu0 0
        %2245 = vmatpush1.bf16.msra.mxu0 %v2146
        %2246 = vmatprep.subr.bf16.mxu0 0
        %2247 = vmatpush1.bf16.msra.mxu0 %v2147
        %2248 = vmatprep.subr.bf16.mxu0 0
        %2249 = vmatpush1.bf16.msra.mxu0 %v2148
        %2250 = vmatprep.subr.bf16.mxu0 0
        %2251 = vmatpush1.bf16.msra.mxu0 %v2149
        %2252 = vmatprep.subr.bf16.mxu0 0
        %2253 = vmatpush1.bf16.msra.mxu0 %v2150
        %2254 = vmatprep.subr.bf16.mxu0 0
        %2255 = vmatpush1.bf16.msra.mxu0 %v2151
        %2256 = vmatprep.subr.bf16.mxu0 0
        %2257 = vmatpush1.bf16.msra.mxu0 %v2152
        %2258 = vmatprep.subr.bf16.mxu0 0
        %2259 = vmatpush1.bf16.msra.mxu0 %v2153
        %2260 = vmatprep.subr.bf16.mxu0 0
        %2261 = vmatpush1.bf16.msra.mxu0 %v2154
        %2262 = vmatprep.subr.bf16.mxu0 0
        %2263 = vmatpush1.bf16.msra.mxu0 %v2155
        %2264 = vmatprep.subr.bf16.mxu0 0
        %2265 = vmatpush1.bf16.msra.mxu0 %v2156
        %2266 = vmatprep.mubr.bf16.mxu0 %v1885
        %2267 = vmatmul.mubr.bf16.gmra.mrb[0].mxu0 %v1884
        %v2268 = vpop.f32.mrb[0].mxu0
        %v2269 = vadd.f32 %v1996, %v2268
        %v2270 = vpop.f32.mrb[0].mxu0
        %v2271 = vpop.f32.mrb[0].mxu0
        %v2272 = vadd.f32 %v1996, %v2271
        %v2273 = vpop.f32.mrb[0].mxu0
        %2274 = vmatprep.mubr.bf16.mxu0 %v1890
        %2275 = vmatmul.mubr.bf16.gmra.mrb[0].mxu0 %v1889
        %v2276 = vpop.f32.mrb[0].mxu0
        %v2277 = vadd.f32 %v1996, %v2276
        %v2278 = vpop.f32.mrb[0].mxu0
        %v2279 = vpop.f32.mrb[0].mxu0
        %v2280 = vadd.f32 %v1996, %v2279
        %v2281 = vpop.f32.mrb[0].mxu0
        %2282 = vmatprep.mubr.bf16.mxu0 %v1895
        %2283 = vmatmul.mubr.bf16.gmra.mrb[0].mxu0 %v1894
        %v2284 = vpop.f32.mrb[0].mxu0
        %v2285 = vadd.f32 %v1996, %v2284
        %v2286 = vpop.f32.mrb[0].mxu0
        %v2287 = vpop.f32.mrb[0].mxu0
        %v2288 = vadd.f32 %v1996, %v2287
        %v2289 = vpop.f32.mrb[0].mxu0
        %2290 = vmatprep.mubr.bf16.mxu0 %v1900
        %2291 = vmatmul.mubr.bf16.gmra.mrb[0].mxu0 %v1899
        %v2292 = vpop.f32.mrb[0].mxu0
        %v2293 = vadd.f32 %v1996, %v2292
        %v2294 = vpop.f32.mrb[0].mxu0
        %v2295 = vpop.f32.mrb[0].mxu0
        %v2296 = vadd.f32 %v1996, %v2295
        %v2297 = vpop.f32.mrb[0].mxu0
        %2298 = vmatprep.mubr.bf16.mxu0 %v1905
        %2299 = vmatmul.mubr.bf16.gmra.mrb[0].mxu0 %v1904
        %v2300 = vpop.f32.mrb[0].mxu0
        %v2301 = vadd.f32 %v1996, %v2300
        %v2302 = vpop.f32.mrb[0].mxu0
        %v2303 = vpop.f32.mrb[0].mxu0
        %v2304 = vadd.f32 %v1996, %v2303
        %v2305 = vpop.f32.mrb[0].mxu0
        %2306 = vmatprep.mubr.bf16.mxu0 %v1910
        %2307 = vmatmul.mubr.bf16.gmra.mrb[0].mxu0 %v1909
        %v2308 = vpop.f32.mrb[0].mxu0
        %v2309 = vadd.f32 %v1996, %v2308
        %v2310 = vpop.f32.mrb[0].mxu0
        %v2311 = vpop.f32.mrb[0].mxu0
        %v2312 = vadd.f32 %v1996, %v2311
        %v2313 = vpop.f32.mrb[0].mxu0
        %2314 = vmatprep.mubr.bf16.mxu0 %v1915
        %2315 = vmatmul.mubr.bf16.gmra.mrb[0].mxu0 %v1914
        %v2316 = vpop.f32.mrb[0].mxu0
        %v2317 = vadd.f32 %v1996, %v2316
        %v2318 = vpop.f32.mrb[0].mxu0
        %v2319 = vpop.f32.mrb[0].mxu0
        %v2320 = vpop.f32.mrb[0].mxu0
        %2321 = vdwg.mxu0
        %2322 = vmatprep.subr.bf16.mxu0 0
        %2323 = vmatpush1.bf16.msra.mxu0 %v2157
        %2324 = vmatprep.subr.bf16.mxu0 0
        %2325 = vmatpush1.bf16.msra.mxu0 %v2158
        %2326 = vmatprep.subr.bf16.mxu0 0
        %2327 = vmatpush1.bf16.msra.mxu0 %v2159
        %2328 = vmatprep.subr.bf16.mxu0 0
        %2329 = vmatpush1.bf16.msra.mxu0 %v2160
        %2330 = vmatprep.subr.bf16.mxu0 0
        %2331 = vmatpush1.bf16.msra.mxu0 %v2161
        %2332 = vmatprep.subr.bf16.mxu0 0
        %2333 = vmatpush1.bf16.msra.mxu0 %v2162
        %2334 = vmatprep.subr.bf16.mxu0 0
        %2335 = vmatpush1.bf16.msra.mxu0 %v2163
        %2336 = vmatprep.subr.bf16.mxu0 0
        %2337 = vmatpush1.bf16.msra.mxu0 %v2164
        %2338 = vmatprep.subr.bf16.mxu0 0
        %2339 = vmatpush1.bf16.msra.mxu0 %v2165
        %2340 = vmatprep.subr.bf16.mxu0 0
        %2341 = vmatpush1.bf16.msra.mxu0 %v2166
        %2342 = vmatprep.subr.bf16.mxu0 0
        %2343 = vmatpush1.bf16.msra.mxu0 %v2167
        %2344 = vmatprep.subr.bf16.mxu0 0
        %2345 = vmatpush1.bf16.msra.mxu0 %v2168
        %2346 = vmatprep.subr.bf16.mxu0 0
        %2347 = vmatpush1.bf16.msra.mxu0 %v2169
        %2348 = vmatprep.subr.bf16.mxu0 0
        %2349 = vmatpush1.bf16.msra.mxu0 %v2170
        %2350 = vmatprep.subr.bf16.mxu0 0
        %2351 = vmatpush1.bf16.msra.mxu0 %v2171
        %2352 = vmatprep.subr.bf16.mxu0 0
        %2353 = vmatpush1.bf16.msra.mxu0 %v2172
        %2354 = vmatprep.mubr.bf16.mxu0 %v1887
        %2355 = vmatmul.mubr.bf16.gmra.mrb[0].mxu0 %v1886
        %v2356 = vpop.f32.mrb[0].mxu0
        %v2357 = vadd.f32 %v2269, %v2356
        %v2358 = vpop.f32.mrb[0].mxu0
        %v2359 = vpop.f32.mrb[0].mxu0
        %v2360 = vadd.f32 %v2272, %v2359
        %v2361 = vpop.f32.mrb[0].mxu0
        %2362 = vmatprep.mubr.bf16.mxu0 %v1892
        %2363 = vmatmul.mubr.bf16.gmra.mrb[0].mxu0 %v1891
        %v2364 = vpop.f32.mrb[0].mxu0
        %v2365 = vadd.f32 %v2277, %v2364
        %v2366 = vpop.f32.mrb[0].mxu0
        %v2367 = vpop.f32.mrb[0].mxu0
        %v2368 = vadd.f32 %v2280, %v2367
        %v2369 = vpop.f32.mrb[0].mxu0
        %2370 = vmatprep.mubr.bf16.mxu0 %v1897
        %2371 = vmatmul.mubr.bf16.gmra.mrb[0].mxu0 %v1896
        %v2372 = vpop.f32.mrb[0].mxu0
        %v2373 = vadd.f32 %v2285, %v2372
        %v2374 = vpop.f32.mrb[0].mxu0
        %v2375 = vpop.f32.mrb[0].mxu0
        %v2376 = vadd.f32 %v2288, %v2375
        %v2377 = vpop.f32.mrb[0].mxu0
        %2378 = vmatprep.mubr.bf16.mxu0 %v1902
        %2379 = vmatmul.mubr.bf16.gmra.mrb[0].mxu0 %v1901
        %v2380 = vpop.f32.mrb[0].mxu0
        %v2381 = vadd.f32 %v2293, %v2380
        %v2382 = vpop.f32.mrb[0].mxu0
        %v2383 = vpop.f32.mrb[0].mxu0
        %v2384 = vadd.f32 %v2296, %v2383
        %v2385 = vpop.f32.mrb[0].mxu0
        %2386 = vmatprep.mubr.bf16.mxu0 %v1907
        %2387 = vmatmul.mubr.bf16.gmra.mrb[0].mxu0 %v1906
        %v2388 = vpop.f32.mrb[0].mxu0
        %v2389 = vadd.f32 %v2301, %v2388
        %v2390 = vpop.f32.mrb[0].mxu0
        %v2391 = vpop.f32.mrb[0].mxu0
        %v2392 = vadd.f32 %v2304, %v2391
        %v2393 = vpop.f32.mrb[0].mxu0
        %2394 = vmatprep.mubr.bf16.mxu0 %v1912
        %2395 = vmatmul.mubr.bf16.gmra.mrb[0].mxu0 %v1911
        %v2396 = vpop.f32.mrb[0].mxu0
        %v2397 = vadd.f32 %v2309, %v2396
        %v2398 = vpop.f32.mrb[0].mxu0
        %v2399 = vpop.f32.mrb[0].mxu0
        %v2400 = vadd.f32 %v2312, %v2399
        %v2401 = vpop.f32.mrb[0].mxu0
        %2402 = vmatprep.mubr.bf16.mxu0 %v1917
        %2403 = vmatmul.mubr.bf16.gmra.mrb[0].mxu0 %v1916
        %v2404 = vpop.f32.mrb[0].mxu0
        %v2405 = vadd.f32 %v2317, %v2404
        %v2406 = vpop.f32.mrb[0].mxu0
        %v2407 = vpop.f32.mrb[0].mxu0
        %v2408 = vpop.f32.mrb[0].mxu0
        %2409 = vdwg.mxu0
        %2410 = vmatprep.subr.bf16.mxu0 0
        %2411 = vmatpush1.bf16.msra.mxu0 %v2173
        %2412 = vmatprep.subr.bf16.mxu0 0
        %2413 = vmatpush1.bf16.msra.mxu0 %v2174
        %2414 = vmatprep.subr.bf16.mxu0 0
        %2415 = vmatpush1.bf16.msra.mxu0 %v2175
        %2416 = vmatprep.subr.bf16.mxu0 0
        %2417 = vmatpush1.bf16.msra.mxu0 %v2176
        %2418 = vmatprep.subr.bf16.mxu0 0
        %2419 = vmatpush1.bf16.msra.mxu0 0
        %2420 = vmatprep.subr.bf16.mxu0 0
        %2421 = vmatpush1.bf16.msra.mxu0 0
        %2422 = vmatprep.subr.bf16.mxu0 0
        %2423 = vmatpush1.bf16.msra.mxu0 0
        %2424 = vmatprep.subr.bf16.mxu0 0
        %2425 = vmatpush1.bf16.msra.mxu0 0
        %2426 = vmatprep.subr.bf16.mxu0 0
        %2427 = vmatpush1.bf16.msra.mxu0 0
        %2428 = vmatprep.subr.bf16.mxu0 0
        %2429 = vmatpush1.bf16.msra.mxu0 0
        %2430 = vmatprep.subr.bf16.mxu0 0
        %2431 = vmatpush1.bf16.msra.mxu0 0
        %2432 = vmatprep.subr.bf16.mxu0 0
        %2433 = vmatpush1.bf16.msra.mxu0 0
        %2434 = vmatprep.subr.bf16.mxu0 0
        %2435 = vmatpush1.bf16.msra.mxu0 0
        %2436 = vmatprep.subr.bf16.mxu0 0
        %2437 = vmatpush1.bf16.msra.mxu0 0
        %2438 = vmatprep.subr.bf16.mxu0 0
        %2439 = vmatpush1.bf16.msra.mxu0 0
        %2440 = vmatprep.subr.bf16.mxu0 0
        %2441 = vmatpush1.bf16.msra.mxu0 0
        %2442 = vmatprep.mubr.bf16.mxu0 0
        %2443 = vmatmul.mubr.bf16.gmra.mrb[0].mxu0 %v2214
        %v2444 = vpop.f32.mrb[0].mxu0
        %v2445 = vadd.f32 %v2357, %v2444
        %v2446 = vpop.f32.mrb[0].mxu0
        %v2447 = vpop.f32.mrb[0].mxu0
        %v2448 = vadd.f32 %v2360, %v2447
        %v2449 = vpop.f32.mrb[0].mxu0
        %2450 = vmatprep.mubr.bf16.mxu0 0
        %2451 = vmatmul.mubr.bf16.gmra.mrb[0].mxu0 %v2217
        %v2452 = vpop.f32.mrb[0].mxu0
        %v2453 = vadd.f32 %v2365, %v2452
        %v2454 = vpop.f32.mrb[0].mxu0
        %v2455 = vpop.f32.mrb[0].mxu0
        %v2456 = vadd.f32 %v2368, %v2455
        %v2457 = vpop.f32.mrb[0].mxu0
        %2458 = vmatprep.mubr.bf16.mxu0 0
        %2459 = vmatmul.mubr.bf16.gmra.mrb[0].mxu0 %v2220
        %v2460 = vpop.f32.mrb[0].mxu0
        %v2461 = vadd.f32 %v2373, %v2460
        %v2462 = vpop.f32.mrb[0].mxu0
        %v2463 = vpop.f32.mrb[0].mxu0
        %v2464 = vadd.f32 %v2376, %v2463
        %v2465 = vpop.f32.mrb[0].mxu0
        %2466 = vmatprep.mubr.bf16.mxu0 0
        %2467 = vmatmul.mubr.bf16.gmra.mrb[0].mxu0 %v2223
        %v2468 = vpop.f32.mrb[0].mxu0
        %v2469 = vadd.f32 %v2381, %v2468
        %v2470 = vpop.f32.mrb[0].mxu0
        %v2471 = vpop.f32.mrb[0].mxu0
        %v2472 = vadd.f32 %v2384, %v2471
        %v2473 = vpop.f32.mrb[0].mxu0
        %2474 = vmatprep.mubr.bf16.mxu0 0
        %2475 = vmatmul.mubr.bf16.gmra.mrb[0].mxu0 %v2226
        %v2476 = vpop.f32.mrb[0].mxu0
        %v2477 = vadd.f32 %v2389, %v2476
        %v2478 = vpop.f32.mrb[0].mxu0
        %v2479 = vpop.f32.mrb[0].mxu0
        %v2480 = vadd.f32 %v2392, %v2479
        %v2481 = vpop.f32.mrb[0].mxu0
        %2482 = vmatprep.mubr.bf16.mxu0 0
        %2483 = vmatmul.mubr.bf16.gmra.mrb[0].mxu0 %v2229
        %v2484 = vpop.f32.mrb[0].mxu0
        %v2485 = vadd.f32 %v2397, %v2484
        %v2486 = vpop.f32.mrb[0].mxu0
        %v2487 = vpop.f32.mrb[0].mxu0
        %v2488 = vadd.f32 %v2400, %v2487
        %v2489 = vpop.f32.mrb[0].mxu0
        %2490 = vmatprep.mubr.bf16.mxu0 0
        %2491 = vmatmul.mubr.bf16.gmra.mrb[0].mxu0 %v2232
        %v2492 = vpop.f32.mrb[0].mxu0
        %v2493 = vadd.f32 %v2405, %v2492
        %v2494 = vpop.f32.mrb[0].mxu0
        %v2495 = vpop.f32.mrb[0].mxu0
        %v2496 = vpop.f32.mrb[0].mxu0
        %2497 = vdwg.mxu0
        %v2498 = vld [vmem:[#allocation2 + $0xc] sm:$0xff]
        %v2499 = vld [vmem:[#allocation2 + $0x14] sm:$0xff]
        %v2500 = vld [vmem:[#allocation2 + $0x1c] sm:$0xff]
        %v2501 = vld [vmem:[#allocation2 + $0x24] sm:$0xff]
        %v2502 = vld [vmem:[#allocation2 + $0x2c] sm:$0xff]
        %v2503 = vld [vmem:[#allocation2 + $0x34] sm:$0xff]
        %v2504 = vld [vmem:[#allocation2 + $0x3c] sm:$0xff]
        %v2505 = vld [vmem:[#allocation2 + $0x44] sm:$0xff]
        %v2506 = vld [vmem:[#allocation2 + $0x4c] sm:$0xff]
        %v2507 = vld [vmem:[#allocation2 + $0x54] sm:$0xff]
        %v2508 = vld [vmem:[#allocation2 + $0x5c] sm:$0xff]
        %v2509 = vld [vmem:[#allocation2 + $0x64] sm:$0xff]
        %v2510 = vld [vmem:[#allocation2 + $0x6c] sm:$0x7]
        %v2511 = vadd.f32 %v2445, %v2498
        %v2512 = vadd.f32 %v2448, %v2499
        %v2513 = vadd.f32 %v2453, %v2500
        %v2514 = vadd.f32 %v2456, %v2501
        %v2515 = vadd.f32 %v2461, %v2502
        %v2516 = vadd.f32 %v2464, %v2503
        %v2517 = vadd.f32 %v2469, %v2504
        %v2518 = vadd.f32 %v2472, %v2505
        %v2519 = vadd.f32 %v2477, %v2506
        %v2520 = vadd.f32 %v2480, %v2507
        %v2521 = vadd.f32 %v2485, %v2508
        %v2522 = vadd.f32 %v2488, %v2509
        %v2523 = vadd.f32 %v2493, %v2510
        %v2524 = vmax.f32 %v2511, 0.0
        %v2525 = vmax.f32 %v2512, 0.0
        %v2526 = vmax.f32 %v2513, 0.0
        %v2527 = vmax.f32 %v2514, 0.0
        %v2528 = vmax.f32 %v2515, 0.0
        %v2529 = vmax.f32 %v2516, 0.0
        %v2530 = vmax.f32 %v2517, 0.0
        %v2531 = vmax.f32 %v2518, 0.0
        %v2532 = vmax.f32 %v2519, 0.0
        %v2533 = vmax.f32 %v2520, 0.0
        %v2534 = vmax.f32 %v2521, 0.0
        %v2535 = vmax.f32 %v2522, 0.0
        %v2536 = vmax.f32 %v2523, 0.0
        %v2537 = vsel %vm1476, %v2524, 0.0
        %v2538 = vsel %vm1477, %v2525, 0.0
        %v2539 = vsel %vm1478, %v2526, 0.0
        %v2540 = vsel %vm1479, %v2527, 0.0
        %v2541 = vsel %vm1480, %v2528, 0.0
        %v2542 = vsel %vm1481, %v2529, 0.0
        %v2543 = vsel %vm1482, %v2530, 0.0
        %v2544 = vsel %vm1483, %v2531, 0.0
        %v2545 = vsel %vm1484, %v2532, 0.0
        %v2546 = vsel %vm1485, %v2533, 0.0
        %v2547 = vsel %vm1486, %v2534, 0.0
        %v2548 = vsel %vm1487, %v2535, 0.0
        %v2549 = vsel %vm1488, %v2536, 0.0
        %2550 = vst.msk [vmem:[#allocation2 + $0xc] sm:$0xff] %vm436, %v2537
        %2551 = vst.msk [vmem:[#allocation2 + $0x14] sm:$0xff] %vm436, %v2538
        %2552 = vst.msk [vmem:[#allocation2 + $0x1c] sm:$0xff] %vm436, %v2539
        %2553 = vst.msk [vmem:[#allocation2 + $0x24] sm:$0xff] %vm436, %v2540
        %2554 = vst.msk [vmem:[#allocation2 + $0x2c] sm:$0xff] %vm436, %v2541
        %2555 = vst.msk [vmem:[#allocation2 + $0x34] sm:$0xff] %vm436, %v2542
        %2556 = vst.msk [vmem:[#allocation2 + $0x3c] sm:$0xff] %vm436, %v2543
        %2557 = vst.msk [vmem:[#allocation2 + $0x44] sm:$0xff] %vm436, %v2544
        %2558 = vst.msk [vmem:[#allocation2 + $0x4c] sm:$0xff] %vm436, %v2545
        %2559 = vst.msk [vmem:[#allocation2 + $0x54] sm:$0xff] %vm436, %v2546
        %2560 = vst.msk [vmem:[#allocation2 + $0x5c] sm:$0xff] %vm436, %v2547
        %2561 = vst.msk [vmem:[#allocation2 + $0x64] sm:$0xff] %vm436, %v2548
        %2562 = vst.msk [vmem:[#allocation2 + $0x6c] sm:$0x7] %vm1514, %v2549
        %v2563 = vld [vmem:[#allocation2] sm:$0xff]
        %v2564 = vld [vmem:[#allocation2 + $0x8] sm:$0xff]
        %v2565 = vld [vmem:[#allocation2 + $0x10] sm:$0xff]
        %v2566 = vld [vmem:[#allocation2 + $0x18] sm:$0xff]
        %v2567 = vld [vmem:[#allocation2 + $0x20] sm:$0xff]
        %v2568 = vld [vmem:[#allocation2 + $0x28] sm:$0xff]
        %v2569 = vld [vmem:[#allocation2 + $0x30] sm:$0xff]
        %v2570 = vld [vmem:[#allocation2 + $0x38] sm:$0xff]
        %v2571 = vld [vmem:[#allocation2 + $0x40] sm:$0xff]
        %v2572 = vld [vmem:[#allocation2 + $0x48] sm:$0xff]
        %v2573 = vld [vmem:[#allocation2 + $0x50] sm:$0xff]
        %v2574 = vld [vmem:[#allocation2 + $0x58] sm:$0xff]
        %v2575 = vld [vmem:[#allocation2 + $0x60] sm:$0x7]
        %v2576 = vld [vmem:[#allocation2 + $0x1] sm:$0xff]
        %v2577 = vld [vmem:[#allocation2 + $0x9] sm:$0xff]
        %v2578 = vld [vmem:[#allocation2 + $0x11] sm:$0xff]
        %v2579 = vld [vmem:[#allocation2 + $0x19] sm:$0xff]
        %v2580 = vld [vmem:[#allocation2 + $0x21] sm:$0xff]
        %v2581 = vld [vmem:[#allocation2 + $0x29] sm:$0xff]
        %v2582 = vld [vmem:[#allocation2 + $0x31] sm:$0xff]
        %v2583 = vld [vmem:[#allocation2 + $0x39] sm:$0xff]
        %v2584 = vld [vmem:[#allocation2 + $0x41] sm:$0xff]
        %v2585 = vld [vmem:[#allocation2 + $0x49] sm:$0xff]
        %v2586 = vld [vmem:[#allocation2 + $0x51] sm:$0xff]
        %v2587 = vld [vmem:[#allocation2 + $0x59] sm:$0xff]
        %v2588 = vld [vmem:[#allocation2 + $0x61] sm:$0x7]
        %v2589 = vld [vmem:[#allocation2 + $0x2] sm:$0xff]
        %v2590 = vld [vmem:[#allocation2 + $0xa] sm:$0xff]
        %v2591 = vld [vmem:[#allocation2 + $0x12] sm:$0xff]
        %v2592 = vld [vmem:[#allocation2 + $0x1a] sm:$0xff]
        %v2593 = vld [vmem:[#allocation2 + $0x22] sm:$0xff]
        %v2594 = vld [vmem:[#allocation2 + $0x2a] sm:$0xff]
        %v2595 = vld [vmem:[#allocation2 + $0x32] sm:$0xff]
        %v2596 = vld [vmem:[#allocation2 + $0x3a] sm:$0xff]
        %v2597 = vld [vmem:[#allocation2 + $0x42] sm:$0xff]
        %v2598 = vld [vmem:[#allocation2 + $0x4a] sm:$0xff]
        %v2599 = vld [vmem:[#allocation2 + $0x52] sm:$0xff]
        %v2600 = vld [vmem:[#allocation2 + $0x5a] sm:$0xff]
        %v2601 = vld [vmem:[#allocation2 + $0x62] sm:$0x7]
        %v2602 = vld [vmem:[#allocation2 + $0xb] sm:$0xff]
        %v2603 = vld [vmem:[#allocation2 + $0x13] sm:$0xff]
        %v2604 = vld [vmem:[#allocation2 + $0x1b] sm:$0xff]
        %v2605 = vld [vmem:[#allocation2 + $0x23] sm:$0xff]
        %v2606 = vld [vmem:[#allocation2 + $0x2b] sm:$0xff]
        %v2607 = vld [vmem:[#allocation2 + $0x33] sm:$0xff]
        %v2608 = vld [vmem:[#allocation2 + $0x3b] sm:$0xff]
        %v2609 = vld [vmem:[#allocation2 + $0x43] sm:$0xff]
        %v2610 = vld [vmem:[#allocation2 + $0x4b] sm:$0xff]
        %v2611 = vld [vmem:[#allocation2 + $0x53] sm:$0xff]
        %v2612 = vld [vmem:[#allocation2 + $0x5b] sm:$0xff]
        %v2613 = vld [vmem:[#allocation2 + $0x63] sm:$0xff]
        %v2614 = vld [vmem:[#allocation2 + $0x6b] sm:$0x7]
        %v2615 = vld [vmem:[#allocation2 + $0xc] sm:$0xff]
        %v2616 = vld [vmem:[#allocation2 + $0x14] sm:$0xff]
        %v2617 = vld [vmem:[#allocation2 + $0x1c] sm:$0xff]
        %v2618 = vld [vmem:[#allocation2 + $0x24] sm:$0xff]
        %v2619 = vld [vmem:[#allocation2 + $0x2c] sm:$0xff]
        %v2620 = vld [vmem:[#allocation2 + $0x34] sm:$0xff]
        %v2621 = vld [vmem:[#allocation2 + $0x3c] sm:$0xff]
        %v2622 = vld [vmem:[#allocation2 + $0x44] sm:$0xff]
        %v2623 = vld [vmem:[#allocation2 + $0x4c] sm:$0xff]
        %v2624 = vld [vmem:[#allocation2 + $0x54] sm:$0xff]
        %v2625 = vld [vmem:[#allocation2 + $0x5c] sm:$0xff]
        %v2626 = vld [vmem:[#allocation2 + $0x64] sm:$0xff]
        %v2627 = vld [vmem:[#allocation2 + $0x6c] sm:$0x7]
        %v2628 = vld [vmem:[#allocation2 + $0xd] sm:$0xff]
        %v2629 = vld [vmem:[#allocation2 + $0x15] sm:$0xff]
        %v2630 = vld [vmem:[#allocation2 + $0x1d] sm:$0xff]
        %v2631 = vld [vmem:[#allocation2 + $0x25] sm:$0xff]
        %v2632 = vld [vmem:[#allocation2 + $0x2d] sm:$0xff]
        %v2633 = vld [vmem:[#allocation2 + $0x35] sm:$0xff]
        %v2634 = vld [vmem:[#allocation2 + $0x3d] sm:$0xff]
        %v2635 = vld [vmem:[#allocation2 + $0x45] sm:$0xff]
        %v2636 = vld [vmem:[#allocation2 + $0x4d] sm:$0xff]
        %v2637 = vld [vmem:[#allocation2 + $0x55] sm:$0xff]
        %v2638 = vld [vmem:[#allocation2 + $0x5d] sm:$0xff]
        %v2639 = vld [vmem:[#allocation2 + $0x65] sm:$0xff]
        %v2640 = vld [vmem:[#allocation2 + $0x6d] sm:$0x7]
        %v2641 = vld [vmem:[#allocation2 + $0x16] sm:$0xff]
        %v2642 = vld [vmem:[#allocation2 + $0x1e] sm:$0xff]
        %v2643 = vld [vmem:[#allocation2 + $0x26] sm:$0xff]
        %v2644 = vld [vmem:[#allocation2 + $0x2e] sm:$0xff]
        %v2645 = vld [vmem:[#allocation2 + $0x36] sm:$0xff]
        %v2646 = vld [vmem:[#allocation2 + $0x3e] sm:$0xff]
        %v2647 = vld [vmem:[#allocation2 + $0x46] sm:$0xff]
        %v2648 = vld [vmem:[#allocation2 + $0x4e] sm:$0xff]
        %v2649 = vld [vmem:[#allocation2 + $0x56] sm:$0xff]
        %v2650 = vld [vmem:[#allocation2 + $0x5e] sm:$0xff]
        %v2651 = vld [vmem:[#allocation2 + $0x66] sm:$0xff]
        %v2652 = vld [vmem:[#allocation2 + $0x6e] sm:$0xff]
        %v2653 = vld [vmem:[#allocation2 + $0x76] sm:$0x7]
        %v2654 = vld [vmem:[#allocation2 + $0x17] sm:$0xff]
        %v2655 = vld [vmem:[#allocation2 + $0x1f] sm:$0xff]
        %v2656 = vld [vmem:[#allocation2 + $0x27] sm:$0xff]
        %v2657 = vld [vmem:[#allocation2 + $0x2f] sm:$0xff]
        %v2658 = vld [vmem:[#allocation2 + $0x37] sm:$0xff]
        %v2659 = vld [vmem:[#allocation2 + $0x3f] sm:$0xff]
        %v2660 = vld [vmem:[#allocation2 + $0x47] sm:$0xff]
        %v2661 = vld [vmem:[#allocation2 + $0x4f] sm:$0xff]
        %v2662 = vld [vmem:[#allocation2 + $0x57] sm:$0xff]
        %v2663 = vld [vmem:[#allocation2 + $0x5f] sm:$0xff]
        %v2664 = vld [vmem:[#allocation2 + $0x67] sm:$0xff]
        %v2665 = vld [vmem:[#allocation2 + $0x6f] sm:$0xff]
        %v2666 = vld [vmem:[#allocation2 + $0x77] sm:$0x7]
        %v2667 = vld [vmem:[#allocation2 + $0x60] sm:$0xff]
        %v2668 = vld [vmem:[#allocation2 + $0x68] sm:$0xff]
        %v2669 = vld [vmem:[#allocation2 + $0x70] sm:$0xff]
        %v2670 = vld [vmem:[#allocation2 + $0x78] sm:$0x7]
        %2684 = vrot.lane.b32.xlu0 %v2576, 64
        %v2685 = vpop.permute.xlu0 %2684
        %2686 = vrot.lane.b32.xlu0 %v2577, 64
        %v2687 = vpop.permute.xlu0 %2686
        %2688 = vrot.lane.b32.xlu0 %v2578, 64
        %v2689 = vpop.permute.xlu0 %2688
        %2690 = vrot.lane.b32.xlu0 %v2579, 64
        %v2691 = vpop.permute.xlu0 %2690
        %2692 = vrot.lane.b32.xlu0 %v2580, 64
        %v2693 = vpop.permute.xlu0 %2692
        %2694 = vrot.lane.b32.xlu0 %v2581, 64
        %v2695 = vpop.permute.xlu0 %2694
        %2696 = vrot.lane.b32.xlu0 %v2582, 64
        %v2697 = vpop.permute.xlu0 %2696
        %2698 = vrot.lane.b32.xlu0 %v2583, 64
        %v2699 = vpop.permute.xlu0 %2698
        %2700 = vrot.lane.b32.xlu0 %v2584, 64
        %v2701 = vpop.permute.xlu0 %2700
        %2702 = vrot.lane.b32.xlu0 %v2585, 64
        %v2703 = vpop.permute.xlu0 %2702
        %2704 = vrot.lane.b32.xlu0 %v2586, 64
        %v2705 = vpop.permute.xlu0 %2704
        %2706 = vrot.lane.b32.xlu0 %v2587, 64
        %v2707 = vpop.permute.xlu0 %2706
        %2708 = vrot.lane.b32.xlu0 %v2588, 64
        %v2709 = vpop.permute.xlu0 %2708
        %2736 = vrot.lane.b32.xlu0 %v2602, 64
        %v2737 = vpop.permute.xlu0 %2736
        %2738 = vrot.lane.b32.xlu0 %v2603, 64
        %v2739 = vpop.permute.xlu0 %2738
        %2740 = vrot.lane.b32.xlu0 %v2604, 64
        %v2741 = vpop.permute.xlu0 %2740
        %2742 = vrot.lane.b32.xlu0 %v2605, 64
        %v2743 = vpop.permute.xlu0 %2742
        %2744 = vrot.lane.b32.xlu0 %v2606, 64
        %v2745 = vpop.permute.xlu0 %2744
        %2746 = vrot.lane.b32.xlu0 %v2607, 64
        %v2747 = vpop.permute.xlu0 %2746
        %2748 = vrot.lane.b32.xlu0 %v2608, 64
        %v2749 = vpop.permute.xlu0 %2748
        %2750 = vrot.lane.b32.xlu0 %v2609, 64
        %v2751 = vpop.permute.xlu0 %2750
        %2752 = vrot.lane.b32.xlu0 %v2610, 64
        %v2753 = vpop.permute.xlu0 %2752
        %2754 = vrot.lane.b32.xlu0 %v2611, 64
        %v2755 = vpop.permute.xlu0 %2754
        %2756 = vrot.lane.b32.xlu0 %v2612, 64
        %v2757 = vpop.permute.xlu0 %2756
        %2758 = vrot.lane.b32.xlu0 %v2613, 64
        %v2759 = vpop.permute.xlu0 %2758
        %2760 = vrot.lane.b32.xlu0 %v2614, 64
        %v2761 = vpop.permute.xlu0 %2760
        %2788 = vrot.lane.b32.xlu0 %v2628, 64
        %v2789 = vpop.permute.xlu0 %2788
        %2790 = vrot.lane.b32.xlu0 %v2629, 64
        %v2791 = vpop.permute.xlu0 %2790
        %2792 = vrot.lane.b32.xlu0 %v2630, 64
        %v2793 = vpop.permute.xlu0 %2792
        %2794 = vrot.lane.b32.xlu0 %v2631, 64
        %v2795 = vpop.permute.xlu0 %2794
        %2796 = vrot.lane.b32.xlu0 %v2632, 64
        %v2797 = vpop.permute.xlu0 %2796
        %2798 = vrot.lane.b32.xlu0 %v2633, 64
        %v2799 = vpop.permute.xlu0 %2798
        %2800 = vrot.lane.b32.xlu0 %v2634, 64
        %v2801 = vpop.permute.xlu0 %2800
        %2802 = vrot.lane.b32.xlu0 %v2635, 64
        %v2803 = vpop.permute.xlu0 %2802
        %2804 = vrot.lane.b32.xlu0 %v2636, 64
        %v2805 = vpop.permute.xlu0 %2804
        %2806 = vrot.lane.b32.xlu0 %v2637, 64
        %v2807 = vpop.permute.xlu0 %2806
        %2808 = vrot.lane.b32.xlu0 %v2638, 64
        %v2809 = vpop.permute.xlu0 %2808
        %2810 = vrot.lane.b32.xlu0 %v2639, 64
        %v2811 = vpop.permute.xlu0 %2810
        %2812 = vrot.lane.b32.xlu0 %v2640, 64
        %v2813 = vpop.permute.xlu0 %2812
        %2840 = vrot.lane.b32.xlu0 %v2654, 64
        %v2841 = vpop.permute.xlu0 %2840
        %2842 = vrot.lane.b32.xlu0 %v2655, 64
        %v2843 = vpop.permute.xlu0 %2842
        %2844 = vrot.lane.b32.xlu0 %v2656, 64
        %v2845 = vpop.permute.xlu0 %2844
        %2846 = vrot.lane.b32.xlu0 %v2657, 64
        %v2847 = vpop.permute.xlu0 %2846
        %2848 = vrot.lane.b32.xlu0 %v2658, 64
        %v2849 = vpop.permute.xlu0 %2848
        %2850 = vrot.lane.b32.xlu0 %v2659, 64
        %v2851 = vpop.permute.xlu0 %2850
        %2852 = vrot.lane.b32.xlu0 %v2660, 64
        %v2853 = vpop.permute.xlu0 %2852
        %2854 = vrot.lane.b32.xlu0 %v2661, 64
        %v2855 = vpop.permute.xlu0 %2854
        %2856 = vrot.lane.b32.xlu0 %v2662, 64
        %v2857 = vpop.permute.xlu0 %2856
        %2858 = vrot.lane.b32.xlu0 %v2663, 64
        %v2859 = vpop.permute.xlu0 %2858
        %2860 = vrot.lane.b32.xlu0 %v2664, 64
        %v2861 = vpop.permute.xlu0 %2860
        %2862 = vrot.lane.b32.xlu0 %v2665, 64
        %v2863 = vpop.permute.xlu0 %2862
        %2864 = vrot.lane.b32.xlu0 %v2666, 64
        %v2865 = vpop.permute.xlu0 %2864
        %v2879 = vsel %vm436, %v2563, %v2685
        %v2880 = vsel %vm436, %v2564, %v2687
        %v2881 = vsel %vm436, %v2565, %v2689
        %v2882 = vsel %vm436, %v2566, %v2691
        %v2883 = vsel %vm436, %v2567, %v2693
        %v2884 = vsel %vm436, %v2568, %v2695
        %v2885 = vsel %vm436, %v2569, %v2697
        %v2886 = vsel %vm436, %v2570, %v2699
        %v2887 = vsel %vm436, %v2571, %v2701
        %v2888 = vsel %vm436, %v2572, %v2703
        %v2889 = vsel %vm436, %v2573, %v2705
        %v2890 = vsel %vm436, %v2574, %v2707
        %v2891 = vsel %vm436, %v2575, %v2709
        %v2892 = vsel %vm436, %v2589, %v2737
        %v2893 = vsel %vm436, %v2590, %v2739
        %v2894 = vsel %vm436, %v2591, %v2741
        %v2895 = vsel %vm436, %v2592, %v2743
        %v2896 = vsel %vm436, %v2593, %v2745
        %v2897 = vsel %vm436, %v2594, %v2747
        %v2898 = vsel %vm436, %v2595, %v2749
        %v2899 = vsel %vm436, %v2596, %v2751
        %v2900 = vsel %vm436, %v2597, %v2753
        %v2901 = vsel %vm436, %v2598, %v2755
        %v2902 = vsel %vm436, %v2599, %v2757
        %v2903 = vsel %vm436, %v2600, %v2759
        %v2904 = vsel %vm436, %v2601, %v2761
        %v2905 = vsel %vm436, %v2615, %v2789
        %v2906 = vsel %vm436, %v2616, %v2791
        %v2907 = vsel %vm436, %v2617, %v2793
        %v2908 = vsel %vm436, %v2618, %v2795
        %v2909 = vsel %vm436, %v2619, %v2797
        %v2910 = vsel %vm436, %v2620, %v2799
        %v2911 = vsel %vm436, %v2621, %v2801
        %v2912 = vsel %vm436, %v2622, %v2803
        %v2913 = vsel %vm436, %v2623, %v2805
        %v2914 = vsel %vm436, %v2624, %v2807
        %v2915 = vsel %vm436, %v2625, %v2809
        %v2916 = vsel %vm436, %v2626, %v2811
        %v2917 = vsel %vm436, %v2627, %v2813
        %v2918 = vsel %vm436, %v2641, %v2841
        %v2919 = vsel %vm436, %v2642, %v2843
        %v2920 = vsel %vm436, %v2643, %v2845
        %v2921 = vsel %vm436, %v2644, %v2847
        %v2922 = vsel %vm436, %v2645, %v2849
        %v2923 = vsel %vm436, %v2646, %v2851
        %v2924 = vsel %vm436, %v2647, %v2853
        %v2925 = vsel %vm436, %v2648, %v2855
        %v2926 = vsel %vm436, %v2649, %v2857
        %v2927 = vsel %vm436, %v2650, %v2859
        %v2928 = vsel %vm436, %v2651, %v2861
        %v2929 = vsel %vm436, %v2652, %v2863
        %v2930 = vsel %vm436, %v2653, %v2865
        %v2931 = vpack.c.bf16 %v2880, %v2879
        %v2932 = vpack.c.bf16 %v2893, %v2892
        %v2933 = vpack.c.bf16 %v2906, %v2905
        %v2934 = vpack.c.bf16 %v2919, %v2918
        %v2935 = vpack.c.bf16 %v2567, %v2566
        %v2936 = vpack.c.bf16 %v2882, %v2881
        %v2937 = vpack.c.bf16 %v2895, %v2894
        %v2938 = vpack.c.bf16 %v2908, %v2907
        %v2939 = vpack.c.bf16 %v2921, %v2920
        %v2940 = vpack.c.bf16 %v2569, %v2568
        %v2941 = vpack.c.bf16 %v2884, %v2883
        %v2942 = vpack.c.bf16 %v2897, %v2896
        %v2943 = vpack.c.bf16 %v2910, %v2909
        %v2944 = vpack.c.bf16 %v2923, %v2922
        %v2945 = vpack.c.bf16 %v2571, %v2570
        %v2946 = vpack.c.bf16 %v2886, %v2885
        %v2947 = vpack.c.bf16 %v2899, %v2898
        %v2948 = vpack.c.bf16 %v2912, %v2911
        %v2949 = vpack.c.bf16 %v2925, %v2924
        %v2950 = vpack.c.bf16 %v2573, %v2572
        %v2951 = vpack.c.bf16 %v2888, %v2887
        %v2952 = vpack.c.bf16 %v2901, %v2900
        %v2953 = vpack.c.bf16 %v2914, %v2913
        %v2954 = vpack.c.bf16 %v2927, %v2926
        %v2955 = vpack.c.bf16 %v2667, %v2574
        %v2956 = vpack.c.bf16 %v2890, %v2889
        %v2957 = vpack.c.bf16 %v2903, %v2902
        %v2958 = vpack.c.bf16 %v2916, %v2915
        %v2959 = vpack.c.bf16 %v2929, %v2928
        %v2960 = vpack.c.bf16 %v2669, %v2668
        %v2961 = vpack.c.bf16 %v2891, %v2891
        %v2962 = vpack.c.bf16 %v2904, %v2904
        %v2963 = vpack.c.bf16 %v2917, %v2917
        %v2964 = vpack.c.bf16 %v2930, %v2930
        %v2965 = vpack.c.bf16 %v2670, %v2670
        %s2966 = scalar_lea.vmem %s1, 576
        %v2967 = vld [vmem:[%s2966] sm:$0xf]
        %v2968 = vld [vmem:[%s2966 + $0x4] sm:$0xf]
        %v2969 = vld [vmem:[%s2966 + $0x8] sm:$0xf]
        %v2970 = vld [vmem:[%s2966 + $0xc] sm:$0xf]
        %v2971 = vld [vmem:[%s2966 + $0x10] sm:$0xf]
        %v2972 = vld [vmem:[%s2966 + $0x14] sm:$0xf]
        %v2973 = vld [vmem:[%s2966 + $0x18] sm:$0xf]
        %v2974 = vld [vmem:[%s2966 + $0x1c] sm:$0xf]
        %v2975 = vld [vmem:[%s2966 + $0x20] sm:$0xf]
        %v2976 = vld [vmem:[%s2966 + $0x24] sm:$0xf]
        %v2977 = vld [vmem:[%s2966 + $0x28] sm:$0xf]
        %v2978 = vld [vmem:[%s2966 + $0x2c] sm:$0xf]
        %v2979 = vld [vmem:[%s2966 + $0x30] sm:$0xf]
        %v2980 = vld [vmem:[%s2966 + $0x34] sm:$0xf]
        %v2981 = vld [vmem:[%s2966 + $0x38] sm:$0xf]
        %v2982 = vld [vmem:[%s2966 + $0x3c] sm:$0xf]
        %v2983 = vld [vmem:[%s2966 + $0x40] sm:$0xf]
        %v2984 = vld [vmem:[%s2966 + $0x44] sm:$0xf]
        %v2985 = vld [vmem:[%s2966 + $0x48] sm:$0xf]
        %v2986 = vld [vmem:[%s2966 + $0x4c] sm:$0xf]
        %v2987 = vld [vmem:[%s2966 + $0x50] sm:$0xf]
        %v2988 = vld [vmem:[%s2966 + $0x54] sm:$0xf]
        %v2989 = vld [vmem:[%s2966 + $0x58] sm:$0xf]
        %v2990 = vld [vmem:[%s2966 + $0x5c] sm:$0xf]
        %v2991 = vld [vmem:[%s2966 + $0x60] sm:$0xf]
        %v2992 = vld [vmem:[%s2966 + $0x64] sm:$0xf]
        %v2993 = vld [vmem:[%s2966 + $0x68] sm:$0xf]
        %v2994 = vld [vmem:[%s2966 + $0x6c] sm:$0xf]
        %v2995 = vld [vmem:[%s2966 + $0x70] sm:$0xf]
        %v2996 = vld [vmem:[%s2966 + $0x74] sm:$0xf]
        %v2997 = vld [vmem:[%s2966 + $0x78] sm:$0xf]
        %v2998 = vld [vmem:[%s2966 + $0x7c] sm:$0xf]
        %v2999 = vld [vmem:[%s2966 + $0x80] sm:$0xf]
        %v3000 = vld [vmem:[%s2966 + $0x84] sm:$0xf]
        %v3001 = vld [vmem:[%s2966 + $0x88] sm:$0xf]
        %v3002 = vld [vmem:[%s2966 + $0x8c] sm:$0xf]
        %v3003 = vld [vmem:[%s2966 + $0x90] sm:$0xf]
        %v3004 = vld [vmem:[%s2966 + $0x94] sm:$0xf]
        %v3005 = vld [vmem:[%s2966 + $0x98] sm:$0xf]
        %v3006 = vld [vmem:[%s2966 + $0x9c] sm:$0xf]
        %v3007 = vld [vmem:[%s2966 + $0xa0] sm:$0xf]
        %v3008 = vld [vmem:[%s2966 + $0xa4] sm:$0xf]
        %v3009 = vld [vmem:[%s2966 + $0xa8] sm:$0xf]
        %v3010 = vld [vmem:[%s2966 + $0xac] sm:$0xf]
        %v3011 = vld [vmem:[%s2966 + $0xb0] sm:$0xf]
        %v3012 = vld [vmem:[%s2966 + $0xb4] sm:$0xf]
        %v3013 = vld [vmem:[%s2966 + $0xb8] sm:$0xf]
        %v3014 = vld [vmem:[%s2966 + $0xbc] sm:$0xf]
        %v3015 = vld [vmem:[%s2966 + $0xc0] sm:$0xf]
        %v3016 = vld [vmem:[%s2966 + $0xc4] sm:$0xf]
        %v3017 = vld [vmem:[%s2966 + $0xc8] sm:$0xf]
        %v3018 = vld [vmem:[%s2966 + $0xcc] sm:$0xf]
        %v3019 = vld [vmem:[%s2966 + $0xd0] sm:$0xf]
        %v3020 = vld [vmem:[%s2966 + $0xd4] sm:$0xf]
        %v3021 = vld [vmem:[%s2966 + $0xd8] sm:$0xf]
        %v3022 = vld [vmem:[%s2966 + $0xdc] sm:$0xf]
        %v3023 = vld [vmem:[%s2966 + $0xe0] sm:$0xf]
        %v3024 = vld [vmem:[%s2966 + $0xe4] sm:$0xf]
        %v3025 = vld [vmem:[%s2966 + $0xe8] sm:$0xf]
        %v3026 = vld [vmem:[%s2966 + $0xec] sm:$0xf]
        %v3027 = vld [vmem:[%s2966 + $0xf0] sm:$0xf]
        %v3028 = vld [vmem:[%s2966 + $0xf4] sm:$0xf]
        %v3029 = vld [vmem:[%s2966 + $0xf8] sm:$0xf]
        %v3030 = vld [vmem:[%s2966 + $0xfc] sm:$0xf]
        %v3031 = vld [vmem:[%s2966 + $0x100] sm:$0xf]
        %v3032 = vld [vmem:[%s2966 + $0x104] sm:$0xf]
        %v3033 = vld [vmem:[%s2966 + $0x108] sm:$0xf]
        %v3034 = vld [vmem:[%s2966 + $0x10c] sm:$0xf]
        %v3035 = vld [vmem:[%s2966 + $0x110] sm:$0xf]
        %v3036 = vld [vmem:[%s2966 + $0x114] sm:$0xf]
        %v3037 = vld [vmem:[%s2966 + $0x118] sm:$0xf]
        %v3038 = vld [vmem:[%s2966 + $0x11c] sm:$0xf]
        %v3039 = vld [vmem:[%s2 + $0x2] sm:$0x1]
        %v3040 = vlaneseq
        %v3041 = vshrl.u32 %v3040, 7
        %v3042 = vsub.s32 0, %v3041
        %v3043 = vrot.slane %v3039, %v3042
        %v3116 = vunpack.c.l.b16 %v2967
        %v3117 = vunpack.c.l.b16 %v2968
        %v3118 = vunpack.c.l.b16 %v2969
        %v3119 = vunpack.c.l.b16 %v2970
        %v3120 = vunpack.c.l.b16 %v2971
        %v3121 = vunpack.c.l.b16 %v2972
        %v3122 = vunpack.c.l.b16 %v2973
        %v3123 = vunpack.c.l.b16 %v2974
        %v3124 = vunpack.c.l.b16 %v2975
        %v3125 = vunpack.c.l.b16 %v2976
        %v3126 = vunpack.c.l.b16 %v2977
        %v3127 = vunpack.c.l.b16 %v2978
        %v3128 = vunpack.c.l.b16 %v2979
        %v3129 = vunpack.c.l.b16 %v2980
        %v3130 = vunpack.c.l.b16 %v2981
        %v3131 = vunpack.c.l.b16 %v2982
        %v3132 = vunpack.c.l.b16 %v2983
        %v3133 = vunpack.c.l.b16 %v2984
        %v3134 = vunpack.c.l.b16 %v2985
        %v3135 = vunpack.c.l.b16 %v2986
        %v3136 = vunpack.c.l.b16 %v2987
        %v3137 = vunpack.c.l.b16 %v2988
        %v3138 = vunpack.c.l.b16 %v2989
        %v3139 = vunpack.c.l.b16 %v2990
        %v3140 = vunpack.c.l.b16 %v2991
        %v3141 = vunpack.c.l.b16 %v2992
        %v3142 = vunpack.c.l.b16 %v2993
        %v3143 = vunpack.c.l.b16 %v2994
        %v3144 = vunpack.c.l.b16 %v2995
        %v3145 = vunpack.c.l.b16 %v2996
        %v3146 = vunpack.c.l.b16 %v2997
        %v3147 = vunpack.c.l.b16 %v2998
        %v3148 = vunpack.c.l.b16 %v2999
        %v3149 = vunpack.c.l.b16 %v3000
        %v3150 = vunpack.c.l.b16 %v3001
        %v3151 = vunpack.c.l.b16 %v3002
        %v3152 = vunpack.c.l.b16 %v3003
        %v3153 = vunpack.c.l.b16 %v3004
        %v3154 = vunpack.c.l.b16 %v3005
        %v3155 = vunpack.c.l.b16 %v3006
        %v3156 = vunpack.c.l.b16 %v3007
        %v3157 = vunpack.c.l.b16 %v3008
        %v3158 = vunpack.c.l.b16 %v3009
        %v3159 = vunpack.c.l.b16 %v3010
        %v3160 = vunpack.c.l.b16 %v3011
        %v3161 = vunpack.c.l.b16 %v3012
        %v3162 = vunpack.c.l.b16 %v3013
        %v3163 = vunpack.c.l.b16 %v3014
        %v3164 = vunpack.c.l.b16 %v3015
        %v3165 = vunpack.c.l.b16 %v3016
        %v3166 = vunpack.c.l.b16 %v3017
        %v3167 = vunpack.c.l.b16 %v3018
        %v3168 = vunpack.c.l.b16 %v3019
        %v3169 = vunpack.c.l.b16 %v3020
        %v3170 = vunpack.c.l.b16 %v3021
        %v3171 = vunpack.c.l.b16 %v3022
        %v3172 = vunpack.c.l.b16 %v3023
        %v3173 = vunpack.c.l.b16 %v3024
        %v3174 = vunpack.c.l.b16 %v3025
        %v3175 = vunpack.c.l.b16 %v3026
        %v3176 = vunpack.c.l.b16 %v3027
        %v3177 = vunpack.c.l.b16 %v3028
        %v3178 = vunpack.c.l.b16 %v3029
        %v3179 = vunpack.c.l.b16 %v3030
        %v3180 = vunpack.c.l.b16 %v3031
        %v3181 = vunpack.c.l.b16 %v3032
        %v3182 = vunpack.c.l.b16 %v3033
        %v3183 = vunpack.c.l.b16 %v3034
        %v3184 = vunpack.c.l.b16 %v3035
        %v3185 = vunpack.c.l.b16 %v3036
        %v3186 = vunpack.c.l.b16 %v3037
        %v3187 = vunpack.c.l.b16 %v3038
        %v3188 = vpack.c.b16 %v3117, %v3116
        %v3189 = vpack.c.b16 %v3119, %v3118
        %v3190 = vpack.c.b16 %v3121, %v3120
        %v3191 = vpack.c.b16 %v3123, %v3122
        %v3192 = vpack.c.b16 %v3125, %v3124
        %v3193 = vpack.c.b16 %v3127, %v3126
        %v3194 = vpack.c.b16 %v3129, %v3128
        %v3195 = vpack.c.b16 %v3131, %v3130
        %v3196 = vpack.c.b16 %v3133, %v3132
        %v3197 = vpack.c.b16 %v3135, %v3134
        %v3198 = vpack.c.b16 %v3137, %v3136
        %v3199 = vpack.c.b16 %v3139, %v3138
        %v3200 = vpack.c.b16 %v3141, %v3140
        %v3201 = vpack.c.b16 %v3143, %v3142
        %v3202 = vpack.c.b16 %v3145, %v3144
        %v3203 = vpack.c.b16 %v3147, %v3146
        %v3204 = vpack.c.b16 %v3149, %v3148
        %v3205 = vpack.c.b16 %v3151, %v3150
        %v3206 = vpack.c.b16 %v3153, %v3152
        %v3207 = vpack.c.b16 %v3155, %v3154
        %v3208 = vpack.c.b16 %v3157, %v3156
        %v3209 = vpack.c.b16 %v3159, %v3158
        %v3210 = vpack.c.b16 %v3161, %v3160
        %v3211 = vpack.c.b16 %v3163, %v3162
        %v3212 = vpack.c.b16 %v3165, %v3164
        %v3213 = vpack.c.b16 %v3167, %v3166
        %v3214 = vpack.c.b16 %v3169, %v3168
        %v3215 = vpack.c.b16 %v3171, %v3170
        %v3216 = vpack.c.b16 %v3173, %v3172
        %v3217 = vpack.c.b16 %v3175, %v3174
        %v3218 = vpack.c.b16 %v3177, %v3176
        %v3219 = vpack.c.b16 %v3179, %v3178
        %v3220 = vpack.c.b16 %v3181, %v3180
        %v3221 = vpack.c.b16 %v3183, %v3182
        %v3222 = vpack.c.b16 %v3185, %v3184
        %v3223 = vpack.c.b16 %v3187, %v3186
        %v3261 = vsel %vm436, %v2935, 0
        %v3264 = vsel %vm436, %v2940, 0
        %v3267 = vsel %vm436, %v2945, 0
        %v3270 = vsel %vm436, %v2950, 0
        %v3273 = vsel %vm436, %v2955, 0
        %v3276 = vsel %vm436, %v2960, 0
        %v3279 = vsel %vm436, %v2965, 0
        %3281 = vmatprep.subr.bf16.mxu0 0
        %3282 = vmatpush1.bf16.msra.mxu0 %v3188
        %3283 = vmatprep.subr.bf16.mxu0 0
        %3284 = vmatpush1.bf16.msra.mxu0 %v3189
        %3285 = vmatprep.subr.bf16.mxu0 0
        %3286 = vmatpush1.bf16.msra.mxu0 %v3190
        %3287 = vmatprep.subr.bf16.mxu0 0
        %3288 = vmatpush1.bf16.msra.mxu0 %v3191
        %3289 = vmatprep.subr.bf16.mxu0 0
        %3290 = vmatpush1.bf16.msra.mxu0 %v3192
        %3291 = vmatprep.subr.bf16.mxu0 0
        %3292 = vmatpush1.bf16.msra.mxu0 %v3193
        %3293 = vmatprep.subr.bf16.mxu0 0
        %3294 = vmatpush1.bf16.msra.mxu0 %v3194
        %3295 = vmatprep.subr.bf16.mxu0 0
        %3296 = vmatpush1.bf16.msra.mxu0 %v3195
        %3297 = vmatprep.subr.bf16.mxu0 0
        %3298 = vmatpush1.bf16.msra.mxu0 %v3196
        %3299 = vmatprep.subr.bf16.mxu0 0
        %3300 = vmatpush1.bf16.msra.mxu0 %v3197
        %3301 = vmatprep.subr.bf16.mxu0 0
        %3302 = vmatpush1.bf16.msra.mxu0 %v3198
        %3303 = vmatprep.subr.bf16.mxu0 0
        %3304 = vmatpush1.bf16.msra.mxu0 %v3199
        %3305 = vmatprep.subr.bf16.mxu0 0
        %3306 = vmatpush1.bf16.msra.mxu0 %v3200
        %3307 = vmatprep.subr.bf16.mxu0 0
        %3308 = vmatpush1.bf16.msra.mxu0 %v3201
        %3309 = vmatprep.subr.bf16.mxu0 0
        %3310 = vmatpush1.bf16.msra.mxu0 %v3202
        %3311 = vmatprep.subr.bf16.mxu0 0
        %3312 = vmatpush1.bf16.msra.mxu0 %v3203
        %3313 = vmatprep.mubr.bf16.mxu0 %v2932
        %3314 = vmatmul.mubr.bf16.gmra.mrb[0].mxu0 %v2931
        %v3315 = vpop.f32.mrb[0].mxu0
        %v3316 = vadd.f32 %v3043, %v3315
        %v3317 = vpop.f32.mrb[0].mxu0
        %v3318 = vpop.f32.mrb[0].mxu0
        %v3319 = vadd.f32 %v3043, %v3318
        %v3320 = vpop.f32.mrb[0].mxu0
        %3321 = vmatprep.mubr.bf16.mxu0 %v2937
        %3322 = vmatmul.mubr.bf16.gmra.mrb[0].mxu0 %v2936
        %v3323 = vpop.f32.mrb[0].mxu0
        %v3324 = vadd.f32 %v3043, %v3323
        %v3325 = vpop.f32.mrb[0].mxu0
        %v3326 = vpop.f32.mrb[0].mxu0
        %v3327 = vadd.f32 %v3043, %v3326
        %v3328 = vpop.f32.mrb[0].mxu0
        %3329 = vmatprep.mubr.bf16.mxu0 %v2942
        %3330 = vmatmul.mubr.bf16.gmra.mrb[0].mxu0 %v2941
        %v3331 = vpop.f32.mrb[0].mxu0
        %v3332 = vadd.f32 %v3043, %v3331
        %v3333 = vpop.f32.mrb[0].mxu0
        %v3334 = vpop.f32.mrb[0].mxu0
        %v3335 = vadd.f32 %v3043, %v3334
        %v3336 = vpop.f32.mrb[0].mxu0
        %3337 = vmatprep.mubr.bf16.mxu0 %v2947
        %3338 = vmatmul.mubr.bf16.gmra.mrb[0].mxu0 %v2946
        %v3339 = vpop.f32.mrb[0].mxu0
        %v3340 = vadd.f32 %v3043, %v3339
        %v3341 = vpop.f32.mrb[0].mxu0
        %v3342 = vpop.f32.mrb[0].mxu0
        %v3343 = vadd.f32 %v3043, %v3342
        %v3344 = vpop.f32.mrb[0].mxu0
        %3345 = vmatprep.mubr.bf16.mxu0 %v2952
        %3346 = vmatmul.mubr.bf16.gmra.mrb[0].mxu0 %v2951
        %v3347 = vpop.f32.mrb[0].mxu0
        %v3348 = vadd.f32 %v3043, %v3347
        %v3349 = vpop.f32.mrb[0].mxu0
        %v3350 = vpop.f32.mrb[0].mxu0
        %v3351 = vadd.f32 %v3043, %v3350
        %v3352 = vpop.f32.mrb[0].mxu0
        %3353 = vmatprep.mubr.bf16.mxu0 %v2957
        %3354 = vmatmul.mubr.bf16.gmra.mrb[0].mxu0 %v2956
        %v3355 = vpop.f32.mrb[0].mxu0
        %v3356 = vadd.f32 %v3043, %v3355
        %v3357 = vpop.f32.mrb[0].mxu0
        %v3358 = vpop.f32.mrb[0].mxu0
        %v3359 = vadd.f32 %v3043, %v3358
        %v3360 = vpop.f32.mrb[0].mxu0
        %3361 = vmatprep.mubr.bf16.mxu0 %v2962
        %3362 = vmatmul.mubr.bf16.gmra.mrb[0].mxu0 %v2961
        %v3363 = vpop.f32.mrb[0].mxu0
        %v3364 = vadd.f32 %v3043, %v3363
        %v3365 = vpop.f32.mrb[0].mxu0
        %v3366 = vpop.f32.mrb[0].mxu0
        %v3367 = vpop.f32.mrb[0].mxu0
        %3368 = vdwg.mxu0
        %3369 = vmatprep.subr.bf16.mxu0 0
        %3370 = vmatpush1.bf16.msra.mxu0 %v3204
        %3371 = vmatprep.subr.bf16.mxu0 0
        %3372 = vmatpush1.bf16.msra.mxu0 %v3205
        %3373 = vmatprep.subr.bf16.mxu0 0
        %3374 = vmatpush1.bf16.msra.mxu0 %v3206
        %3375 = vmatprep.subr.bf16.mxu0 0
        %3376 = vmatpush1.bf16.msra.mxu0 %v3207
        %3377 = vmatprep.subr.bf16.mxu0 0
        %3378 = vmatpush1.bf16.msra.mxu0 %v3208
        %3379 = vmatprep.subr.bf16.mxu0 0
        %3380 = vmatpush1.bf16.msra.mxu0 %v3209
        %3381 = vmatprep.subr.bf16.mxu0 0
        %3382 = vmatpush1.bf16.msra.mxu0 %v3210
        %3383 = vmatprep.subr.bf16.mxu0 0
        %3384 = vmatpush1.bf16.msra.mxu0 %v3211
        %3385 = vmatprep.subr.bf16.mxu0 0
        %3386 = vmatpush1.bf16.msra.mxu0 %v3212
        %3387 = vmatprep.subr.bf16.mxu0 0
        %3388 = vmatpush1.bf16.msra.mxu0 %v3213
        %3389 = vmatprep.subr.bf16.mxu0 0
        %3390 = vmatpush1.bf16.msra.mxu0 %v3214
        %3391 = vmatprep.subr.bf16.mxu0 0
        %3392 = vmatpush1.bf16.msra.mxu0 %v3215
        %3393 = vmatprep.subr.bf16.mxu0 0
        %3394 = vmatpush1.bf16.msra.mxu0 %v3216
        %3395 = vmatprep.subr.bf16.mxu0 0
        %3396 = vmatpush1.bf16.msra.mxu0 %v3217
        %3397 = vmatprep.subr.bf16.mxu0 0
        %3398 = vmatpush1.bf16.msra.mxu0 %v3218
        %3399 = vmatprep.subr.bf16.mxu0 0
        %3400 = vmatpush1.bf16.msra.mxu0 %v3219
        %3401 = vmatprep.mubr.bf16.mxu0 %v2934
        %3402 = vmatmul.mubr.bf16.gmra.mrb[0].mxu0 %v2933
        %v3403 = vpop.f32.mrb[0].mxu0
        %v3404 = vadd.f32 %v3316, %v3403
        %v3405 = vpop.f32.mrb[0].mxu0
        %v3406 = vpop.f32.mrb[0].mxu0
        %v3407 = vadd.f32 %v3319, %v3406
        %v3408 = vpop.f32.mrb[0].mxu0
        %3409 = vmatprep.mubr.bf16.mxu0 %v2939
        %3410 = vmatmul.mubr.bf16.gmra.mrb[0].mxu0 %v2938
        %v3411 = vpop.f32.mrb[0].mxu0
        %v3412 = vadd.f32 %v3324, %v3411
        %v3413 = vpop.f32.mrb[0].mxu0
        %v3414 = vpop.f32.mrb[0].mxu0
        %v3415 = vadd.f32 %v3327, %v3414
        %v3416 = vpop.f32.mrb[0].mxu0
        %3417 = vmatprep.mubr.bf16.mxu0 %v2944
        %3418 = vmatmul.mubr.bf16.gmra.mrb[0].mxu0 %v2943
        %v3419 = vpop.f32.mrb[0].mxu0
        %v3420 = vadd.f32 %v3332, %v3419
        %v3421 = vpop.f32.mrb[0].mxu0
        %v3422 = vpop.f32.mrb[0].mxu0
        %v3423 = vadd.f32 %v3335, %v3422
        %v3424 = vpop.f32.mrb[0].mxu0
        %3425 = vmatprep.mubr.bf16.mxu0 %v2949
        %3426 = vmatmul.mubr.bf16.gmra.mrb[0].mxu0 %v2948
        %v3427 = vpop.f32.mrb[0].mxu0
        %v3428 = vadd.f32 %v3340, %v3427
        %v3429 = vpop.f32.mrb[0].mxu0
        %v3430 = vpop.f32.mrb[0].mxu0
        %v3431 = vadd.f32 %v3343, %v3430
        %v3432 = vpop.f32.mrb[0].mxu0
        %3433 = vmatprep.mubr.bf16.mxu0 %v2954
        %3434 = vmatmul.mubr.bf16.gmra.mrb[0].mxu0 %v2953
        %v3435 = vpop.f32.mrb[0].mxu0
        %v3436 = vadd.f32 %v3348, %v3435
        %v3437 = vpop.f32.mrb[0].mxu0
        %v3438 = vpop.f32.mrb[0].mxu0
        %v3439 = vadd.f32 %v3351, %v3438
        %v3440 = vpop.f32.mrb[0].mxu0
        %3441 = vmatprep.mubr.bf16.mxu0 %v2959
        %3442 = vmatmul.mubr.bf16.gmra.mrb[0].mxu0 %v2958
        %v3443 = vpop.f32.mrb[0].mxu0
        %v3444 = vadd.f32 %v3356, %v3443
        %v3445 = vpop.f32.mrb[0].mxu0
        %v3446 = vpop.f32.mrb[0].mxu0
        %v3447 = vadd.f32 %v3359, %v3446
        %v3448 = vpop.f32.mrb[0].mxu0
        %3449 = vmatprep.mubr.bf16.mxu0 %v2964
        %3450 = vmatmul.mubr.bf16.gmra.mrb[0].mxu0 %v2963
        %v3451 = vpop.f32.mrb[0].mxu0
        %v3452 = vadd.f32 %v3364, %v3451
        %v3453 = vpop.f32.mrb[0].mxu0
        %v3454 = vpop.f32.mrb[0].mxu0
        %v3455 = vpop.f32.mrb[0].mxu0
        %3456 = vdwg.mxu0
        %3457 = vmatprep.subr.bf16.mxu0 0
        %3458 = vmatpush1.bf16.msra.mxu0 %v3220
        %3459 = vmatprep.subr.bf16.mxu0 0
        %3460 = vmatpush1.bf16.msra.mxu0 %v3221
        %3461 = vmatprep.subr.bf16.mxu0 0
        %3462 = vmatpush1.bf16.msra.mxu0 %v3222
        %3463 = vmatprep.subr.bf16.mxu0 0
        %3464 = vmatpush1.bf16.msra.mxu0 %v3223
        %3465 = vmatprep.subr.bf16.mxu0 0
        %3466 = vmatpush1.bf16.msra.mxu0 0
        %3467 = vmatprep.subr.bf16.mxu0 0
        %3468 = vmatpush1.bf16.msra.mxu0 0
        %3469 = vmatprep.subr.bf16.mxu0 0
        %3470 = vmatpush1.bf16.msra.mxu0 0
        %3471 = vmatprep.subr.bf16.mxu0 0
        %3472 = vmatpush1.bf16.msra.mxu0 0
        %3473 = vmatprep.subr.bf16.mxu0 0
        %3474 = vmatpush1.bf16.msra.mxu0 0
        %3475 = vmatprep.subr.bf16.mxu0 0
        %3476 = vmatpush1.bf16.msra.mxu0 0
        %3477 = vmatprep.subr.bf16.mxu0 0
        %3478 = vmatpush1.bf16.msra.mxu0 0
        %3479 = vmatprep.subr.bf16.mxu0 0
        %3480 = vmatpush1.bf16.msra.mxu0 0
        %3481 = vmatprep.subr.bf16.mxu0 0
        %3482 = vmatpush1.bf16.msra.mxu0 0
        %3483 = vmatprep.subr.bf16.mxu0 0
        %3484 = vmatpush1.bf16.msra.mxu0 0
        %3485 = vmatprep.subr.bf16.mxu0 0
        %3486 = vmatpush1.bf16.msra.mxu0 0
        %3487 = vmatprep.subr.bf16.mxu0 0
        %3488 = vmatpush1.bf16.msra.mxu0 0
        %3489 = vmatprep.mubr.bf16.mxu0 0
        %3490 = vmatmul.mubr.bf16.gmra.mrb[0].mxu0 %v3261
        %v3491 = vpop.f32.mrb[0].mxu0
        %v3492 = vadd.f32 %v3404, %v3491
        %v3493 = vpop.f32.mrb[0].mxu0
        %v3494 = vpop.f32.mrb[0].mxu0
        %v3495 = vadd.f32 %v3407, %v3494
        %v3496 = vpop.f32.mrb[0].mxu0
        %3497 = vmatprep.mubr.bf16.mxu0 0
        %3498 = vmatmul.mubr.bf16.gmra.mrb[0].mxu0 %v3264
        %v3499 = vpop.f32.mrb[0].mxu0
        %v3500 = vadd.f32 %v3412, %v3499
        %v3501 = vpop.f32.mrb[0].mxu0
        %v3502 = vpop.f32.mrb[0].mxu0
        %v3503 = vadd.f32 %v3415, %v3502
        %v3504 = vpop.f32.mrb[0].mxu0
        %3505 = vmatprep.mubr.bf16.mxu0 0
        %3506 = vmatmul.mubr.bf16.gmra.mrb[0].mxu0 %v3267
        %v3507 = vpop.f32.mrb[0].mxu0
        %v3508 = vadd.f32 %v3420, %v3507
        %v3509 = vpop.f32.mrb[0].mxu0
        %v3510 = vpop.f32.mrb[0].mxu0
        %v3511 = vadd.f32 %v3423, %v3510
        %v3512 = vpop.f32.mrb[0].mxu0
        %3513 = vmatprep.mubr.bf16.mxu0 0
        %3514 = vmatmul.mubr.bf16.gmra.mrb[0].mxu0 %v3270
        %v3515 = vpop.f32.mrb[0].mxu0
        %v3516 = vadd.f32 %v3428, %v3515
        %v3517 = vpop.f32.mrb[0].mxu0
        %v3518 = vpop.f32.mrb[0].mxu0
        %v3519 = vadd.f32 %v3431, %v3518
        %v3520 = vpop.f32.mrb[0].mxu0
        %3521 = vmatprep.mubr.bf16.mxu0 0
        %3522 = vmatmul.mubr.bf16.gmra.mrb[0].mxu0 %v3273
        %v3523 = vpop.f32.mrb[0].mxu0
        %v3524 = vadd.f32 %v3436, %v3523
        %v3525 = vpop.f32.mrb[0].mxu0
        %v3526 = vpop.f32.mrb[0].mxu0
        %v3527 = vadd.f32 %v3439, %v3526
        %v3528 = vpop.f32.mrb[0].mxu0
        %3529 = vmatprep.mubr.bf16.mxu0 0
        %3530 = vmatmul.mubr.bf16.gmra.mrb[0].mxu0 %v3276
        %v3531 = vpop.f32.mrb[0].mxu0
        %v3532 = vadd.f32 %v3444, %v3531
        %v3533 = vpop.f32.mrb[0].mxu0
        %v3534 = vpop.f32.mrb[0].mxu0
        %v3535 = vadd.f32 %v3447, %v3534
        %v3536 = vpop.f32.mrb[0].mxu0
        %3537 = vmatprep.mubr.bf16.mxu0 0
        %3538 = vmatmul.mubr.bf16.gmra.mrb[0].mxu0 %v3279
        %v3539 = vpop.f32.mrb[0].mxu0
        %v3540 = vadd.f32 %v3452, %v3539
        %v3541 = vpop.f32.mrb[0].mxu0
        %v3542 = vpop.f32.mrb[0].mxu0
        %v3543 = vpop.f32.mrb[0].mxu0
        %3544 = vdwg.mxu0
        %v3545 = vmax.f32 %v3492, 0.0
        %v3546 = vmax.f32 %v3495, 0.0
        %v3547 = vmax.f32 %v3500, 0.0
        %v3548 = vmax.f32 %v3503, 0.0
        %v3549 = vmax.f32 %v3508, 0.0
        %v3550 = vmax.f32 %v3511, 0.0
        %v3551 = vmax.f32 %v3516, 0.0
        %v3552 = vmax.f32 %v3519, 0.0
        %v3553 = vmax.f32 %v3524, 0.0
        %v3554 = vmax.f32 %v3527, 0.0
        %v3555 = vmax.f32 %v3532, 0.0
        %v3556 = vmax.f32 %v3535, 0.0
        %v3557 = vmax.f32 %v3540, 0.0
        %v3558 = vsel %vm1476, %v3545, 0.0
        %v3559 = vsel %vm1477, %v3546, 0.0
        %v3560 = vsel %vm1478, %v3547, 0.0
        %v3561 = vsel %vm1479, %v3548, 0.0
        %v3562 = vsel %vm1480, %v3549, 0.0
        %v3563 = vsel %vm1481, %v3550, 0.0
        %v3564 = vsel %vm1482, %v3551, 0.0
        %v3565 = vsel %vm1483, %v3552, 0.0
        %v3566 = vsel %vm1484, %v3553, 0.0
        %v3567 = vsel %vm1485, %v3554, 0.0
        %v3568 = vsel %vm1486, %v3555, 0.0
        %v3569 = vsel %vm1487, %v3556, 0.0
        %v3570 = vsel %vm1488, %v3557, 0.0
        %3571 = vst.msk [vmem:[#allocation3 + $0xc] sm:$0xff] %vm436, %v3558
        %3572 = vst.msk [vmem:[#allocation3 + $0x14] sm:$0xff] %vm436, %v3559
        %3573 = vst.msk [vmem:[#allocation3 + $0x1c] sm:$0xff] %vm436, %v3560
        %3574 = vst.msk [vmem:[#allocation3 + $0x24] sm:$0xff] %vm436, %v3561
        %3575 = vst.msk [vmem:[#allocation3 + $0x2c] sm:$0xff] %vm436, %v3562
        %3576 = vst.msk [vmem:[#allocation3 + $0x34] sm:$0xff] %vm436, %v3563
        %3577 = vst.msk [vmem:[#allocation3 + $0x3c] sm:$0xff] %vm436, %v3564
        %3578 = vst.msk [vmem:[#allocation3 + $0x44] sm:$0xff] %vm436, %v3565
        %3579 = vst.msk [vmem:[#allocation3 + $0x4c] sm:$0xff] %vm436, %v3566
        %3580 = vst.msk [vmem:[#allocation3 + $0x54] sm:$0xff] %vm436, %v3567
        %3581 = vst.msk [vmem:[#allocation3 + $0x5c] sm:$0xff] %vm436, %v3568
        %3582 = vst.msk [vmem:[#allocation3 + $0x64] sm:$0xff] %vm436, %v3569
        %3583 = vst.msk [vmem:[#allocation3 + $0x6c] sm:$0x7] %vm1514, %v3570
        %v3584 = vld [vmem:[#allocation3] sm:$0xff]
        %v3585 = vld [vmem:[#allocation3 + $0x8] sm:$0xff]
        %v3586 = vld [vmem:[#allocation3 + $0x10] sm:$0xff]
        %v3587 = vld [vmem:[#allocation3 + $0x18] sm:$0xff]
        %v3588 = vld [vmem:[#allocation3 + $0x20] sm:$0xff]
        %v3589 = vld [vmem:[#allocation3 + $0x28] sm:$0xff]
        %v3590 = vld [vmem:[#allocation3 + $0x30] sm:$0xff]
        %v3591 = vld [vmem:[#allocation3 + $0x38] sm:$0xff]
        %v3592 = vld [vmem:[#allocation3 + $0x40] sm:$0xff]
        %v3593 = vld [vmem:[#allocation3 + $0x48] sm:$0xff]
        %v3594 = vld [vmem:[#allocation3 + $0x50] sm:$0xff]
        %v3595 = vld [vmem:[#allocation3 + $0x58] sm:$0xff]
        %v3596 = vld [vmem:[#allocation3 + $0x60] sm:$0x7]
        %v3597 = vld [vmem:[#allocation3 + $0x1] sm:$0xff]
        %v3598 = vld [vmem:[#allocation3 + $0x9] sm:$0xff]
        %v3599 = vld [vmem:[#allocation3 + $0x11] sm:$0xff]
        %v3600 = vld [vmem:[#allocation3 + $0x19] sm:$0xff]
        %v3601 = vld [vmem:[#allocation3 + $0x21] sm:$0xff]
        %v3602 = vld [vmem:[#allocation3 + $0x29] sm:$0xff]
        %v3603 = vld [vmem:[#allocation3 + $0x31] sm:$0xff]
        %v3604 = vld [vmem:[#allocation3 + $0x39] sm:$0xff]
        %v3605 = vld [vmem:[#allocation3 + $0x41] sm:$0xff]
        %v3606 = vld [vmem:[#allocation3 + $0x49] sm:$0xff]
        %v3607 = vld [vmem:[#allocation3 + $0x51] sm:$0xff]
        %v3608 = vld [vmem:[#allocation3 + $0x59] sm:$0xff]
        %v3609 = vld [vmem:[#allocation3 + $0x61] sm:$0x7]
        %v3610 = vld [vmem:[#allocation3 + $0x2] sm:$0xff]
        %v3611 = vld [vmem:[#allocation3 + $0xa] sm:$0xff]
        %v3612 = vld [vmem:[#allocation3 + $0x12] sm:$0xff]
        %v3613 = vld [vmem:[#allocation3 + $0x1a] sm:$0xff]
        %v3614 = vld [vmem:[#allocation3 + $0x22] sm:$0xff]
        %v3615 = vld [vmem:[#allocation3 + $0x2a] sm:$0xff]
        %v3616 = vld [vmem:[#allocation3 + $0x32] sm:$0xff]
        %v3617 = vld [vmem:[#allocation3 + $0x3a] sm:$0xff]
        %v3618 = vld [vmem:[#allocation3 + $0x42] sm:$0xff]
        %v3619 = vld [vmem:[#allocation3 + $0x4a] sm:$0xff]
        %v3620 = vld [vmem:[#allocation3 + $0x52] sm:$0xff]
        %v3621 = vld [vmem:[#allocation3 + $0x5a] sm:$0xff]
        %v3622 = vld [vmem:[#allocation3 + $0x62] sm:$0x7]
        %v3623 = vld [vmem:[#allocation3 + $0xb] sm:$0xff]
        %v3624 = vld [vmem:[#allocation3 + $0x13] sm:$0xff]
        %v3625 = vld [vmem:[#allocation3 + $0x1b] sm:$0xff]
        %v3626 = vld [vmem:[#allocation3 + $0x23] sm:$0xff]
        %v3627 = vld [vmem:[#allocation3 + $0x2b] sm:$0xff]
        %v3628 = vld [vmem:[#allocation3 + $0x33] sm:$0xff]
        %v3629 = vld [vmem:[#allocation3 + $0x3b] sm:$0xff]
        %v3630 = vld [vmem:[#allocation3 + $0x43] sm:$0xff]
        %v3631 = vld [vmem:[#allocation3 + $0x4b] sm:$0xff]
        %v3632 = vld [vmem:[#allocation3 + $0x53] sm:$0xff]
        %v3633 = vld [vmem:[#allocation3 + $0x5b] sm:$0xff]
        %v3634 = vld [vmem:[#allocation3 + $0x63] sm:$0xff]
        %v3635 = vld [vmem:[#allocation3 + $0x6b] sm:$0x7]
        %v3636 = vld [vmem:[#allocation3 + $0xc] sm:$0xff]
        %v3637 = vld [vmem:[#allocation3 + $0x14] sm:$0xff]
        %v3638 = vld [vmem:[#allocation3 + $0x1c] sm:$0xff]
        %v3639 = vld [vmem:[#allocation3 + $0x24] sm:$0xff]
        %v3640 = vld [vmem:[#allocation3 + $0x2c] sm:$0xff]
        %v3641 = vld [vmem:[#allocation3 + $0x34] sm:$0xff]
        %v3642 = vld [vmem:[#allocation3 + $0x3c] sm:$0xff]
        %v3643 = vld [vmem:[#allocation3 + $0x44] sm:$0xff]
        %v3644 = vld [vmem:[#allocation3 + $0x4c] sm:$0xff]
        %v3645 = vld [vmem:[#allocation3 + $0x54] sm:$0xff]
        %v3646 = vld [vmem:[#allocation3 + $0x5c] sm:$0xff]
        %v3647 = vld [vmem:[#allocation3 + $0x64] sm:$0xff]
        %v3648 = vld [vmem:[#allocation3 + $0x6c] sm:$0x7]
        %v3649 = vld [vmem:[#allocation3 + $0xd] sm:$0xff]
        %v3650 = vld [vmem:[#allocation3 + $0x15] sm:$0xff]
        %v3651 = vld [vmem:[#allocation3 + $0x1d] sm:$0xff]
        %v3652 = vld [vmem:[#allocation3 + $0x25] sm:$0xff]
        %v3653 = vld [vmem:[#allocation3 + $0x2d] sm:$0xff]
        %v3654 = vld [vmem:[#allocation3 + $0x35] sm:$0xff]
        %v3655 = vld [vmem:[#allocation3 + $0x3d] sm:$0xff]
        %v3656 = vld [vmem:[#allocation3 + $0x45] sm:$0xff]
        %v3657 = vld [vmem:[#allocation3 + $0x4d] sm:$0xff]
        %v3658 = vld [vmem:[#allocation3 + $0x55] sm:$0xff]
        %v3659 = vld [vmem:[#allocation3 + $0x5d] sm:$0xff]
        %v3660 = vld [vmem:[#allocation3 + $0x65] sm:$0xff]
        %v3661 = vld [vmem:[#allocation3 + $0x6d] sm:$0x7]
        %v3662 = vld [vmem:[#allocation3 + $0x16] sm:$0xff]
        %v3663 = vld [vmem:[#allocation3 + $0x1e] sm:$0xff]
        %v3664 = vld [vmem:[#allocation3 + $0x26] sm:$0xff]
        %v3665 = vld [vmem:[#allocation3 + $0x2e] sm:$0xff]
        %v3666 = vld [vmem:[#allocation3 + $0x36] sm:$0xff]
        %v3667 = vld [vmem:[#allocation3 + $0x3e] sm:$0xff]
        %v3668 = vld [vmem:[#allocation3 + $0x46] sm:$0xff]
        %v3669 = vld [vmem:[#allocation3 + $0x4e] sm:$0xff]
        %v3670 = vld [vmem:[#allocation3 + $0x56] sm:$0xff]
        %v3671 = vld [vmem:[#allocation3 + $0x5e] sm:$0xff]
        %v3672 = vld [vmem:[#allocation3 + $0x66] sm:$0xff]
        %v3673 = vld [vmem:[#allocation3 + $0x6e] sm:$0xff]
        %v3674 = vld [vmem:[#allocation3 + $0x76] sm:$0x7]
        %v3675 = vld [vmem:[#allocation3 + $0x17] sm:$0xff]
        %v3676 = vld [vmem:[#allocation3 + $0x1f] sm:$0xff]
        %v3677 = vld [vmem:[#allocation3 + $0x27] sm:$0xff]
        %v3678 = vld [vmem:[#allocation3 + $0x2f] sm:$0xff]
        %v3679 = vld [vmem:[#allocation3 + $0x37] sm:$0xff]
        %v3680 = vld [vmem:[#allocation3 + $0x3f] sm:$0xff]
        %v3681 = vld [vmem:[#allocation3 + $0x47] sm:$0xff]
        %v3682 = vld [vmem:[#allocation3 + $0x4f] sm:$0xff]
        %v3683 = vld [vmem:[#allocation3 + $0x57] sm:$0xff]
        %v3684 = vld [vmem:[#allocation3 + $0x5f] sm:$0xff]
        %v3685 = vld [vmem:[#allocation3 + $0x67] sm:$0xff]
        %v3686 = vld [vmem:[#allocation3 + $0x6f] sm:$0xff]
        %v3687 = vld [vmem:[#allocation3 + $0x77] sm:$0x7]
        %v3688 = vld [vmem:[#allocation3 + $0x60] sm:$0xff]
        %v3689 = vld [vmem:[#allocation3 + $0x68] sm:$0xff]
        %v3690 = vld [vmem:[#allocation3 + $0x70] sm:$0xff]
        %v3691 = vld [vmem:[#allocation3 + $0x78] sm:$0x7]
        %3705 = vrot.lane.b32.xlu0 %v3597, 64
        %v3706 = vpop.permute.xlu0 %3705
        %3707 = vrot.lane.b32.xlu0 %v3598, 64
        %v3708 = vpop.permute.xlu0 %3707
        %3709 = vrot.lane.b32.xlu0 %v3599, 64
        %v3710 = vpop.permute.xlu0 %3709
        %3711 = vrot.lane.b32.xlu0 %v3600, 64
        %v3712 = vpop.permute.xlu0 %3711
        %3713 = vrot.lane.b32.xlu0 %v3601, 64
        %v3714 = vpop.permute.xlu0 %3713
        %3715 = vrot.lane.b32.xlu0 %v3602, 64
        %v3716 = vpop.permute.xlu0 %3715
        %3717 = vrot.lane.b32.xlu0 %v3603, 64
        %v3718 = vpop.permute.xlu0 %3717
        %3719 = vrot.lane.b32.xlu0 %v3604, 64
        %v3720 = vpop.permute.xlu0 %3719
        %3721 = vrot.lane.b32.xlu0 %v3605, 64
        %v3722 = vpop.permute.xlu0 %3721
        %3723 = vrot.lane.b32.xlu0 %v3606, 64
        %v3724 = vpop.permute.xlu0 %3723
        %3725 = vrot.lane.b32.xlu0 %v3607, 64
        %v3726 = vpop.permute.xlu0 %3725
        %3727 = vrot.lane.b32.xlu0 %v3608, 64
        %v3728 = vpop.permute.xlu0 %3727
        %3729 = vrot.lane.b32.xlu0 %v3609, 64
        %v3730 = vpop.permute.xlu0 %3729
        %3757 = vrot.lane.b32.xlu0 %v3623, 64
        %v3758 = vpop.permute.xlu0 %3757
        %3759 = vrot.lane.b32.xlu0 %v3624, 64
        %v3760 = vpop.permute.xlu0 %3759
        %3761 = vrot.lane.b32.xlu0 %v3625, 64
        %v3762 = vpop.permute.xlu0 %3761
        %3763 = vrot.lane.b32.xlu0 %v3626, 64
        %v3764 = vpop.permute.xlu0 %3763
        %3765 = vrot.lane.b32.xlu0 %v3627, 64
        %v3766 = vpop.permute.xlu0 %3765
        %3767 = vrot.lane.b32.xlu0 %v3628, 64
        %v3768 = vpop.permute.xlu0 %3767
        %3769 = vrot.lane.b32.xlu0 %v3629, 64
        %v3770 = vpop.permute.xlu0 %3769
        %3771 = vrot.lane.b32.xlu0 %v3630, 64
        %v3772 = vpop.permute.xlu0 %3771
        %3773 = vrot.lane.b32.xlu0 %v3631, 64
        %v3774 = vpop.permute.xlu0 %3773
        %3775 = vrot.lane.b32.xlu0 %v3632, 64
        %v3776 = vpop.permute.xlu0 %3775
        %3777 = vrot.lane.b32.xlu0 %v3633, 64
        %v3778 = vpop.permute.xlu0 %3777
        %3779 = vrot.lane.b32.xlu0 %v3634, 64
        %v3780 = vpop.permute.xlu0 %3779
        %3781 = vrot.lane.b32.xlu0 %v3635, 64
        %v3782 = vpop.permute.xlu0 %3781
        %3809 = vrot.lane.b32.xlu0 %v3649, 64
        %v3810 = vpop.permute.xlu0 %3809
        %3811 = vrot.lane.b32.xlu0 %v3650, 64
        %v3812 = vpop.permute.xlu0 %3811
        %3813 = vrot.lane.b32.xlu0 %v3651, 64
        %v3814 = vpop.permute.xlu0 %3813
        %3815 = vrot.lane.b32.xlu0 %v3652, 64
        %v3816 = vpop.permute.xlu0 %3815
        %3817 = vrot.lane.b32.xlu0 %v3653, 64
        %v3818 = vpop.permute.xlu0 %3817
        %3819 = vrot.lane.b32.xlu0 %v3654, 64
        %v3820 = vpop.permute.xlu0 %3819
        %3821 = vrot.lane.b32.xlu0 %v3655, 64
        %v3822 = vpop.permute.xlu0 %3821
        %3823 = vrot.lane.b32.xlu0 %v3656, 64
        %v3824 = vpop.permute.xlu0 %3823
        %3825 = vrot.lane.b32.xlu0 %v3657, 64
        %v3826 = vpop.permute.xlu0 %3825
        %3827 = vrot.lane.b32.xlu0 %v3658, 64
        %v3828 = vpop.permute.xlu0 %3827
        %3829 = vrot.lane.b32.xlu0 %v3659, 64
        %v3830 = vpop.permute.xlu0 %3829
        %3831 = vrot.lane.b32.xlu0 %v3660, 64
        %v3832 = vpop.permute.xlu0 %3831
        %3833 = vrot.lane.b32.xlu0 %v3661, 64
        %v3834 = vpop.permute.xlu0 %3833
        %3861 = vrot.lane.b32.xlu0 %v3675, 64
        %v3862 = vpop.permute.xlu0 %3861
        %3863 = vrot.lane.b32.xlu0 %v3676, 64
        %v3864 = vpop.permute.xlu0 %3863
        %3865 = vrot.lane.b32.xlu0 %v3677, 64
        %v3866 = vpop.permute.xlu0 %3865
        %3867 = vrot.lane.b32.xlu0 %v3678, 64
        %v3868 = vpop.permute.xlu0 %3867
        %3869 = vrot.lane.b32.xlu0 %v3679, 64
        %v3870 = vpop.permute.xlu0 %3869
        %3871 = vrot.lane.b32.xlu0 %v3680, 64
        %v3872 = vpop.permute.xlu0 %3871
        %3873 = vrot.lane.b32.xlu0 %v3681, 64
        %v3874 = vpop.permute.xlu0 %3873
        %3875 = vrot.lane.b32.xlu0 %v3682, 64
        %v3876 = vpop.permute.xlu0 %3875
        %3877 = vrot.lane.b32.xlu0 %v3683, 64
        %v3878 = vpop.permute.xlu0 %3877
        %3879 = vrot.lane.b32.xlu0 %v3684, 64
        %v3880 = vpop.permute.xlu0 %3879
        %3881 = vrot.lane.b32.xlu0 %v3685, 64
        %v3882 = vpop.permute.xlu0 %3881
        %3883 = vrot.lane.b32.xlu0 %v3686, 64
        %v3884 = vpop.permute.xlu0 %3883
        %3885 = vrot.lane.b32.xlu0 %v3687, 64
        %v3886 = vpop.permute.xlu0 %3885
        %v3900 = vsel %vm436, %v3584, %v3706
        %v3901 = vsel %vm436, %v3585, %v3708
        %v3902 = vsel %vm436, %v3586, %v3710
        %v3903 = vsel %vm436, %v3587, %v3712
        %v3904 = vsel %vm436, %v3588, %v3714
        %v3905 = vsel %vm436, %v3589, %v3716
        %v3906 = vsel %vm436, %v3590, %v3718
        %v3907 = vsel %vm436, %v3591, %v3720
        %v3908 = vsel %vm436, %v3592, %v3722
        %v3909 = vsel %vm436, %v3593, %v3724
        %v3910 = vsel %vm436, %v3594, %v3726
        %v3911 = vsel %vm436, %v3595, %v3728
        %v3912 = vsel %vm436, %v3596, %v3730
        %v3913 = vsel %vm436, %v3610, %v3758
        %v3914 = vsel %vm436, %v3611, %v3760
        %v3915 = vsel %vm436, %v3612, %v3762
        %v3916 = vsel %vm436, %v3613, %v3764
        %v3917 = vsel %vm436, %v3614, %v3766
        %v3918 = vsel %vm436, %v3615, %v3768
        %v3919 = vsel %vm436, %v3616, %v3770
        %v3920 = vsel %vm436, %v3617, %v3772
        %v3921 = vsel %vm436, %v3618, %v3774
        %v3922 = vsel %vm436, %v3619, %v3776
        %v3923 = vsel %vm436, %v3620, %v3778
        %v3924 = vsel %vm436, %v3621, %v3780
        %v3925 = vsel %vm436, %v3622, %v3782
        %v3926 = vsel %vm436, %v3636, %v3810
        %v3927 = vsel %vm436, %v3637, %v3812
        %v3928 = vsel %vm436, %v3638, %v3814
        %v3929 = vsel %vm436, %v3639, %v3816
        %v3930 = vsel %vm436, %v3640, %v3818
        %v3931 = vsel %vm436, %v3641, %v3820
        %v3932 = vsel %vm436, %v3642, %v3822
        %v3933 = vsel %vm436, %v3643, %v3824
        %v3934 = vsel %vm436, %v3644, %v3826
        %v3935 = vsel %vm436, %v3645, %v3828
        %v3936 = vsel %vm436, %v3646, %v3830
        %v3937 = vsel %vm436, %v3647, %v3832
        %v3938 = vsel %vm436, %v3648, %v3834
        %v3939 = vsel %vm436, %v3662, %v3862
        %v3940 = vsel %vm436, %v3663, %v3864
        %v3941 = vsel %vm436, %v3664, %v3866
        %v3942 = vsel %vm436, %v3665, %v3868
        %v3943 = vsel %vm436, %v3666, %v3870
        %v3944 = vsel %vm436, %v3667, %v3872
        %v3945 = vsel %vm436, %v3668, %v3874
        %v3946 = vsel %vm436, %v3669, %v3876
        %v3947 = vsel %vm436, %v3670, %v3878
        %v3948 = vsel %vm436, %v3671, %v3880
        %v3949 = vsel %vm436, %v3672, %v3882
        %v3950 = vsel %vm436, %v3673, %v3884
        %v3951 = vsel %vm436, %v3674, %v3886
        %v3952 = vpack.c.bf16 %v3901, %v3900
        %v3953 = vpack.c.bf16 %v3914, %v3913
        %v3954 = vpack.c.bf16 %v3927, %v3926
        %v3955 = vpack.c.bf16 %v3940, %v3939
        %v3956 = vpack.c.bf16 %v3588, %v3587
        %v3957 = vpack.c.bf16 %v3903, %v3902
        %v3958 = vpack.c.bf16 %v3916, %v3915
        %v3959 = vpack.c.bf16 %v3929, %v3928
        %v3960 = vpack.c.bf16 %v3942, %v3941
        %v3961 = vpack.c.bf16 %v3590, %v3589
        %v3962 = vpack.c.bf16 %v3905, %v3904
        %v3963 = vpack.c.bf16 %v3918, %v3917
        %v3964 = vpack.c.bf16 %v3931, %v3930
        %v3965 = vpack.c.bf16 %v3944, %v3943
        %v3966 = vpack.c.bf16 %v3592, %v3591
        %v3967 = vpack.c.bf16 %v3907, %v3906
        %v3968 = vpack.c.bf16 %v3920, %v3919
        %v3969 = vpack.c.bf16 %v3933, %v3932
        %v3970 = vpack.c.bf16 %v3946, %v3945
        %v3971 = vpack.c.bf16 %v3594, %v3593
        %v3972 = vpack.c.bf16 %v3909, %v3908
        %v3973 = vpack.c.bf16 %v3922, %v3921
        %v3974 = vpack.c.bf16 %v3935, %v3934
        %v3975 = vpack.c.bf16 %v3948, %v3947
        %v3976 = vpack.c.bf16 %v3688, %v3595
        %v3977 = vpack.c.bf16 %v3911, %v3910
        %v3978 = vpack.c.bf16 %v3924, %v3923
        %v3979 = vpack.c.bf16 %v3937, %v3936
        %v3980 = vpack.c.bf16 %v3950, %v3949
        %v3981 = vpack.c.bf16 %v3690, %v3689
        %v3982 = vpack.c.bf16 %v3912, %v3912
        %v3983 = vpack.c.bf16 %v3925, %v3925
        %v3984 = vpack.c.bf16 %v3938, %v3938
        %v3985 = vpack.c.bf16 %v3951, %v3951
        %v3986 = vpack.c.bf16 %v3691, %v3691
        %s3987 = scalar_lea.vmem %s1, 864
        %v3988 = vld [vmem:[%s3987] sm:$0xf]
        %v3989 = vld [vmem:[%s3987 + $0x4] sm:$0xf]
        %v3990 = vld [vmem:[%s3987 + $0x8] sm:$0xf]
        %v3991 = vld [vmem:[%s3987 + $0xc] sm:$0xf]
        %v3992 = vld [vmem:[%s3987 + $0x10] sm:$0xf]
        %v3993 = vld [vmem:[%s3987 + $0x14] sm:$0xf]
        %v3994 = vld [vmem:[%s3987 + $0x18] sm:$0xf]
        %v3995 = vld [vmem:[%s3987 + $0x1c] sm:$0xf]
        %v3996 = vld [vmem:[%s3987 + $0x20] sm:$0xf]
        %v3997 = vld [vmem:[%s3987 + $0x24] sm:$0xf]
        %v3998 = vld [vmem:[%s3987 + $0x28] sm:$0xf]
        %v3999 = vld [vmem:[%s3987 + $0x2c] sm:$0xf]
        %v4000 = vld [vmem:[%s3987 + $0x30] sm:$0xf]
        %v4001 = vld [vmem:[%s3987 + $0x34] sm:$0xf]
        %v4002 = vld [vmem:[%s3987 + $0x38] sm:$0xf]
        %v4003 = vld [vmem:[%s3987 + $0x3c] sm:$0xf]
        %v4004 = vld [vmem:[%s3987 + $0x40] sm:$0xf]
        %v4005 = vld [vmem:[%s3987 + $0x44] sm:$0xf]
        %v4006 = vld [vmem:[%s3987 + $0x48] sm:$0xf]
        %v4007 = vld [vmem:[%s3987 + $0x4c] sm:$0xf]
        %v4008 = vld [vmem:[%s3987 + $0x50] sm:$0xf]
        %v4009 = vld [vmem:[%s3987 + $0x54] sm:$0xf]
        %v4010 = vld [vmem:[%s3987 + $0x58] sm:$0xf]
        %v4011 = vld [vmem:[%s3987 + $0x5c] sm:$0xf]
        %v4012 = vld [vmem:[%s3987 + $0x60] sm:$0xf]
        %v4013 = vld [vmem:[%s3987 + $0x64] sm:$0xf]
        %v4014 = vld [vmem:[%s3987 + $0x68] sm:$0xf]
        %v4015 = vld [vmem:[%s3987 + $0x6c] sm:$0xf]
        %v4016 = vld [vmem:[%s3987 + $0x70] sm:$0xf]
        %v4017 = vld [vmem:[%s3987 + $0x74] sm:$0xf]
        %v4018 = vld [vmem:[%s3987 + $0x78] sm:$0xf]
        %v4019 = vld [vmem:[%s3987 + $0x7c] sm:$0xf]
        %v4020 = vld [vmem:[%s3987 + $0x80] sm:$0xf]
        %v4021 = vld [vmem:[%s3987 + $0x84] sm:$0xf]
        %v4022 = vld [vmem:[%s3987 + $0x88] sm:$0xf]
        %v4023 = vld [vmem:[%s3987 + $0x8c] sm:$0xf]
        %v4024 = vld [vmem:[%s3987 + $0x90] sm:$0xf]
        %v4025 = vld [vmem:[%s3987 + $0x94] sm:$0xf]
        %v4026 = vld [vmem:[%s3987 + $0x98] sm:$0xf]
        %v4027 = vld [vmem:[%s3987 + $0x9c] sm:$0xf]
        %v4028 = vld [vmem:[%s3987 + $0xa0] sm:$0xf]
        %v4029 = vld [vmem:[%s3987 + $0xa4] sm:$0xf]
        %v4030 = vld [vmem:[%s3987 + $0xa8] sm:$0xf]
        %v4031 = vld [vmem:[%s3987 + $0xac] sm:$0xf]
        %v4032 = vld [vmem:[%s3987 + $0xb0] sm:$0xf]
        %v4033 = vld [vmem:[%s3987 + $0xb4] sm:$0xf]
        %v4034 = vld [vmem:[%s3987 + $0xb8] sm:$0xf]
        %v4035 = vld [vmem:[%s3987 + $0xbc] sm:$0xf]
        %v4036 = vld [vmem:[%s3987 + $0xc0] sm:$0xf]
        %v4037 = vld [vmem:[%s3987 + $0xc4] sm:$0xf]
        %v4038 = vld [vmem:[%s3987 + $0xc8] sm:$0xf]
        %v4039 = vld [vmem:[%s3987 + $0xcc] sm:$0xf]
        %v4040 = vld [vmem:[%s3987 + $0xd0] sm:$0xf]
        %v4041 = vld [vmem:[%s3987 + $0xd4] sm:$0xf]
        %v4042 = vld [vmem:[%s3987 + $0xd8] sm:$0xf]
        %v4043 = vld [vmem:[%s3987 + $0xdc] sm:$0xf]
        %v4044 = vld [vmem:[%s3987 + $0xe0] sm:$0xf]
        %v4045 = vld [vmem:[%s3987 + $0xe4] sm:$0xf]
        %v4046 = vld [vmem:[%s3987 + $0xe8] sm:$0xf]
        %v4047 = vld [vmem:[%s3987 + $0xec] sm:$0xf]
        %v4048 = vld [vmem:[%s3987 + $0xf0] sm:$0xf]
        %v4049 = vld [vmem:[%s3987 + $0xf4] sm:$0xf]
        %v4050 = vld [vmem:[%s3987 + $0xf8] sm:$0xf]
        %v4051 = vld [vmem:[%s3987 + $0xfc] sm:$0xf]
        %v4052 = vld [vmem:[%s3987 + $0x100] sm:$0xf]
        %v4053 = vld [vmem:[%s3987 + $0x104] sm:$0xf]
        %v4054 = vld [vmem:[%s3987 + $0x108] sm:$0xf]
        %v4055 = vld [vmem:[%s3987 + $0x10c] sm:$0xf]
        %v4056 = vld [vmem:[%s3987 + $0x110] sm:$0xf]
        %v4057 = vld [vmem:[%s3987 + $0x114] sm:$0xf]
        %v4058 = vld [vmem:[%s3987 + $0x118] sm:$0xf]
        %v4059 = vld [vmem:[%s3987 + $0x11c] sm:$0xf]
        %v4060 = vld [vmem:[%s2 + $0x3] sm:$0x1]
        %v4061 = vlaneseq
        %v4062 = vshrl.u32 %v4061, 7
        %v4063 = vsub.s32 0, %v4062
        %v4064 = vrot.slane %v4060, %v4063
        %v4137 = vunpack.c.l.b16 %v3988
        %v4138 = vunpack.c.l.b16 %v3989
        %v4139 = vunpack.c.l.b16 %v3990
        %v4140 = vunpack.c.l.b16 %v3991
        %v4141 = vunpack.c.l.b16 %v3992
        %v4142 = vunpack.c.l.b16 %v3993
        %v4143 = vunpack.c.l.b16 %v3994
        %v4144 = vunpack.c.l.b16 %v3995
        %v4145 = vunpack.c.l.b16 %v3996
        %v4146 = vunpack.c.l.b16 %v3997
        %v4147 = vunpack.c.l.b16 %v3998
        %v4148 = vunpack.c.l.b16 %v3999
        %v4149 = vunpack.c.l.b16 %v4000
        %v4150 = vunpack.c.l.b16 %v4001
        %v4151 = vunpack.c.l.b16 %v4002
        %v4152 = vunpack.c.l.b16 %v4003
        %v4153 = vunpack.c.l.b16 %v4004
        %v4154 = vunpack.c.l.b16 %v4005
        %v4155 = vunpack.c.l.b16 %v4006
        %v4156 = vunpack.c.l.b16 %v4007
        %v4157 = vunpack.c.l.b16 %v4008
        %v4158 = vunpack.c.l.b16 %v4009
        %v4159 = vunpack.c.l.b16 %v4010
        %v4160 = vunpack.c.l.b16 %v4011
        %v4161 = vunpack.c.l.b16 %v4012
        %v4162 = vunpack.c.l.b16 %v4013
        %v4163 = vunpack.c.l.b16 %v4014
        %v4164 = vunpack.c.l.b16 %v4015
        %v4165 = vunpack.c.l.b16 %v4016
        %v4166 = vunpack.c.l.b16 %v4017
        %v4167 = vunpack.c.l.b16 %v4018
        %v4168 = vunpack.c.l.b16 %v4019
        %v4169 = vunpack.c.l.b16 %v4020
        %v4170 = vunpack.c.l.b16 %v4021
        %v4171 = vunpack.c.l.b16 %v4022
        %v4172 = vunpack.c.l.b16 %v4023
        %v4173 = vunpack.c.l.b16 %v4024
        %v4174 = vunpack.c.l.b16 %v4025
        %v4175 = vunpack.c.l.b16 %v4026
        %v4176 = vunpack.c.l.b16 %v4027
        %v4177 = vunpack.c.l.b16 %v4028
        %v4178 = vunpack.c.l.b16 %v4029
        %v4179 = vunpack.c.l.b16 %v4030
        %v4180 = vunpack.c.l.b16 %v4031
        %v4181 = vunpack.c.l.b16 %v4032
        %v4182 = vunpack.c.l.b16 %v4033
        %v4183 = vunpack.c.l.b16 %v4034
        %v4184 = vunpack.c.l.b16 %v4035
        %v4185 = vunpack.c.l.b16 %v4036
        %v4186 = vunpack.c.l.b16 %v4037
        %v4187 = vunpack.c.l.b16 %v4038
        %v4188 = vunpack.c.l.b16 %v4039
        %v4189 = vunpack.c.l.b16 %v4040
        %v4190 = vunpack.c.l.b16 %v4041
        %v4191 = vunpack.c.l.b16 %v4042
        %v4192 = vunpack.c.l.b16 %v4043
        %v4193 = vunpack.c.l.b16 %v4044
        %v4194 = vunpack.c.l.b16 %v4045
        %v4195 = vunpack.c.l.b16 %v4046
        %v4196 = vunpack.c.l.b16 %v4047
        %v4197 = vunpack.c.l.b16 %v4048
        %v4198 = vunpack.c.l.b16 %v4049
        %v4199 = vunpack.c.l.b16 %v4050
        %v4200 = vunpack.c.l.b16 %v4051
        %v4201 = vunpack.c.l.b16 %v4052
        %v4202 = vunpack.c.l.b16 %v4053
        %v4203 = vunpack.c.l.b16 %v4054
        %v4204 = vunpack.c.l.b16 %v4055
        %v4205 = vunpack.c.l.b16 %v4056
        %v4206 = vunpack.c.l.b16 %v4057
        %v4207 = vunpack.c.l.b16 %v4058
        %v4208 = vunpack.c.l.b16 %v4059
        %v4209 = vpack.c.b16 %v4138, %v4137
        %v4210 = vpack.c.b16 %v4140, %v4139
        %v4211 = vpack.c.b16 %v4142, %v4141
        %v4212 = vpack.c.b16 %v4144, %v4143
        %v4213 = vpack.c.b16 %v4146, %v4145
        %v4214 = vpack.c.b16 %v4148, %v4147
        %v4215 = vpack.c.b16 %v4150, %v4149
        %v4216 = vpack.c.b16 %v4152, %v4151
        %v4217 = vpack.c.b16 %v4154, %v4153
        %v4218 = vpack.c.b16 %v4156, %v4155
        %v4219 = vpack.c.b16 %v4158, %v4157
        %v4220 = vpack.c.b16 %v4160, %v4159
        %v4221 = vpack.c.b16 %v4162, %v4161
        %v4222 = vpack.c.b16 %v4164, %v4163
        %v4223 = vpack.c.b16 %v4166, %v4165
        %v4224 = vpack.c.b16 %v4168, %v4167
        %v4225 = vpack.c.b16 %v4170, %v4169
        %v4226 = vpack.c.b16 %v4172, %v4171
        %v4227 = vpack.c.b16 %v4174, %v4173
        %v4228 = vpack.c.b16 %v4176, %v4175
        %v4229 = vpack.c.b16 %v4178, %v4177
        %v4230 = vpack.c.b16 %v4180, %v4179
        %v4231 = vpack.c.b16 %v4182, %v4181
        %v4232 = vpack.c.b16 %v4184, %v4183
        %v4233 = vpack.c.b16 %v4186, %v4185
        %v4234 = vpack.c.b16 %v4188, %v4187
        %v4235 = vpack.c.b16 %v4190, %v4189
        %v4236 = vpack.c.b16 %v4192, %v4191
        %v4237 = vpack.c.b16 %v4194, %v4193
        %v4238 = vpack.c.b16 %v4196, %v4195
        %v4239 = vpack.c.b16 %v4198, %v4197
        %v4240 = vpack.c.b16 %v4200, %v4199
        %v4241 = vpack.c.b16 %v4202, %v4201
        %v4242 = vpack.c.b16 %v4204, %v4203
        %v4243 = vpack.c.b16 %v4206, %v4205
        %v4244 = vpack.c.b16 %v4208, %v4207
        %v4282 = vsel %vm436, %v3956, 0
        %v4285 = vsel %vm436, %v3961, 0
        %v4288 = vsel %vm436, %v3966, 0
        %v4291 = vsel %vm436, %v3971, 0
        %v4294 = vsel %vm436, %v3976, 0
        %v4297 = vsel %vm436, %v3981, 0
        %v4300 = vsel %vm436, %v3986, 0
        %4302 = vmatprep.subr.bf16.mxu0 0
        %4303 = vmatpush1.bf16.msra.mxu0 %v4209
        %4304 = vmatprep.subr.bf16.mxu0 0
        %4305 = vmatpush1.bf16.msra.mxu0 %v4210
        %4306 = vmatprep.subr.bf16.mxu0 0
        %4307 = vmatpush1.bf16.msra.mxu0 %v4211
        %4308 = vmatprep.subr.bf16.mxu0 0
        %4309 = vmatpush1.bf16.msra.mxu0 %v4212
        %4310 = vmatprep.subr.bf16.mxu0 0
        %4311 = vmatpush1.bf16.msra.mxu0 %v4213
        %4312 = vmatprep.subr.bf16.mxu0 0
        %4313 = vmatpush1.bf16.msra.mxu0 %v4214
        %4314 = vmatprep.subr.bf16.mxu0 0
        %4315 = vmatpush1.bf16.msra.mxu0 %v4215
        %4316 = vmatprep.subr.bf16.mxu0 0
        %4317 = vmatpush1.bf16.msra.mxu0 %v4216
        %4318 = vmatprep.subr.bf16.mxu0 0
        %4319 = vmatpush1.bf16.msra.mxu0 %v4217
        %4320 = vmatprep.subr.bf16.mxu0 0
        %4321 = vmatpush1.bf16.msra.mxu0 %v4218
        %4322 = vmatprep.subr.bf16.mxu0 0
        %4323 = vmatpush1.bf16.msra.mxu0 %v4219
        %4324 = vmatprep.subr.bf16.mxu0 0
        %4325 = vmatpush1.bf16.msra.mxu0 %v4220
        %4326 = vmatprep.subr.bf16.mxu0 0
        %4327 = vmatpush1.bf16.msra.mxu0 %v4221
        %4328 = vmatprep.subr.bf16.mxu0 0
        %4329 = vmatpush1.bf16.msra.mxu0 %v4222
        %4330 = vmatprep.subr.bf16.mxu0 0
        %4331 = vmatpush1.bf16.msra.mxu0 %v4223
        %4332 = vmatprep.subr.bf16.mxu0 0
        %4333 = vmatpush1.bf16.msra.mxu0 %v4224
        %4334 = vmatprep.mubr.bf16.mxu0 %v3953
        %4335 = vmatmul.mubr.bf16.gmra.mrb[0].mxu0 %v3952
        %v4336 = vpop.f32.mrb[0].mxu0
        %v4337 = vadd.f32 %v4064, %v4336
        %v4338 = vpop.f32.mrb[0].mxu0
        %v4339 = vpop.f32.mrb[0].mxu0
        %v4340 = vadd.f32 %v4064, %v4339
        %v4341 = vpop.f32.mrb[0].mxu0
        %4342 = vmatprep.mubr.bf16.mxu0 %v3958
        %4343 = vmatmul.mubr.bf16.gmra.mrb[0].mxu0 %v3957
        %v4344 = vpop.f32.mrb[0].mxu0
        %v4345 = vadd.f32 %v4064, %v4344
        %v4346 = vpop.f32.mrb[0].mxu0
        %v4347 = vpop.f32.mrb[0].mxu0
        %v4348 = vadd.f32 %v4064, %v4347
        %v4349 = vpop.f32.mrb[0].mxu0
        %4350 = vmatprep.mubr.bf16.mxu0 %v3963
        %4351 = vmatmul.mubr.bf16.gmra.mrb[0].mxu0 %v3962
        %v4352 = vpop.f32.mrb[0].mxu0
        %v4353 = vadd.f32 %v4064, %v4352
        %v4354 = vpop.f32.mrb[0].mxu0
        %v4355 = vpop.f32.mrb[0].mxu0
        %v4356 = vadd.f32 %v4064, %v4355
        %v4357 = vpop.f32.mrb[0].mxu0
        %4358 = vmatprep.mubr.bf16.mxu0 %v3968
        %4359 = vmatmul.mubr.bf16.gmra.mrb[0].mxu0 %v3967
        %v4360 = vpop.f32.mrb[0].mxu0
        %v4361 = vadd.f32 %v4064, %v4360
        %v4362 = vpop.f32.mrb[0].mxu0
        %v4363 = vpop.f32.mrb[0].mxu0
        %v4364 = vadd.f32 %v4064, %v4363
        %v4365 = vpop.f32.mrb[0].mxu0
        %4366 = vmatprep.mubr.bf16.mxu0 %v3973
        %4367 = vmatmul.mubr.bf16.gmra.mrb[0].mxu0 %v3972
        %v4368 = vpop.f32.mrb[0].mxu0
        %v4369 = vadd.f32 %v4064, %v4368
        %v4370 = vpop.f32.mrb[0].mxu0
        %v4371 = vpop.f32.mrb[0].mxu0
        %v4372 = vadd.f32 %v4064, %v4371
        %v4373 = vpop.f32.mrb[0].mxu0
        %4374 = vmatprep.mubr.bf16.mxu0 %v3978
        %4375 = vmatmul.mubr.bf16.gmra.mrb[0].mxu0 %v3977
        %v4376 = vpop.f32.mrb[0].mxu0
        %v4377 = vadd.f32 %v4064, %v4376
        %v4378 = vpop.f32.mrb[0].mxu0
        %v4379 = vpop.f32.mrb[0].mxu0
        %v4380 = vadd.f32 %v4064, %v4379
        %v4381 = vpop.f32.mrb[0].mxu0
        %4382 = vmatprep.mubr.bf16.mxu0 %v3983
        %4383 = vmatmul.mubr.bf16.gmra.mrb[0].mxu0 %v3982
        %v4384 = vpop.f32.mrb[0].mxu0
        %v4385 = vadd.f32 %v4064, %v4384
        %v4386 = vpop.f32.mrb[0].mxu0
        %v4387 = vpop.f32.mrb[0].mxu0
        %v4388 = vpop.f32.mrb[0].mxu0
        %4389 = vdwg.mxu0
        %4390 = vmatprep.subr.bf16.mxu0 0
        %4391 = vmatpush1.bf16.msra.mxu0 %v4225
        %4392 = vmatprep.subr.bf16.mxu0 0
        %4393 = vmatpush1.bf16.msra.mxu0 %v4226
        %4394 = vmatprep.subr.bf16.mxu0 0
        %4395 = vmatpush1.bf16.msra.mxu0 %v4227
        %4396 = vmatprep.subr.bf16.mxu0 0
        %4397 = vmatpush1.bf16.msra.mxu0 %v4228
        %4398 = vmatprep.subr.bf16.mxu0 0
        %4399 = vmatpush1.bf16.msra.mxu0 %v4229
        %4400 = vmatprep.subr.bf16.mxu0 0
        %4401 = vmatpush1.bf16.msra.mxu0 %v4230
        %4402 = vmatprep.subr.bf16.mxu0 0
        %4403 = vmatpush1.bf16.msra.mxu0 %v4231
        %4404 = vmatprep.subr.bf16.mxu0 0
        %4405 = vmatpush1.bf16.msra.mxu0 %v4232
        %4406 = vmatprep.subr.bf16.mxu0 0
        %4407 = vmatpush1.bf16.msra.mxu0 %v4233
        %4408 = vmatprep.subr.bf16.mxu0 0
        %4409 = vmatpush1.bf16.msra.mxu0 %v4234
        %4410 = vmatprep.subr.bf16.mxu0 0
        %4411 = vmatpush1.bf16.msra.mxu0 %v4235
        %4412 = vmatprep.subr.bf16.mxu0 0
        %4413 = vmatpush1.bf16.msra.mxu0 %v4236
        %4414 = vmatprep.subr.bf16.mxu0 0
        %4415 = vmatpush1.bf16.msra.mxu0 %v4237
        %4416 = vmatprep.subr.bf16.mxu0 0
        %4417 = vmatpush1.bf16.msra.mxu0 %v4238
        %4418 = vmatprep.subr.bf16.mxu0 0
        %4419 = vmatpush1.bf16.msra.mxu0 %v4239
        %4420 = vmatprep.subr.bf16.mxu0 0
        %4421 = vmatpush1.bf16.msra.mxu0 %v4240
        %4422 = vmatprep.mubr.bf16.mxu0 %v3955
        %4423 = vmatmul.mubr.bf16.gmra.mrb[0].mxu0 %v3954
        %v4424 = vpop.f32.mrb[0].mxu0
        %v4425 = vadd.f32 %v4337, %v4424
        %v4426 = vpop.f32.mrb[0].mxu0
        %v4427 = vpop.f32.mrb[0].mxu0
        %v4428 = vadd.f32 %v4340, %v4427
        %v4429 = vpop.f32.mrb[0].mxu0
        %4430 = vmatprep.mubr.bf16.mxu0 %v3960
        %4431 = vmatmul.mubr.bf16.gmra.mrb[0].mxu0 %v3959
        %v4432 = vpop.f32.mrb[0].mxu0
        %v4433 = vadd.f32 %v4345, %v4432
        %v4434 = vpop.f32.mrb[0].mxu0
        %v4435 = vpop.f32.mrb[0].mxu0
        %v4436 = vadd.f32 %v4348, %v4435
        %v4437 = vpop.f32.mrb[0].mxu0
        %4438 = vmatprep.mubr.bf16.mxu0 %v3965
        %4439 = vmatmul.mubr.bf16.gmra.mrb[0].mxu0 %v3964
        %v4440 = vpop.f32.mrb[0].mxu0
        %v4441 = vadd.f32 %v4353, %v4440
        %v4442 = vpop.f32.mrb[0].mxu0
        %v4443 = vpop.f32.mrb[0].mxu0
        %v4444 = vadd.f32 %v4356, %v4443
        %v4445 = vpop.f32.mrb[0].mxu0
        %4446 = vmatprep.mubr.bf16.mxu0 %v3970
        %4447 = vmatmul.mubr.bf16.gmra.mrb[0].mxu0 %v3969
        %v4448 = vpop.f32.mrb[0].mxu0
        %v4449 = vadd.f32 %v4361, %v4448
        %v4450 = vpop.f32.mrb[0].mxu0
        %v4451 = vpop.f32.mrb[0].mxu0
        %v4452 = vadd.f32 %v4364, %v4451
        %v4453 = vpop.f32.mrb[0].mxu0
        %4454 = vmatprep.mubr.bf16.mxu0 %v3975
        %4455 = vmatmul.mubr.bf16.gmra.mrb[0].mxu0 %v3974
        %v4456 = vpop.f32.mrb[0].mxu0
        %v4457 = vadd.f32 %v4369, %v4456
        %v4458 = vpop.f32.mrb[0].mxu0
        %v4459 = vpop.f32.mrb[0].mxu0
        %v4460 = vadd.f32 %v4372, %v4459
        %v4461 = vpop.f32.mrb[0].mxu0
        %4462 = vmatprep.mubr.bf16.mxu0 %v3980
        %4463 = vmatmul.mubr.bf16.gmra.mrb[0].mxu0 %v3979
        %v4464 = vpop.f32.mrb[0].mxu0
        %v4465 = vadd.f32 %v4377, %v4464
        %v4466 = vpop.f32.mrb[0].mxu0
        %v4467 = vpop.f32.mrb[0].mxu0
        %v4468 = vadd.f32 %v4380, %v4467
        %v4469 = vpop.f32.mrb[0].mxu0
        %4470 = vmatprep.mubr.bf16.mxu0 %v3985
        %4471 = vmatmul.mubr.bf16.gmra.mrb[0].mxu0 %v3984
        %v4472 = vpop.f32.mrb[0].mxu0
        %v4473 = vadd.f32 %v4385, %v4472
        %v4474 = vpop.f32.mrb[0].mxu0
        %v4475 = vpop.f32.mrb[0].mxu0
        %v4476 = vpop.f32.mrb[0].mxu0
        %4477 = vdwg.mxu0
        %4478 = vmatprep.subr.bf16.mxu0 0
        %4479 = vmatpush1.bf16.msra.mxu0 %v4241
        %4480 = vmatprep.subr.bf16.mxu0 0
        %4481 = vmatpush1.bf16.msra.mxu0 %v4242
        %4482 = vmatprep.subr.bf16.mxu0 0
        %4483 = vmatpush1.bf16.msra.mxu0 %v4243
        %4484 = vmatprep.subr.bf16.mxu0 0
        %4485 = vmatpush1.bf16.msra.mxu0 %v4244
        %4486 = vmatprep.subr.bf16.mxu0 0
        %4487 = vmatpush1.bf16.msra.mxu0 0
        %4488 = vmatprep.subr.bf16.mxu0 0
        %4489 = vmatpush1.bf16.msra.mxu0 0
        %4490 = vmatprep.subr.bf16.mxu0 0
        %4491 = vmatpush1.bf16.msra.mxu0 0
        %4492 = vmatprep.subr.bf16.mxu0 0
        %4493 = vmatpush1.bf16.msra.mxu0 0
        %4494 = vmatprep.subr.bf16.mxu0 0
        %4495 = vmatpush1.bf16.msra.mxu0 0
        %4496 = vmatprep.subr.bf16.mxu0 0
        %4497 = vmatpush1.bf16.msra.mxu0 0
        %4498 = vmatprep.subr.bf16.mxu0 0
        %4499 = vmatpush1.bf16.msra.mxu0 0
        %4500 = vmatprep.subr.bf16.mxu0 0
        %4501 = vmatpush1.bf16.msra.mxu0 0
        %4502 = vmatprep.subr.bf16.mxu0 0
        %4503 = vmatpush1.bf16.msra.mxu0 0
        %4504 = vmatprep.subr.bf16.mxu0 0
        %4505 = vmatpush1.bf16.msra.mxu0 0
        %4506 = vmatprep.subr.bf16.mxu0 0
        %4507 = vmatpush1.bf16.msra.mxu0 0
        %4508 = vmatprep.subr.bf16.mxu0 0
        %4509 = vmatpush1.bf16.msra.mxu0 0
        %4510 = vmatprep.mubr.bf16.mxu0 0
        %4511 = vmatmul.mubr.bf16.gmra.mrb[0].mxu0 %v4282
        %v4512 = vpop.f32.mrb[0].mxu0
        %v4513 = vadd.f32 %v4425, %v4512
        %v4514 = vpop.f32.mrb[0].mxu0
        %v4515 = vpop.f32.mrb[0].mxu0
        %v4516 = vadd.f32 %v4428, %v4515
        %v4517 = vpop.f32.mrb[0].mxu0
        %4518 = vmatprep.mubr.bf16.mxu0 0
        %4519 = vmatmul.mubr.bf16.gmra.mrb[0].mxu0 %v4285
        %v4520 = vpop.f32.mrb[0].mxu0
        %v4521 = vadd.f32 %v4433, %v4520
        %v4522 = vpop.f32.mrb[0].mxu0
        %v4523 = vpop.f32.mrb[0].mxu0
        %v4524 = vadd.f32 %v4436, %v4523
        %v4525 = vpop.f32.mrb[0].mxu0
        %4526 = vmatprep.mubr.bf16.mxu0 0
        %4527 = vmatmul.mubr.bf16.gmra.mrb[0].mxu0 %v4288
        %v4528 = vpop.f32.mrb[0].mxu0
        %v4529 = vadd.f32 %v4441, %v4528
        %v4530 = vpop.f32.mrb[0].mxu0
        %v4531 = vpop.f32.mrb[0].mxu0
        %v4532 = vadd.f32 %v4444, %v4531
        %v4533 = vpop.f32.mrb[0].mxu0
        %4534 = vmatprep.mubr.bf16.mxu0 0
        %4535 = vmatmul.mubr.bf16.gmra.mrb[0].mxu0 %v4291
        %v4536 = vpop.f32.mrb[0].mxu0
        %v4537 = vadd.f32 %v4449, %v4536
        %v4538 = vpop.f32.mrb[0].mxu0
        %v4539 = vpop.f32.mrb[0].mxu0
        %v4540 = vadd.f32 %v4452, %v4539
        %v4541 = vpop.f32.mrb[0].mxu0
        %4542 = vmatprep.mubr.bf16.mxu0 0
        %4543 = vmatmul.mubr.bf16.gmra.mrb[0].mxu0 %v4294
        %v4544 = vpop.f32.mrb[0].mxu0
        %v4545 = vadd.f32 %v4457, %v4544
        %v4546 = vpop.f32.mrb[0].mxu0
        %v4547 = vpop.f32.mrb[0].mxu0
        %v4548 = vadd.f32 %v4460, %v4547
        %v4549 = vpop.f32.mrb[0].mxu0
        %4550 = vmatprep.mubr.bf16.mxu0 0
        %4551 = vmatmul.mubr.bf16.gmra.mrb[0].mxu0 %v4297
        %v4552 = vpop.f32.mrb[0].mxu0
        %v4553 = vadd.f32 %v4465, %v4552
        %v4554 = vpop.f32.mrb[0].mxu0
        %v4555 = vpop.f32.mrb[0].mxu0
        %v4556 = vadd.f32 %v4468, %v4555
        %v4557 = vpop.f32.mrb[0].mxu0
        %4558 = vmatprep.mubr.bf16.mxu0 0
        %4559 = vmatmul.mubr.bf16.gmra.mrb[0].mxu0 %v4300
        %v4560 = vpop.f32.mrb[0].mxu0
        %v4561 = vadd.f32 %v4473, %v4560
        %v4562 = vpop.f32.mrb[0].mxu0
        %v4563 = vpop.f32.mrb[0].mxu0
        %v4564 = vpop.f32.mrb[0].mxu0
        %4565 = vdwg.mxu0
        %v4566 = vld [vmem:[#allocation2 + $0xc] sm:$0xff]
        %v4567 = vld [vmem:[#allocation2 + $0x14] sm:$0xff]
        %v4568 = vld [vmem:[#allocation2 + $0x1c] sm:$0xff]
        %v4569 = vld [vmem:[#allocation2 + $0x24] sm:$0xff]
        %v4570 = vld [vmem:[#allocation2 + $0x2c] sm:$0xff]
        %v4571 = vld [vmem:[#allocation2 + $0x34] sm:$0xff]
        %v4572 = vld [vmem:[#allocation2 + $0x3c] sm:$0xff]
        %v4573 = vld [vmem:[#allocation2 + $0x44] sm:$0xff]
        %v4574 = vld [vmem:[#allocation2 + $0x4c] sm:$0xff]
        %v4575 = vld [vmem:[#allocation2 + $0x54] sm:$0xff]
        %v4576 = vld [vmem:[#allocation2 + $0x5c] sm:$0xff]
        %v4577 = vld [vmem:[#allocation2 + $0x64] sm:$0xff]
        %v4578 = vld [vmem:[#allocation2 + $0x6c] sm:$0x7]
        %v4579 = vadd.f32 %v4513, %v4566
        %v4580 = vadd.f32 %v4516, %v4567
        %v4581 = vadd.f32 %v4521, %v4568
        %v4582 = vadd.f32 %v4524, %v4569
        %v4583 = vadd.f32 %v4529, %v4570
        %v4584 = vadd.f32 %v4532, %v4571
        %v4585 = vadd.f32 %v4537, %v4572
        %v4586 = vadd.f32 %v4540, %v4573
        %v4587 = vadd.f32 %v4545, %v4574
        %v4588 = vadd.f32 %v4548, %v4575
        %v4589 = vadd.f32 %v4553, %v4576
        %v4590 = vadd.f32 %v4556, %v4577
        %v4591 = vadd.f32 %v4561, %v4578
        %v4592 = vmax.f32 %v4579, 0.0
        %v4593 = vmax.f32 %v4580, 0.0
        %v4594 = vmax.f32 %v4581, 0.0
        %v4595 = vmax.f32 %v4582, 0.0
        %v4596 = vmax.f32 %v4583, 0.0
        %v4597 = vmax.f32 %v4584, 0.0
        %v4598 = vmax.f32 %v4585, 0.0
        %v4599 = vmax.f32 %v4586, 0.0
        %v4600 = vmax.f32 %v4587, 0.0
        %v4601 = vmax.f32 %v4588, 0.0
        %v4602 = vmax.f32 %v4589, 0.0
        %v4603 = vmax.f32 %v4590, 0.0
        %v4604 = vmax.f32 %v4591, 0.0
        %v4605 = vsel %vm1476, %v4592, 0.0
        %v4606 = vsel %vm1477, %v4593, 0.0
        %v4607 = vsel %vm1478, %v4594, 0.0
        %v4608 = vsel %vm1479, %v4595, 0.0
        %v4609 = vsel %vm1480, %v4596, 0.0
        %v4610 = vsel %vm1481, %v4597, 0.0
        %v4611 = vsel %vm1482, %v4598, 0.0
        %v4612 = vsel %vm1483, %v4599, 0.0
        %v4613 = vsel %vm1484, %v4600, 0.0
        %v4614 = vsel %vm1485, %v4601, 0.0
        %v4615 = vsel %vm1486, %v4602, 0.0
        %v4616 = vsel %vm1487, %v4603, 0.0
        %v4617 = vsel %vm1488, %v4604, 0.0
        %v4618 = vsel %vm436, %v4605, 0.0
        %v4619 = vsel %vm436, %v4606, 0.0
        %v4620 = vadd.f32 %v4618, %v4619
        %v4621 = vsel %vm436, %v4607, 0.0
        %v4622 = vadd.f32 %v4620, %v4621
        %v4623 = vsel %vm436, %v4608, 0.0
        %v4624 = vadd.f32 %v4622, %v4623
        %v4625 = vsel %vm436, %v4609, 0.0
        %v4626 = vadd.f32 %v4624, %v4625
        %v4627 = vsel %vm436, %v4610, 0.0
        %v4628 = vadd.f32 %v4626, %v4627
        %v4629 = vsel %vm436, %v4611, 0.0
        %v4630 = vadd.f32 %v4628, %v4629
        %v4631 = vsel %vm436, %v4612, 0.0
        %v4632 = vadd.f32 %v4630, %v4631
        %v4633 = vsel %vm436, %v4613, 0.0
        %v4634 = vadd.f32 %v4632, %v4633
        %v4635 = vsel %vm436, %v4614, 0.0
        %v4636 = vadd.f32 %v4634, %v4635
        %v4637 = vsel %vm436, %v4615, 0.0
        %v4638 = vadd.f32 %v4636, %v4637
        %v4639 = vsel %vm436, %v4616, 0.0
        %v4640 = vadd.f32 %v4638, %v4639
        %v4641 = vsel %vm1514, %v4617, 0.0
        %v4642 = vadd.f32 %v4640, %v4641
        %v4643 = vrot.slane %v4642, 4
        %v4644 = vadd.f32 %v4642, %v4643
        %v4645 = vrot.slane %v4644, 2
        %v4646 = vadd.f32 %v4644, %v4645
        %v4647 = vrot.slane %v4646, 1
        %v4648 = vadd.f32 %v4646, %v4647
        %v4649 = vmul.f32 %v4648, 0.012345679
        %vm4650 = vcmask 516096
        %4651 = vst.msk [vmem:[%s162] sm:$0x1] %vm4650, %v4649
        %s4652 = sand.u32 %s93, 1
        %s4653 = scalar_lea.sflag [#allocation5], %s4652
        %s4654 = sand.u32 %s93, 1
        %s4655 = scalar_lea.vmem [#allocation4], %s4654
        // Predicated region
        $region33: #{resnet_backbone_2d_forward.3} parent=31 // pred_check
          %p4656 = pneg %p103
        $region34: #{resnet_backbone_2d_forward.3} parent=31 // pred_check_branch
          %4658 = sbr.rel (%p4656) target = $region36
        $region35: #{resnet_backbone_2d_forward.3} parent=31 // pred_region
          %s4660 = ssub.s32 16, 16
          %4661 = vsyncadd %s4653, %s4660
          %s4662 = smul.addr %s17, 16
          %s4663 = scalar_lea.hbm %s3, %s4662
          %s4665 = sshll.u32 %s4655, 4
          %s4666 = int_to_ptr.vmem [resolvable:$true] %s4665
          %4668 = dma.vmem_to_hbm [thread:$0]  %s4666, 16, %s4663, %s4653
        $region36: #{resnet_backbone_2d_forward.3} parent=31 // pred_fallthru
          _
      $region32: #{resnet_backbone_2d_forward.3} parent=5 // pred_fallthru
        _
      %p4669 = scmp.le.s32.totalorder 2, %s12
      // Predicated region
      $region37: #{resnet_backbone_2d_forward.3} parent=5 // pred_check
        %p4670 = pneg %p4669
      $region38: #{resnet_backbone_2d_forward.3} parent=5 // pred_check_branch
        %4672 = sbr.rel (%p4670) target = $region40
      $region39: #{resnet_backbone_2d_forward.3} parent=5 // pred_region
        %s4673 = ssub.s32 %s12, 2
        // Predicated region
        $region41: #{resnet_backbone_2d_forward.3} parent=39 // pred_check
          %p4674 = pneg %p109
        $region42: #{resnet_backbone_2d_forward.3} parent=39 // pred_check_branch
          %4676 = sbr.rel (%p4674) target = $region44
        $region43: #{resnet_backbone_2d_forward.3} parent=39 // pred_region
          %s4677 = sand.u32 %s94, 1
          %s4678 = scalar_lea.sflag [#allocation5], %s4677
          %s4679 = sand.u32 %s94, 1
          %s4680 = scalar_lea.vmem [#allocation4], %s4679
          %4681 = dma.done %s4678, 16
        $region44: #{resnet_backbone_2d_forward.3} parent=39 // pred_fallthru
          _
      $region40: #{resnet_backbone_2d_forward.3} parent=5 // pred_fallthru
        _
    $region6: #{resnet_backbone_2d_forward.3} parent=1 // loop_footer
      %s16 = sadd.s32 1, %s12
    $region7: #{resnet_backbone_2d_forward.3} parent=1 // loop_footer_branch
      %11 = sbr.rel target = $region3
    $region8: #{resnet_backbone_2d_forward.3} parent=1 // loop_exit
      _
    %4682 = vsyncpa [#allocation5], 1
    %s4683 = scalar_lea.sflag [#allocation5], 1
    %4684 = vsyncpa %s4683, 1

</llo_original>
